<compile_context>
chip_gen: v7x
topology: tpu7x:2x2x1
jax: 0.10.0
libtpu: 0.0.40
codegen_flags: <defaults>
</compile_context>

<pallas_src>
import numpy as np
import jax
import jax.numpy as jnp
from jax.experimental import pallas as pl
from jax.experimental.pallas import tpu as pltpu

NUM_HEADS = 4


# ----------------------------- shared math helpers -----------------------------
def _layernorm(x, g, b, eps=1e-5):
    mu = jnp.mean(x, axis=-1, keepdims=True)
    var = jnp.mean((x - mu) ** 2, axis=-1, keepdims=True)
    return (x - mu) * jax.lax.rsqrt(var + eps) * g + b


def _gelu(x):
    c = np.float32(np.sqrt(2.0 / np.pi))
    return 0.5 * x * (1.0 + jnp.tanh(c * (x + 0.044715 * x * x * x)))


# ----------------------------- fused Pallas kernel -----------------------------
def fused_forward_kernel(h_ref, mask_ref,
                         wqkv_ref, bqkv_ref, wo_ref, bo_ref,
                         ln1g_ref, ln1b_ref,
                         w1_ref, b1_ref, w2_ref, b2_ref, ln2g_ref, ln2b_ref,
                         hw1_ref, hb1_ref, hwh_ref, hbh_ref,
                         x_out_ref, logits_out_ref,
                         ctx_ref):
    """Whole-batch forward in one invocation.

    h_ref: (B*S, H) f32, mask_ref: (B, S) f32.
    Stacked layer weights: wqkv (L,H,3H) bf16, wo (L,H,H) bf16,
    w1 (L,H,F) bf16, w2 (L,F,H) bf16; biases / LN params f32.
    Head: hw1 (H,H) bf16, hwh (H,C) bf16; hb1/hbh f32.
    Outputs: x_out (B,H) f32 (tanh features), logits (B,C) f32.
    ctx_ref: (B*S, H) f32 VMEM scratch used to assemble per-head contexts.
    """
    bf16 = jnp.bfloat16
    f32 = jnp.float32

    h = h_ref[...]                                   # (B*S, H) f32
    BS, H = h.shape
    B, S = mask_ref.shape
    hd = H // NUM_HEADS
    scale = np.float32(1.0 / np.sqrt(hd))
    n_layers = wqkv_ref.shape[0]

    # additive key mask, computed once and reused by every layer / head
    neg = (1.0 - mask_ref[...]) * np.float32(-1e9)   # (B, S) f32

    for l in range(n_layers):                        # static unroll (L is tiny)
        hb = h.astype(bf16)

        # fused QKV projection: one (B*S, H) @ (H, 3H) dot
        qkv = jnp.dot(hb, wqkv_ref[l], preferred_element_type=f32) + bqkv_ref[l]
        q16 = qkv[:, 0:H].astype(bf16)
        k16 = qkv[:, H:2 * H].astype(bf16)
        v16 = qkv[:, 2 * H:3 * H].astype(bf16)

        # attention per (batch, head); contexts written into their lane slice
        for b in range(B):
            rs = b * S
            neg_b = neg[b:b + 1, :]                  # (1, S), broadcasts over queries
            for hh in range(NUM_HEADS):
                lo = hh * hd
                qh = q16[rs:rs + S, lo:lo + hd]
                kh = k16[rs:rs + S, lo:lo + hd]
                vh = v16[rs:rs + S, lo:lo + hd]
                s = jax.lax.dot_general(qh, kh, (((1,), (1,)), ((), ())),
                                        preferred_element_type=f32) * scale
                s = s + neg_b                        # f32 mask add (no bf16 saturation)
                m = jnp.max(s, axis=-1, keepdims=True)
                e = jnp.exp(s - m)
                p = e * pl.reciprocal(jnp.sum(e, axis=-1, keepdims=True), approx=True)
                ctx = jnp.dot(p.astype(bf16), vh, preferred_element_type=f32)
                ctx_ref[rs:rs + S, lo:lo + hd] = ctx

        # single output projection over the assembled (B*S, H) context buffer
        attn = jnp.dot(ctx_ref[...].astype(bf16), wo_ref[l],
                       preferred_element_type=f32) + bo_ref[l]
        h1 = _layernorm(h + attn, ln1g_ref[l], ln1b_ref[l])
        ffn = _gelu(jnp.dot(h1.astype(bf16), w1_ref[l],
                            preferred_element_type=f32) + b1_ref[l])
        ffn = jnp.dot(ffn.astype(bf16), w2_ref[l],
                      preferred_element_type=f32) + b2_ref[l]
        h = _layernorm(h1 + ffn, ln2g_ref[l], ln2b_ref[l])

    # ------------- classifier head (dropout == identity, eval mode) -------------
    # Run dense1/head on all rows (row padding is free at MXU tile size), then
    # store only the CLS rows (row b*S of each batch element).
    d1_all = jnp.dot(h.astype(bf16), hw1_ref[...],
                     preferred_element_type=f32) + hb1_ref[...]         # dense1
    logits_all = jnp.dot(d1_all.astype(bf16), hwh_ref[...],
                         preferred_element_type=f32) + hbh_ref[...]     # head
    x_all = jnp.tanh(d1_all)                                            # tanh(x)
    for b in range(B):
        rs = b * S
        x_out_ref[b:b + 1, :] = x_all[rs:rs + 1, :]
        logits_out_ref[b:b + 1, :] = logits_all[rs:rs + 1, :]


# ----------------------------- wrapper -----------------------------
def _pack_for_kernel(params):
    """Stack per-layer weights along L, fuse QKV, bf16-cast all MXU operands."""
    bf16 = jnp.bfloat16

    def stack(name, dtype=None):
        a = jnp.stack([lp[name] for lp in params["layers"]], axis=0)
        return a.astype(dtype) if dtype is not None else a

    wqkv = jnp.concatenate([stack("wq"), stack("wk"), stack("wv")],
                           axis=-1).astype(bf16)                     # (L, H, 3H)
    bqkv = jnp.concatenate([stack("bq"), stack("bk"), stack("bv")],
                           axis=-1)                                  # (L, 1, 3H)
    hp = params["head"]
    return dict(
        wqkv=wqkv, bqkv=bqkv,
        wo=stack("wo", bf16), bo=stack("bo"),
        ln1g=stack("ln1g"), ln1b=stack("ln1b"),
        w1=stack("w1", bf16), b1=stack("b1"),
        w2=stack("w2", bf16), b2=stack("b2"),
        ln2g=stack("ln2g"), ln2b=stack("ln2b"),
        hw1=hp["w1"].astype(bf16), hb1=hp["b1"],
        hwh=hp["wh"].astype(bf16), hbh=hp["bh"],
    )


def forward(ids, mask, params):
    """Full forward: synthetic RoBERTa encoder + EMD head, one fused pallas_call."""
    B, S = ids.shape
    H = params["word_emb"].shape[1]
    F = params["layers"][0]["w1"].shape[1]
    C = params["head"]["wh"].shape[1]
    L = len(params["layers"])
    hd = H // NUM_HEADS

    # embedding lookup is glue (plain JAX); everything else runs in the kernel
    h0 = (params["word_emb"][ids] + params["pos_emb"][None, :S, :]
          ).reshape(B * S, H).astype(jnp.float32)                    # (B*S, H)
    mask_f = mask.astype(jnp.float32)                                # (B, S)
    pk = _pack_for_kernel(params)

    # advisory cost estimate (helps XLA schedule around the custom call)
    flops = L * (2 * B * S * H * 3 * H            # fused QKV
                 + B * NUM_HEADS * 4 * S * S * hd  # scores + context
                 + 2 * B * S * H * H               # output projection
                 + 4 * B * S * H * F)              # FFN (two dots)
    flops += 2 * B * S * H * H + 2 * B * S * H * C  # dense1 + head
    transcendentals = L * (B * NUM_HEADS * S * S + B * S * F) + B * S * H
    operands = [h0, mask_f] + list(pk.values())
    bytes_accessed = sum(int(np.prod(a.shape)) * a.dtype.itemsize for a in operands)
    bytes_accessed += B * H * 4 + B * C * 4

    x_out, logits = pl.pallas_call(
        fused_forward_kernel,
        out_shape=(jax.ShapeDtypeStruct((B, H), jnp.float32),
                   jax.ShapeDtypeStruct((B, C), jnp.float32)),
        # no grid: whole (tiny) problem in one invocation, everything in VMEM
        scratch_shapes=[pltpu.VMEM((B * S, H), jnp.float32)],
        cost_estimate=pl.CostEstimate(flops=int(flops),
                                      transcendentals=int(transcendentals),
                                      bytes_accessed=int(bytes_accessed)),
    )(h0, mask_f,
      pk["wqkv"], pk["bqkv"], pk["wo"], pk["bo"], pk["ln1g"], pk["ln1b"],
      pk["w1"], pk["b1"], pk["w2"], pk["b2"], pk["ln2g"], pk["ln2b"],
      pk["hw1"], pk["hb1"], pk["hwh"], pk["hbh"])

    return x_out, logits                              # (tanh features, logits)


# ------------------- pure-JAX reference (same numerics) -------------------
def reference_forward(ids, mask, params):
    bf16, f32 = jnp.bfloat16, jnp.float32
    B, S = ids.shape
    h = params["word_emb"][ids] + params["pos_emb"][None, :S, :]
    mask_f = mask.astype(f32)
    neg = (1.0 - mask_f) * np.float32(-1e9)                          # (B, S)
    for p in params["layers"]:
        H = h.shape[-1]
        hd = H // NUM_HEADS
        scale = np.float32(1.0 / np.sqrt(hd))
        hb = h.astype(bf16)
        q = (jnp.einsum("bsc,cd->bsd", hb, p["wq"].astype(bf16),
                        preferred_element_type=f32) + p["bq"]).reshape(B, S, NUM_HEADS, hd)
        k = (jnp.einsum("bsc,cd->bsd", hb, p["wk"].astype(bf16),
                        preferred_element_type=f32) + p["bk"]).reshape(B, S, NUM_HEADS, hd)
        v = (jnp.einsum("bsc,cd->bsd", hb, p["wv"].astype(bf16),
                        preferred_element_type=f32) + p["bv"]).reshape(B, S, NUM_HEADS, hd)
        scores = jnp.einsum("bqhd,bkhd->bhqk", q.astype(bf16), k.astype(bf16),
                            preferred_element_type=f32) * scale
        scores = scores + neg[:, None, None, :]
        m = jnp.max(scores, axis=-1, keepdims=True)
        e = jnp.exp(scores - m)
        pr = e / jnp.sum(e, axis=-1, keepdims=True)
        ctx = jnp.einsum("bhqk,bkhd->bqhd", pr.astype(bf16), v.astype(bf16),
                         preferred_element_type=f32).reshape(B, S, H)
        attn = jnp.einsum("bsc,cd->bsd", ctx.astype(bf16), p["wo"].astype(bf16),
                          preferred_element_type=f32) + p["bo"]
        h1 = _layernorm(h + attn, p["ln1g"], p["ln1b"])
        ffn = _gelu(jnp.einsum("bsc,cf->bsf", h1.astype(bf16), p["w1"].astype(bf16),
                               preferred_element_type=f32) + p["b1"])
        ffn = jnp.einsum("bsf,fc->bsc", ffn.astype(bf16), p["w2"].astype(bf16),
                         preferred_element_type=f32) + p["b2"]
        h = _layernorm(h1 + ffn, p["ln2g"], p["ln2b"])
    cls = h[:, 0, :]
    hp = params["head"]
    d1 = jnp.dot(cls.astype(bf16), hp["w1"].astype(bf16),
                 preferred_element_type=f32) + hp["b1"]
    logits = jnp.dot(d1.astype(bf16), hp["wh"].astype(bf16),
                     preferred_element_type=f32) + hp["bh"]
    return jnp.tanh(d1), logits


# ------------------- deterministic parameter init -------------------
def init_params(key, V, S, H, F, label_num, n_layers):
    keys = iter(jax.random.split(key, 128))

    def nrm(shape, scale=0.02):
        return scale * jax.random.normal(next(keys), shape, dtype=jnp.float32)

    params = {"word_emb": nrm((V, H)), "pos_emb": nrm((S, H)), "layers": []}
    for _ in range(n_layers):
        params["layers"].append({
            "wq": nrm((H, H)), "bq": nrm((1, H)),
            "wk": nrm((H, H)), "bk": nrm((1, H)),
            "wv": nrm((H, H)), "bv": nrm((1, H)),
            "wo": nrm((H, H)), "bo": nrm((1, H)),
            "ln1g": jnp.ones((1, H), jnp.float32), "ln1b": jnp.zeros((1, H), jnp.float32),
            "w1": nrm((H, F)), "b1": nrm((1, F)),
            "w2": nrm((F, H)), "b2": nrm((1, H)),
            "ln2g": jnp.ones((1, H), jnp.float32), "ln2b": jnp.zeros((1, H), jnp.float32),
        })
    params["head"] = {
        "w1": nrm((H, H)), "b1": nrm((1, H)),                          # dense1
        "wh": nrm((H, 3 * label_num)), "bh": nrm((1, 3 * label_num)),  # head
    }
    return params


if __name__ == "__main__":
    B, S, H, V = 2, 8, 32, 64          # batch, seq, hidden, vocab
    LABEL_NUM = 6                      # len(label_VAD) -> head outputs 3*LABEL_NUM
    F, N_LAYERS = 4 * H, 2

    key = jax.random.PRNGKey(0)
    k_par, k_ids = jax.random.split(key)
    params = init_params(k_par, V, S, H, F, LABEL_NUM, N_LAYERS)

    ids = jax.random.randint(k_ids, (B, S), 0, V, dtype=jnp.int32)
    mask = jnp.ones((B, S), dtype=jnp.int32).at[1, 6:].set(0)   # pad last 2 tokens of row 1

    x_feat, logits = forward(ids, mask, params)
    jax.block_until_ready((x_feat, logits))

    ref_x, ref_logits = reference_forward(ids, mask, params)
    assert x_feat.shape == (B, H) and logits.shape == (B, 3 * LABEL_NUM)
    # only divergence sources: approx-reciprocal softmax and f32 accumulation
    # order (both paths use identical bf16 operand rounding)
    assert jnp.allclose(x_feat, ref_x, rtol=1e-2, atol=1e-2), "tanh-feature mismatch"
    assert jnp.allclose(logits, ref_logits, rtol=1e-2, atol=1e-2), "logits mismatch"

    print("KERNEL_OK")
</pallas_src>

<mosaic_0001>
module attributes {stable_mosaic.version = 11 : i64} {
  func.func @fused_forward_kernel(%arg0: memref<16x32xf32, #tpu.memory_space<vmem>>, %arg1: memref<2x8xf32, #tpu.memory_space<vmem>>, %arg2: memref<2x32x96xbf16, #tpu.memory_space<vmem>>, %arg3: memref<2x1x96xf32, #tpu.memory_space<vmem>>, %arg4: memref<2x32x32xbf16, #tpu.memory_space<vmem>>, %arg5: memref<2x1x32xf32, #tpu.memory_space<vmem>>, %arg6: memref<2x1x32xf32, #tpu.memory_space<vmem>>, %arg7: memref<2x1x32xf32, #tpu.memory_space<vmem>>, %arg8: memref<2x32x128xbf16, #tpu.memory_space<vmem>>, %arg9: memref<2x1x128xf32, #tpu.memory_space<vmem>>, %arg10: memref<2x128x32xbf16, #tpu.memory_space<vmem>>, %arg11: memref<2x1x32xf32, #tpu.memory_space<vmem>>, %arg12: memref<2x1x32xf32, #tpu.memory_space<vmem>>, %arg13: memref<2x1x32xf32, #tpu.memory_space<vmem>>, %arg14: memref<32x32xbf16, #tpu.memory_space<vmem>>, %arg15: memref<1x32xf32, #tpu.memory_space<vmem>>, %arg16: memref<32x18xbf16, #tpu.memory_space<vmem>>, %arg17: memref<1x18xf32, #tpu.memory_space<vmem>>, %arg18: memref<2x32xf32, #tpu.memory_space<vmem>>, %arg19: memref<2x18xf32, #tpu.memory_space<vmem>>, %arg20: memref<16x32xf32, #tpu.memory_space<vmem>>) attributes {dimension_semantics = [], scalar_prefetch = 0 : i64, scratch_operands = 1 : i64, tpu.core_type = #tpu.core_type<tc>} {
    %c0 = arith.constant 0 : index
    %c0_0 = arith.constant 0 : index
    %0 = vector.load %arg0[%c0, %c0_0] : memref<16x32xf32, #tpu.memory_space<vmem>>, vector<16x32xf32>
    %c0_1 = arith.constant 0 : index
    %c0_2 = arith.constant 0 : index
    %1 = vector.load %arg1[%c0_1, %c0_2] : memref<2x8xf32, #tpu.memory_space<vmem>>, vector<2x8xf32>
    %cst = arith.constant 1.000000e+00 : f32
    %2 = vector.broadcast %cst : f32 to vector<2x8xf32>
    %3 = arith.subf %2, %1 : vector<2x8xf32>
    %cst_3 = arith.constant -1.000000e+09 : f32
    %4 = vector.broadcast %cst_3 : f32 to vector<2x8xf32>
    %5 = arith.mulf %3, %4 : vector<2x8xf32>
    %6 = arith.truncf %0 : vector<16x32xf32> to vector<16x32xbf16>
    %c0_4 = arith.constant 0 : index
    %c0_5 = arith.constant 0 : index
    %c0_6 = arith.constant 0 : index
    %7 = vector.load %arg2[%c0_4, %c0_5, %c0_6] : memref<2x32x96xbf16, #tpu.memory_space<vmem>>, vector<1x32x96xbf16>
    %8 = vector.shape_cast %7 : vector<1x32x96xbf16> to vector<32x96xbf16>
    %cst_7 = arith.constant dense<0.000000e+00> : vector<16x96xf32>
    %9 = tpu.matmul %6, %8, %cst_7 {dimension_numbers = #tpu.dot_dimension_numbers<[1], [0], [0], [1], [0, 0, 1, 1], [], []>} : vector<16x32xbf16>, vector<32x96xbf16>, vector<16x96xf32> -> vector<16x96xf32>
    %c0_8 = arith.constant 0 : index
    %c0_9 = arith.constant 0 : index
    %c0_10 = arith.constant 0 : index
    %10 = vector.load %arg3[%c0_8, %c0_9, %c0_10] : memref<2x1x96xf32, #tpu.memory_space<vmem>>, vector<1x1x96xf32>
    %11 = vector.shape_cast %10 : vector<1x1x96xf32> to vector<1x96xf32>
    %12 = vector.broadcast %11 : vector<1x96xf32> to vector<16x96xf32>
    %13 = arith.addf %9, %12 : vector<16x96xf32>
    %14 = vector.extract_strided_slice %13 {offsets = [0, 0], sizes = [16, 32], strides = [1, 1]} : vector<16x96xf32> to vector<16x32xf32>
    %15 = arith.truncf %14 : vector<16x32xf32> to vector<16x32xbf16>
    %16 = vector.extract_strided_slice %13 {offsets = [0, 32], sizes = [16, 32], strides = [1, 1]} : vector<16x96xf32> to vector<16x32xf32>
    %17 = arith.truncf %16 : vector<16x32xf32> to vector<16x32xbf16>
    %18 = vector.extract_strided_slice %13 {offsets = [0, 64], sizes = [16, 32], strides = [1, 1]} : vector<16x96xf32> to vector<16x32xf32>
    %19 = arith.truncf %18 : vector<16x32xf32> to vector<16x32xbf16>
    %20 = vector.extract_strided_slice %5 {offsets = [0, 0], sizes = [1, 8], strides = [1, 1]} : vector<2x8xf32> to vector<1x8xf32>
    %21 = vector.extract_strided_slice %15 {offsets = [0, 0], sizes = [8, 8], strides = [1, 1]} : vector<16x32xbf16> to vector<8x8xbf16>
    %22 = vector.extract_strided_slice %17 {offsets = [0, 0], sizes = [8, 8], strides = [1, 1]} : vector<16x32xbf16> to vector<8x8xbf16>
    %23 = vector.extract_strided_slice %19 {offsets = [0, 0], sizes = [8, 8], strides = [1, 1]} : vector<16x32xbf16> to vector<8x8xbf16>
    %cst_11 = arith.constant dense<0.000000e+00> : vector<8x8xf32>
    %24 = tpu.matmul %21, %22, %cst_11 {dimension_numbers = #tpu.dot_dimension_numbers<[1], [1], [0], [0], [0, 0, 1, 0], [], []>} : vector<8x8xbf16>, vector<8x8xbf16>, vector<8x8xf32> -> vector<8x8xf32>
    %cst_12 = arith.constant 0.353553385 : f32
    %25 = vector.broadcast %cst_12 : f32 to vector<8x8xf32>
    %26 = arith.mulf %24, %25 : vector<8x8xf32>
    %27 = vector.broadcast %20 : vector<1x8xf32> to vector<8x8xf32>
    %28 = arith.addf %26, %27 : vector<8x8xf32>
    %cst_13 = arith.constant dense<0xFF800000> : vector<8xf32>
    %29 = vector.multi_reduction <maximumf>, %28, %cst_13 [1] : vector<8x8xf32> to vector<8xf32>
    %30 = vector.shape_cast %29 : vector<8xf32> to vector<8x1xf32>
    %31 = vector.broadcast %30 : vector<8x1xf32> to vector<8x8xf32>
    %32 = arith.subf %28, %31 : vector<8x8xf32>
    %33 = math.exp %32 : vector<8x8xf32>
    %cst_14 = arith.constant dense<0.000000e+00> : vector<8xf32>
    %34 = vector.multi_reduction <add>, %33, %cst_14 [1] : vector<8x8xf32> to vector<8xf32>
    %35 = vector.shape_cast %34 : vector<8xf32> to vector<8x1xf32>
    %36 = tpu.reciprocal %35 {approx = true} : vector<8x1xf32> -> vector<8x1xf32>
    %37 = vector.broadcast %36 : vector<8x1xf32> to vector<8x8xf32>
    %38 = arith.mulf %33, %37 : vector<8x8xf32>
    %39 = arith.truncf %38 : vector<8x8xf32> to vector<8x8xbf16>
    %cst_15 = arith.constant dense<0.000000e+00> : vector<8x8xf32>
    %40 = tpu.matmul %39, %23, %cst_15 {dimension_numbers = #tpu.dot_dimension_numbers<[1], [0], [0], [1], [0, 0, 1, 1], [], []>} : vector<8x8xbf16>, vector<8x8xbf16>, vector<8x8xf32> -> vector<8x8xf32>
    %c0_16 = arith.constant 0 : index
    %c0_17 = arith.constant 0 : index
    %41 = vector.load %arg20[%c0_16, %c0_17] : memref<16x32xf32, #tpu.memory_space<vmem>>, vector<8x8xf32>
    tpu.vector_store %arg20[%c0_16, %c0_17], %40 {strides = array<i32>} : memref<16x32xf32, #tpu.memory_space<vmem>>, vector<8x8xf32>,
    %42 = vector.extract_strided_slice %15 {offsets = [0, 8], sizes = [8, 8], strides = [1, 1]} : vector<16x32xbf16> to vector<8x8xbf16>
    %43 = vector.extract_strided_slice %17 {offsets = [0, 8], sizes = [8, 8], strides = [1, 1]} : vector<16x32xbf16> to vector<8x8xbf16>
    %44 = vector.extract_strided_slice %19 {offsets = [0, 8], sizes = [8, 8], strides = [1, 1]} : vector<16x32xbf16> to vector<8x8xbf16>
    %cst_18 = arith.constant dense<0.000000e+00> : vector<8x8xf32>
    %45 = tpu.matmul %42, %43, %cst_18 {dimension_numbers = #tpu.dot_dimension_numbers<[1], [1], [0], [0], [0, 0, 1, 0], [], []>} : vector<8x8xbf16>, vector<8x8xbf16>, vector<8x8xf32> -> vector<8x8xf32>
    %cst_19 = arith.constant 0.353553385 : f32
    %46 = vector.broadcast %cst_19 : f32 to vector<8x8xf32>
    %47 = arith.mulf %45, %46 : vector<8x8xf32>
    %48 = vector.broadcast %20 : vector<1x8xf32> to vector<8x8xf32>
    %49 = arith.addf %47, %48 : vector<8x8xf32>
    %cst_20 = arith.constant dense<0xFF800000> : vector<8xf32>
    %50 = vector.multi_reduction <maximumf>, %49, %cst_20 [1] : vector<8x8xf32> to vector<8xf32>
    %51 = vector.shape_cast %50 : vector<8xf32> to vector<8x1xf32>
    %52 = vector.broadcast %51 : vector<8x1xf32> to vector<8x8xf32>
    %53 = arith.subf %49, %52 : vector<8x8xf32>
    %54 = math.exp %53 : vector<8x8xf32>
    %cst_21 = arith.constant dense<0.000000e+00> : vector<8xf32>
    %55 = vector.multi_reduction <add>, %54, %cst_21 [1] : vector<8x8xf32> to vector<8xf32>
    %56 = vector.shape_cast %55 : vector<8xf32> to vector<8x1xf32>
    %57 = tpu.reciprocal %56 {approx = true} : vector<8x1xf32> -> vector<8x1xf32>
    %58 = vector.broadcast %57 : vector<8x1xf32> to vector<8x8xf32>
    %59 = arith.mulf %54, %58 : vector<8x8xf32>
    %60 = arith.truncf %59 : vector<8x8xf32> to vector<8x8xbf16>
    %cst_22 = arith.constant dense<0.000000e+00> : vector<8x8xf32>
    %61 = tpu.matmul %60, %44, %cst_22 {dimension_numbers = #tpu.dot_dimension_numbers<[1], [0], [0], [1], [0, 0, 1, 1], [], []>} : vector<8x8xbf16>, vector<8x8xbf16>, vector<8x8xf32> -> vector<8x8xf32>
    %c0_23 = arith.constant 0 : index
    %c8 = arith.constant 8 : index
    %62 = vector.load %arg20[%c0_23, %c8] : memref<16x32xf32, #tpu.memory_space<vmem>>, vector<8x8xf32>
    tpu.vector_store %arg20[%c0_23, %c8], %61 {strides = array<i32>} : memref<16x32xf32, #tpu.memory_space<vmem>>, vector<8x8xf32>,
    %63 = vector.extract_strided_slice %15 {offsets = [0, 16], sizes = [8, 8], strides = [1, 1]} : vector<16x32xbf16> to vector<8x8xbf16>
    %64 = vector.extract_strided_slice %17 {offsets = [0, 16], sizes = [8, 8], strides = [1, 1]} : vector<16x32xbf16> to vector<8x8xbf16>
    %65 = vector.extract_strided_slice %19 {offsets = [0, 16], sizes = [8, 8], strides = [1, 1]} : vector<16x32xbf16> to vector<8x8xbf16>
    %cst_24 = arith.constant dense<0.000000e+00> : vector<8x8xf32>
    %66 = tpu.matmul %63, %64, %cst_24 {dimension_numbers = #tpu.dot_dimension_numbers<[1], [1], [0], [0], [0, 0, 1, 0], [], []>} : vector<8x8xbf16>, vector<8x8xbf16>, vector<8x8xf32> -> vector<8x8xf32>
    %cst_25 = arith.constant 0.353553385 : f32
    %67 = vector.broadcast %cst_25 : f32 to vector<8x8xf32>
    %68 = arith.mulf %66, %67 : vector<8x8xf32>
    %69 = vector.broadcast %20 : vector<1x8xf32> to vector<8x8xf32>
    %70 = arith.addf %68, %69 : vector<8x8xf32>
    %cst_26 = arith.constant dense<0xFF800000> : vector<8xf32>
    %71 = vector.multi_reduction <maximumf>, %70, %cst_26 [1] : vector<8x8xf32> to vector<8xf32>
    %72 = vector.shape_cast %71 : vector<8xf32> to vector<8x1xf32>
    %73 = vector.broadcast %72 : vector<8x1xf32> to vector<8x8xf32>
    %74 = arith.subf %70, %73 : vector<8x8xf32>
    %75 = math.exp %74 : vector<8x8xf32>
    %cst_27 = arith.constant dense<0.000000e+00> : vector<8xf32>
    %76 = vector.multi_reduction <add>, %75, %cst_27 [1] : vector<8x8xf32> to vector<8xf32>
    %77 = vector.shape_cast %76 : vector<8xf32> to vector<8x1xf32>
    %78 = tpu.reciprocal %77 {approx = true} : vector<8x1xf32> -> vector<8x1xf32>
    %79 = vector.broadcast %78 : vector<8x1xf32> to vector<8x8xf32>
    %80 = arith.mulf %75, %79 : vector<8x8xf32>
    %81 = arith.truncf %80 : vector<8x8xf32> to vector<8x8xbf16>
    %cst_28 = arith.constant dense<0.000000e+00> : vector<8x8xf32>
    %82 = tpu.matmul %81, %65, %cst_28 {dimension_numbers = #tpu.dot_dimension_numbers<[1], [0], [0], [1], [0, 0, 1, 1], [], []>} : vector<8x8xbf16>, vector<8x8xbf16>, vector<8x8xf32> -> vector<8x8xf32>
    %c0_29 = arith.constant 0 : index
    %c16 = arith.constant 16 : index
    %83 = vector.load %arg20[%c0_29, %c16] : memref<16x32xf32, #tpu.memory_space<vmem>>, vector<8x8xf32>
    tpu.vector_store %arg20[%c0_29, %c16], %82 {strides = array<i32>} : memref<16x32xf32, #tpu.memory_space<vmem>>, vector<8x8xf32>,
    %84 = vector.extract_strided_slice %15 {offsets = [0, 24], sizes = [8, 8], strides = [1, 1]} : vector<16x32xbf16> to vector<8x8xbf16>
    %85 = vector.extract_strided_slice %17 {offsets = [0, 24], sizes = [8, 8], strides = [1, 1]} : vector<16x32xbf16> to vector<8x8xbf16>
    %86 = vector.extract_strided_slice %19 {offsets = [0, 24], sizes = [8, 8], strides = [1, 1]} : vector<16x32xbf16> to vector<8x8xbf16>
    %cst_30 = arith.constant dense<0.000000e+00> : vector<8x8xf32>
    %87 = tpu.matmul %84, %85, %cst_30 {dimension_numbers = #tpu.dot_dimension_numbers<[1], [1], [0], [0], [0, 0, 1, 0], [], []>} : vector<8x8xbf16>, vector<8x8xbf16>, vector<8x8xf32> -> vector<8x8xf32>
    %cst_31 = arith.constant 0.353553385 : f32
    %88 = vector.broadcast %cst_31 : f32 to vector<8x8xf32>
    %89 = arith.mulf %87, %88 : vector<8x8xf32>
    %90 = vector.broadcast %20 : vector<1x8xf32> to vector<8x8xf32>
    %91 = arith.addf %89, %90 : vector<8x8xf32>
    %cst_32 = arith.constant dense<0xFF800000> : vector<8xf32>
    %92 = vector.multi_reduction <maximumf>, %91, %cst_32 [1] : vector<8x8xf32> to vector<8xf32>
    %93 = vector.shape_cast %92 : vector<8xf32> to vector<8x1xf32>
    %94 = vector.broadcast %93 : vector<8x1xf32> to vector<8x8xf32>
    %95 = arith.subf %91, %94 : vector<8x8xf32>
    %96 = math.exp %95 : vector<8x8xf32>
    %cst_33 = arith.constant dense<0.000000e+00> : vector<8xf32>
    %97 = vector.multi_reduction <add>, %96, %cst_33 [1] : vector<8x8xf32> to vector<8xf32>
    %98 = vector.shape_cast %97 : vector<8xf32> to vector<8x1xf32>
    %99 = tpu.reciprocal %98 {approx = true} : vector<8x1xf32> -> vector<8x1xf32>
    %100 = vector.broadcast %99 : vector<8x1xf32> to vector<8x8xf32>
    %101 = arith.mulf %96, %100 : vector<8x8xf32>
    %102 = arith.truncf %101 : vector<8x8xf32> to vector<8x8xbf16>
    %cst_34 = arith.constant dense<0.000000e+00> : vector<8x8xf32>
    %103 = tpu.matmul %102, %86, %cst_34 {dimension_numbers = #tpu.dot_dimension_numbers<[1], [0], [0], [1], [0, 0, 1, 1], [], []>} : vector<8x8xbf16>, vector<8x8xbf16>, vector<8x8xf32> -> vector<8x8xf32>
    %c0_35 = arith.constant 0 : index
    %c24 = arith.constant 24 : index
    %104 = vector.load %arg20[%c0_35, %c24] : memref<16x32xf32, #tpu.memory_space<vmem>>, vector<8x8xf32>
    tpu.vector_store %arg20[%c0_35, %c24], %103 {strides = array<i32>} : memref<16x32xf32, #tpu.memory_space<vmem>>, vector<8x8xf32>,
    %105 = vector.extract_strided_slice %5 {offsets = [1, 0], sizes = [1, 8], strides = [1, 1]} : vector<2x8xf32> to vector<1x8xf32>
    %106 = vector.extract_strided_slice %15 {offsets = [8, 0], sizes = [8, 8], strides = [1, 1]} : vector<16x32xbf16> to vector<8x8xbf16>
    %107 = vector.extract_strided_slice %17 {offsets = [8, 0], sizes = [8, 8], strides = [1, 1]} : vector<16x32xbf16> to vector<8x8xbf16>
    %108 = vector.extract_strided_slice %19 {offsets = [8, 0], sizes = [8, 8], strides = [1, 1]} : vector<16x32xbf16> to vector<8x8xbf16>
    %cst_36 = arith.constant dense<0.000000e+00> : vector<8x8xf32>
    %109 = tpu.matmul %106, %107, %cst_36 {dimension_numbers = #tpu.dot_dimension_numbers<[1], [1], [0], [0], [0, 0, 1, 0], [], []>} : vector<8x8xbf16>, vector<8x8xbf16>, vector<8x8xf32> -> vector<8x8xf32>
    %cst_37 = arith.constant 0.353553385 : f32
    %110 = vector.broadcast %cst_37 : f32 to vector<8x8xf32>
    %111 = arith.mulf %109, %110 : vector<8x8xf32>
    %112 = vector.broadcast %105 : vector<1x8xf32> to vector<8x8xf32>
    %113 = arith.addf %111, %112 : vector<8x8xf32>
    %cst_38 = arith.constant dense<0xFF800000> : vector<8xf32>
    %114 = vector.multi_reduction <maximumf>, %113, %cst_38 [1] : vector<8x8xf32> to vector<8xf32>
    %115 = vector.shape_cast %114 : vector<8xf32> to vector<8x1xf32>
    %116 = vector.broadcast %115 : vector<8x1xf32> to vector<8x8xf32>
    %117 = arith.subf %113, %116 : vector<8x8xf32>
    %118 = math.exp %117 : vector<8x8xf32>
    %cst_39 = arith.constant dense<0.000000e+00> : vector<8xf32>
    %119 = vector.multi_reduction <add>, %118, %cst_39 [1] : vector<8x8xf32> to vector<8xf32>
    %120 = vector.shape_cast %119 : vector<8xf32> to vector<8x1xf32>
    %121 = tpu.reciprocal %120 {approx = true} : vector<8x1xf32> -> vector<8x1xf32>
    %122 = vector.broadcast %121 : vector<8x1xf32> to vector<8x8xf32>
    %123 = arith.mulf %118, %122 : vector<8x8xf32>
    %124 = arith.truncf %123 : vector<8x8xf32> to vector<8x8xbf16>
    %cst_40 = arith.constant dense<0.000000e+00> : vector<8x8xf32>
    %125 = tpu.matmul %124, %108, %cst_40 {dimension_numbers = #tpu.dot_dimension_numbers<[1], [0], [0], [1], [0, 0, 1, 1], [], []>} : vector<8x8xbf16>, vector<8x8xbf16>, vector<8x8xf32> -> vector<8x8xf32>
    %c8_41 = arith.constant 8 : index
    %c0_42 = arith.constant 0 : index
    %126 = vector.load %arg20[%c8_41, %c0_42] : memref<16x32xf32, #tpu.memory_space<vmem>>, vector<8x8xf32>
    tpu.vector_store %arg20[%c8_41, %c0_42], %125 {strides = array<i32>} : memref<16x32xf32, #tpu.memory_space<vmem>>, vector<8x8xf32>,
    %127 = vector.extract_strided_slice %15 {offsets = [8, 8], sizes = [8, 8], strides = [1, 1]} : vector<16x32xbf16> to vector<8x8xbf16>
    %128 = vector.extract_strided_slice %17 {offsets = [8, 8], sizes = [8, 8], strides = [1, 1]} : vector<16x32xbf16> to vector<8x8xbf16>
    %129 = vector.extract_strided_slice %19 {offsets = [8, 8], sizes = [8, 8], strides = [1, 1]} : vector<16x32xbf16> to vector<8x8xbf16>
    %cst_43 = arith.constant dense<0.000000e+00> : vector<8x8xf32>
    %130 = tpu.matmul %127, %128, %cst_43 {dimension_numbers = #tpu.dot_dimension_numbers<[1], [1], [0], [0], [0, 0, 1, 0], [], []>} : vector<8x8xbf16>, vector<8x8xbf16>, vector<8x8xf32> -> vector<8x8xf32>
    %cst_44 = arith.constant 0.353553385 : f32
    %131 = vector.broadcast %cst_44 : f32 to vector<8x8xf32>
    %132 = arith.mulf %130, %131 : vector<8x8xf32>
    %133 = vector.broadcast %105 : vector<1x8xf32> to vector<8x8xf32>
    %134 = arith.addf %132, %133 : vector<8x8xf32>
    %cst_45 = arith.constant dense<0xFF800000> : vector<8xf32>
    %135 = vector.multi_reduction <maximumf>, %134, %cst_45 [1] : vector<8x8xf32> to vector<8xf32>
    %136 = vector.shape_cast %135 : vector<8xf32> to vector<8x1xf32>
    %137 = vector.broadcast %136 : vector<8x1xf32> to vector<8x8xf32>
    %138 = arith.subf %134, %137 : vector<8x8xf32>
    %139 = math.exp %138 : vector<8x8xf32>
    %cst_46 = arith.constant dense<0.000000e+00> : vector<8xf32>
    %140 = vector.multi_reduction <add>, %139, %cst_46 [1] : vector<8x8xf32> to vector<8xf32>
    %141 = vector.shape_cast %140 : vector<8xf32> to vector<8x1xf32>
    %142 = tpu.reciprocal %141 {approx = true} : vector<8x1xf32> -> vector<8x1xf32>
    %143 = vector.broadcast %142 : vector<8x1xf32> to vector<8x8xf32>
    %144 = arith.mulf %139, %143 : vector<8x8xf32>
    %145 = arith.truncf %144 : vector<8x8xf32> to vector<8x8xbf16>
    %cst_47 = arith.constant dense<0.000000e+00> : vector<8x8xf32>
    %146 = tpu.matmul %145, %129, %cst_47 {dimension_numbers = #tpu.dot_dimension_numbers<[1], [0], [0], [1], [0, 0, 1, 1], [], []>} : vector<8x8xbf16>, vector<8x8xbf16>, vector<8x8xf32> -> vector<8x8xf32>
    %c8_48 = arith.constant 8 : index
    %c8_49 = arith.constant 8 : index
    %147 = vector.load %arg20[%c8_48, %c8_49] : memref<16x32xf32, #tpu.memory_space<vmem>>, vector<8x8xf32>
    tpu.vector_store %arg20[%c8_48, %c8_49], %146 {strides = array<i32>} : memref<16x32xf32, #tpu.memory_space<vmem>>, vector<8x8xf32>,
    %148 = vector.extract_strided_slice %15 {offsets = [8, 16], sizes = [8, 8], strides = [1, 1]} : vector<16x32xbf16> to vector<8x8xbf16>
    %149 = vector.extract_strided_slice %17 {offsets = [8, 16], sizes = [8, 8], strides = [1, 1]} : vector<16x32xbf16> to vector<8x8xbf16>
    %150 = vector.extract_strided_slice %19 {offsets = [8, 16], sizes = [8, 8], strides = [1, 1]} : vector<16x32xbf16> to vector<8x8xbf16>
    %cst_50 = arith.constant dense<0.000000e+00> : vector<8x8xf32>
    %151 = tpu.matmul %148, %149, %cst_50 {dimension_numbers = #tpu.dot_dimension_numbers<[1], [1], [0], [0], [0, 0, 1, 0], [], []>} : vector<8x8xbf16>, vector<8x8xbf16>, vector<8x8xf32> -> vector<8x8xf32>
    %cst_51 = arith.constant 0.353553385 : f32
    %152 = vector.broadcast %cst_51 : f32 to vector<8x8xf32>
    %153 = arith.mulf %151, %152 : vector<8x8xf32>
    %154 = vector.broadcast %105 : vector<1x8xf32> to vector<8x8xf32>
    %155 = arith.addf %153, %154 : vector<8x8xf32>
    %cst_52 = arith.constant dense<0xFF800000> : vector<8xf32>
    %156 = vector.multi_reduction <maximumf>, %155, %cst_52 [1] : vector<8x8xf32> to vector<8xf32>
    %157 = vector.shape_cast %156 : vector<8xf32> to vector<8x1xf32>
    %158 = vector.broadcast %157 : vector<8x1xf32> to vector<8x8xf32>
    %159 = arith.subf %155, %158 : vector<8x8xf32>
    %160 = math.exp %159 : vector<8x8xf32>
    %cst_53 = arith.constant dense<0.000000e+00> : vector<8xf32>
    %161 = vector.multi_reduction <add>, %160, %cst_53 [1] : vector<8x8xf32> to vector<8xf32>
    %162 = vector.shape_cast %161 : vector<8xf32> to vector<8x1xf32>
    %163 = tpu.reciprocal %162 {approx = true} : vector<8x1xf32> -> vector<8x1xf32>
    %164 = vector.broadcast %163 : vector<8x1xf32> to vector<8x8xf32>
    %165 = arith.mulf %160, %164 : vector<8x8xf32>
    %166 = arith.truncf %165 : vector<8x8xf32> to vector<8x8xbf16>
    %cst_54 = arith.constant dense<0.000000e+00> : vector<8x8xf32>
    %167 = tpu.matmul %166, %150, %cst_54 {dimension_numbers = #tpu.dot_dimension_numbers<[1], [0], [0], [1], [0, 0, 1, 1], [], []>} : vector<8x8xbf16>, vector<8x8xbf16>, vector<8x8xf32> -> vector<8x8xf32>
    %c8_55 = arith.constant 8 : index
    %c16_56 = arith.constant 16 : index
    %168 = vector.load %arg20[%c8_55, %c16_56] : memref<16x32xf32, #tpu.memory_space<vmem>>, vector<8x8xf32>
    tpu.vector_store %arg20[%c8_55, %c16_56], %167 {strides = array<i32>} : memref<16x32xf32, #tpu.memory_space<vmem>>, vector<8x8xf32>,
    %169 = vector.extract_strided_slice %15 {offsets = [8, 24], sizes = [8, 8], strides = [1, 1]} : vector<16x32xbf16> to vector<8x8xbf16>
    %170 = vector.extract_strided_slice %17 {offsets = [8, 24], sizes = [8, 8], strides = [1, 1]} : vector<16x32xbf16> to vector<8x8xbf16>
    %171 = vector.extract_strided_slice %19 {offsets = [8, 24], sizes = [8, 8], strides = [1, 1]} : vector<16x32xbf16> to vector<8x8xbf16>
    %cst_57 = arith.constant dense<0.000000e+00> : vector<8x8xf32>
    %172 = tpu.matmul %169, %170, %cst_57 {dimension_numbers = #tpu.dot_dimension_numbers<[1], [1], [0], [0], [0, 0, 1, 0], [], []>} : vector<8x8xbf16>, vector<8x8xbf16>, vector<8x8xf32> -> vector<8x8xf32>
    %cst_58 = arith.constant 0.353553385 : f32
    %173 = vector.broadcast %cst_58 : f32 to vector<8x8xf32>
    %174 = arith.mulf %172, %173 : vector<8x8xf32>
    %175 = vector.broadcast %105 : vector<1x8xf32> to vector<8x8xf32>
    %176 = arith.addf %174, %175 : vector<8x8xf32>
    %cst_59 = arith.constant dense<0xFF800000> : vector<8xf32>
    %177 = vector.multi_reduction <maximumf>, %176, %cst_59 [1] : vector<8x8xf32> to vector<8xf32>
    %178 = vector.shape_cast %177 : vector<8xf32> to vector<8x1xf32>
    %179 = vector.broadcast %178 : vector<8x1xf32> to vector<8x8xf32>
    %180 = arith.subf %176, %179 : vector<8x8xf32>
    %181 = math.exp %180 : vector<8x8xf32>
    %cst_60 = arith.constant dense<0.000000e+00> : vector<8xf32>
    %182 = vector.multi_reduction <add>, %181, %cst_60 [1] : vector<8x8xf32> to vector<8xf32>
    %183 = vector.shape_cast %182 : vector<8xf32> to vector<8x1xf32>
    %184 = tpu.reciprocal %183 {approx = true} : vector<8x1xf32> -> vector<8x1xf32>
    %185 = vector.broadcast %184 : vector<8x1xf32> to vector<8x8xf32>
    %186 = arith.mulf %181, %185 : vector<8x8xf32>
    %187 = arith.truncf %186 : vector<8x8xf32> to vector<8x8xbf16>
    %cst_61 = arith.constant dense<0.000000e+00> : vector<8x8xf32>
    %188 = tpu.matmul %187, %171, %cst_61 {dimension_numbers = #tpu.dot_dimension_numbers<[1], [0], [0], [1], [0, 0, 1, 1], [], []>} : vector<8x8xbf16>, vector<8x8xbf16>, vector<8x8xf32> -> vector<8x8xf32>
    %c8_62 = arith.constant 8 : index
    %c24_63 = arith.constant 24 : index
    %189 = vector.load %arg20[%c8_62, %c24_63] : memref<16x32xf32, #tpu.memory_space<vmem>>, vector<8x8xf32>
    tpu.vector_store %arg20[%c8_62, %c24_63], %188 {strides = array<i32>} : memref<16x32xf32, #tpu.memory_space<vmem>>, vector<8x8xf32>,
    %c0_64 = arith.constant 0 : index
    %c0_65 = arith.constant 0 : index
    %190 = vector.load %arg20[%c0_64, %c0_65] : memref<16x32xf32, #tpu.memory_space<vmem>>, vector<16x32xf32>
    %191 = arith.truncf %190 : vector<16x32xf32> to vector<16x32xbf16>
    %c0_66 = arith.constant 0 : index
    %c0_67 = arith.constant 0 : index
    %c0_68 = arith.constant 0 : index
    %192 = vector.load %arg4[%c0_66, %c0_67, %c0_68] : memref<2x32x32xbf16, #tpu.memory_space<vmem>>, vector<1x32x32xbf16>
    %193 = vector.shape_cast %192 : vector<1x32x32xbf16> to vector<32x32xbf16>
    %cst_69 = arith.constant dense<0.000000e+00> : vector<16x32xf32>
    %194 = tpu.matmul %191, %193, %cst_69 {dimension_numbers = #tpu.dot_dimension_numbers<[1], [0], [0], [1], [0, 0, 1, 1], [], []>} : vector<16x32xbf16>, vector<32x32xbf16>, vector<16x32xf32> -> vector<16x32xf32>
    %c0_70 = arith.constant 0 : index
    %c0_71 = arith.constant 0 : index
    %c0_72 = arith.constant 0 : index
    %195 = vector.load %arg5[%c0_70, %c0_71, %c0_72] : memref<2x1x32xf32, #tpu.memory_space<vmem>>, vector<1x1x32xf32>
    %196 = vector.shape_cast %195 : vector<1x1x32xf32> to vector<1x32xf32>
    %197 = vector.broadcast %196 : vector<1x32xf32> to vector<16x32xf32>
    %198 = arith.addf %194, %197 : vector<16x32xf32>
    %199 = arith.addf %0, %198 : vector<16x32xf32>
    %c0_73 = arith.constant 0 : index
    %c0_74 = arith.constant 0 : index
    %c0_75 = arith.constant 0 : index
    %200 = vector.load %arg6[%c0_73, %c0_74, %c0_75] : memref<2x1x32xf32, #tpu.memory_space<vmem>>, vector<1x1x32xf32>
    %201 = vector.shape_cast %200 : vector<1x1x32xf32> to vector<1x32xf32>
    %c0_76 = arith.constant 0 : index
    %c0_77 = arith.constant 0 : index
    %c0_78 = arith.constant 0 : index
    %202 = vector.load %arg7[%c0_76, %c0_77, %c0_78] : memref<2x1x32xf32, #tpu.memory_space<vmem>>, vector<1x1x32xf32>
    %203 = vector.shape_cast %202 : vector<1x1x32xf32> to vector<1x32xf32>
    %cst_79 = arith.constant dense<0.000000e+00> : vector<16xf32>
    %204 = vector.multi_reduction <add>, %199, %cst_79 [1] : vector<16x32xf32> to vector<16xf32>
    %205 = vector.shape_cast %204 : vector<16xf32> to vector<16x1xf32>
    %cst_80 = arith.constant 3.200000e+01 : f32
    %206 = vector.broadcast %cst_80 : f32 to vector<16x1xf32>
    %207 = arith.divf %205, %206 : vector<16x1xf32>
    %208 = vector.broadcast %207 : vector<16x1xf32> to vector<16x32xf32>
    %209 = arith.subf %199, %208 : vector<16x32xf32>
    %210 = arith.mulf %209, %209 : vector<16x32xf32>
    %cst_81 = arith.constant dense<0.000000e+00> : vector<16xf32>
    %211 = vector.multi_reduction <add>, %210, %cst_81 [1] : vector<16x32xf32> to vector<16xf32>
    %212 = vector.shape_cast %211 : vector<16xf32> to vector<16x1xf32>
    %cst_82 = arith.constant 3.200000e+01 : f32
    %213 = vector.broadcast %cst_82 : f32 to vector<16x1xf32>
    %214 = arith.divf %212, %213 : vector<16x1xf32>
    %215 = vector.broadcast %207 : vector<16x1xf32> to vector<16x32xf32>
    %216 = arith.subf %199, %215 : vector<16x32xf32>
    %cst_83 = arith.constant 9.99999974E-6 : f32
    %217 = vector.broadcast %cst_83 : f32 to vector<16x1xf32>
    %218 = arith.addf %214, %217 : vector<16x1xf32>
    %219 = math.rsqrt %218 : vector<16x1xf32>
    %220 = vector.broadcast %219 : vector<16x1xf32> to vector<16x32xf32>
    %221 = arith.mulf %216, %220 : vector<16x32xf32>
    %222 = vector.broadcast %201 : vector<1x32xf32> to vector<16x32xf32>
    %223 = arith.mulf %221, %222 : vector<16x32xf32>
    %224 = vector.broadcast %203 : vector<1x32xf32> to vector<16x32xf32>
    %225 = arith.addf %223, %224 : vector<16x32xf32>
    %226 = arith.truncf %225 : vector<16x32xf32> to vector<16x32xbf16>
    %c0_84 = arith.constant 0 : index
    %c0_85 = arith.constant 0 : index
    %c0_86 = arith.constant 0 : index
    %227 = vector.load %arg8[%c0_84, %c0_85, %c0_86] : memref<2x32x128xbf16, #tpu.memory_space<vmem>>, vector<1x32x128xbf16>
    %228 = vector.shape_cast %227 : vector<1x32x128xbf16> to vector<32x128xbf16>
    %cst_87 = arith.constant dense<0.000000e+00> : vector<16x128xf32>
    %229 = tpu.matmul %226, %228, %cst_87 {dimension_numbers = #tpu.dot_dimension_numbers<[1], [0], [0], [1], [0, 0, 1, 1], [], []>} : vector<16x32xbf16>, vector<32x128xbf16>, vector<16x128xf32> -> vector<16x128xf32>
    %c0_88 = arith.constant 0 : index
    %c0_89 = arith.constant 0 : index
    %c0_90 = arith.constant 0 : index
    %230 = vector.load %arg9[%c0_88, %c0_89, %c0_90] : memref<2x1x128xf32, #tpu.memory_space<vmem>>, vector<1x1x128xf32>
    %231 = vector.shape_cast %230 : vector<1x1x128xf32> to vector<1x128xf32>
    %232 = vector.broadcast %231 : vector<1x128xf32> to vector<16x128xf32>
    %233 = arith.addf %229, %232 : vector<16x128xf32>
    %cst_91 = arith.constant 5.000000e-01 : f32
    %234 = vector.broadcast %cst_91 : f32 to vector<16x128xf32>
    %235 = arith.mulf %234, %233 : vector<16x128xf32>
    %cst_92 = arith.constant 4.471500e-02 : f32
    %236 = vector.broadcast %cst_92 : f32 to vector<16x128xf32>
    %237 = arith.mulf %236, %233 : vector<16x128xf32>
    %238 = arith.mulf %237, %233 : vector<16x128xf32>
    %239 = arith.mulf %238, %233 : vector<16x128xf32>
    %240 = arith.addf %233, %239 : vector<16x128xf32>
    %cst_93 = arith.constant 0.797884583 : f32
    %241 = vector.broadcast %cst_93 : f32 to vector<16x128xf32>
    %242 = arith.mulf %241, %240 : vector<16x128xf32>
    %243 = math.tanh %242 : vector<16x128xf32>
    %cst_94 = arith.constant 1.000000e+00 : f32
    %244 = vector.broadcast %cst_94 : f32 to vector<16x128xf32>
    %245 = arith.addf %244, %243 : vector<16x128xf32>
    %246 = arith.mulf %235, %245 : vector<16x128xf32>
    %247 = arith.truncf %246 : vector<16x128xf32> to vector<16x128xbf16>
    %c0_95 = arith.constant 0 : index
    %c0_96 = arith.constant 0 : index
    %c0_97 = arith.constant 0 : index
    %248 = vector.load %arg10[%c0_95, %c0_96, %c0_97] : memref<2x128x32xbf16, #tpu.memory_space<vmem>>, vector<1x128x32xbf16>
    %249 = vector.shape_cast %248 : vector<1x128x32xbf16> to vector<128x32xbf16>
    %cst_98 = arith.constant dense<0.000000e+00> : vector<16x32xf32>
    %250 = tpu.matmul %247, %249, %cst_98 {dimension_numbers = #tpu.dot_dimension_numbers<[1], [0], [0], [1], [0, 0, 1, 1], [], []>} : vector<16x128xbf16>, vector<128x32xbf16>, vector<16x32xf32> -> vector<16x32xf32>
    %c0_99 = arith.constant 0 : index
    %c0_100 = arith.constant 0 : index
    %c0_101 = arith.constant 0 : index
    %251 = vector.load %arg11[%c0_99, %c0_100, %c0_101] : memref<2x1x32xf32, #tpu.memory_space<vmem>>, vector<1x1x32xf32>
    %252 = vector.shape_cast %251 : vector<1x1x32xf32> to vector<1x32xf32>
    %253 = vector.broadcast %252 : vector<1x32xf32> to vector<16x32xf32>
    %254 = arith.addf %250, %253 : vector<16x32xf32>
    %255 = arith.addf %225, %254 : vector<16x32xf32>
    %c0_102 = arith.constant 0 : index
    %c0_103 = arith.constant 0 : index
    %c0_104 = arith.constant 0 : index
    %256 = vector.load %arg12[%c0_102, %c0_103, %c0_104] : memref<2x1x32xf32, #tpu.memory_space<vmem>>, vector<1x1x32xf32>
    %257 = vector.shape_cast %256 : vector<1x1x32xf32> to vector<1x32xf32>
    %c0_105 = arith.constant 0 : index
    %c0_106 = arith.constant 0 : index
    %c0_107 = arith.constant 0 : index
    %258 = vector.load %arg13[%c0_105, %c0_106, %c0_107] : memref<2x1x32xf32, #tpu.memory_space<vmem>>, vector<1x1x32xf32>
    %259 = vector.shape_cast %258 : vector<1x1x32xf32> to vector<1x32xf32>
    %cst_108 = arith.constant dense<0.000000e+00> : vector<16xf32>
    %260 = vector.multi_reduction <add>, %255, %cst_108 [1] : vector<16x32xf32> to vector<16xf32>
    %261 = vector.shape_cast %260 : vector<16xf32> to vector<16x1xf32>
    %cst_109 = arith.constant 3.200000e+01 : f32
    %262 = vector.broadcast %cst_109 : f32 to vector<16x1xf32>
    %263 = arith.divf %261, %262 : vector<16x1xf32>
    %264 = vector.broadcast %263 : vector<16x1xf32> to vector<16x32xf32>
    %265 = arith.subf %255, %264 : vector<16x32xf32>
    %266 = arith.mulf %265, %265 : vector<16x32xf32>
    %cst_110 = arith.constant dense<0.000000e+00> : vector<16xf32>
    %267 = vector.multi_reduction <add>, %266, %cst_110 [1] : vector<16x32xf32> to vector<16xf32>
    %268 = vector.shape_cast %267 : vector<16xf32> to vector<16x1xf32>
    %cst_111 = arith.constant 3.200000e+01 : f32
    %269 = vector.broadcast %cst_111 : f32 to vector<16x1xf32>
    %270 = arith.divf %268, %269 : vector<16x1xf32>
    %271 = vector.broadcast %263 : vector<16x1xf32> to vector<16x32xf32>
    %272 = arith.subf %255, %271 : vector<16x32xf32>
    %cst_112 = arith.constant 9.99999974E-6 : f32
    %273 = vector.broadcast %cst_112 : f32 to vector<16x1xf32>
    %274 = arith.addf %270, %273 : vector<16x1xf32>
    %275 = math.rsqrt %274 : vector<16x1xf32>
    %276 = vector.broadcast %275 : vector<16x1xf32> to vector<16x32xf32>
    %277 = arith.mulf %272, %276 : vector<16x32xf32>
    %278 = vector.broadcast %257 : vector<1x32xf32> to vector<16x32xf32>
    %279 = arith.mulf %277, %278 : vector<16x32xf32>
    %280 = vector.broadcast %259 : vector<1x32xf32> to vector<16x32xf32>
    %281 = arith.addf %279, %280 : vector<16x32xf32>
    %282 = arith.truncf %281 : vector<16x32xf32> to vector<16x32xbf16>
    %c1 = arith.constant 1 : index
    %c0_113 = arith.constant 0 : index
    %c0_114 = arith.constant 0 : index
    %283 = vector.load %arg2[%c1, %c0_113, %c0_114] : memref<2x32x96xbf16, #tpu.memory_space<vmem>>, vector<1x32x96xbf16>
    %284 = vector.shape_cast %283 : vector<1x32x96xbf16> to vector<32x96xbf16>
    %cst_115 = arith.constant dense<0.000000e+00> : vector<16x96xf32>
    %285 = tpu.matmul %282, %284, %cst_115 {dimension_numbers = #tpu.dot_dimension_numbers<[1], [0], [0], [1], [0, 0, 1, 1], [], []>} : vector<16x32xbf16>, vector<32x96xbf16>, vector<16x96xf32> -> vector<16x96xf32>
    %c1_116 = arith.constant 1 : index
    %c0_117 = arith.constant 0 : index
    %c0_118 = arith.constant 0 : index
    %286 = vector.load %arg3[%c1_116, %c0_117, %c0_118] : memref<2x1x96xf32, #tpu.memory_space<vmem>>, vector<1x1x96xf32>
    %287 = vector.shape_cast %286 : vector<1x1x96xf32> to vector<1x96xf32>
    %288 = vector.broadcast %287 : vector<1x96xf32> to vector<16x96xf32>
    %289 = arith.addf %285, %288 : vector<16x96xf32>
    %290 = vector.extract_strided_slice %289 {offsets = [0, 0], sizes = [16, 32], strides = [1, 1]} : vector<16x96xf32> to vector<16x32xf32>
    %291 = arith.truncf %290 : vector<16x32xf32> to vector<16x32xbf16>
    %292 = vector.extract_strided_slice %289 {offsets = [0, 32], sizes = [16, 32], strides = [1, 1]} : vector<16x96xf32> to vector<16x32xf32>
    %293 = arith.truncf %292 : vector<16x32xf32> to vector<16x32xbf16>
    %294 = vector.extract_strided_slice %289 {offsets = [0, 64], sizes = [16, 32], strides = [1, 1]} : vector<16x96xf32> to vector<16x32xf32>
    %295 = arith.truncf %294 : vector<16x32xf32> to vector<16x32xbf16>
    %296 = vector.extract_strided_slice %5 {offsets = [0, 0], sizes = [1, 8], strides = [1, 1]} : vector<2x8xf32> to vector<1x8xf32>
    %297 = vector.extract_strided_slice %291 {offsets = [0, 0], sizes = [8, 8], strides = [1, 1]} : vector<16x32xbf16> to vector<8x8xbf16>
    %298 = vector.extract_strided_slice %293 {offsets = [0, 0], sizes = [8, 8], strides = [1, 1]} : vector<16x32xbf16> to vector<8x8xbf16>
    %299 = vector.extract_strided_slice %295 {offsets = [0, 0], sizes = [8, 8], strides = [1, 1]} : vector<16x32xbf16> to vector<8x8xbf16>
    %cst_119 = arith.constant dense<0.000000e+00> : vector<8x8xf32>
    %300 = tpu.matmul %297, %298, %cst_119 {dimension_numbers = #tpu.dot_dimension_numbers<[1], [1], [0], [0], [0, 0, 1, 0], [], []>} : vector<8x8xbf16>, vector<8x8xbf16>, vector<8x8xf32> -> vector<8x8xf32>
    %cst_120 = arith.constant 0.353553385 : f32
    %301 = vector.broadcast %cst_120 : f32 to vector<8x8xf32>
    %302 = arith.mulf %300, %301 : vector<8x8xf32>
    %303 = vector.broadcast %296 : vector<1x8xf32> to vector<8x8xf32>
    %304 = arith.addf %302, %303 : vector<8x8xf32>
    %cst_121 = arith.constant dense<0xFF800000> : vector<8xf32>
    %305 = vector.multi_reduction <maximumf>, %304, %cst_121 [1] : vector<8x8xf32> to vector<8xf32>
    %306 = vector.shape_cast %305 : vector<8xf32> to vector<8x1xf32>
    %307 = vector.broadcast %306 : vector<8x1xf32> to vector<8x8xf32>
    %308 = arith.subf %304, %307 : vector<8x8xf32>
    %309 = math.exp %308 : vector<8x8xf32>
    %cst_122 = arith.constant dense<0.000000e+00> : vector<8xf32>
    %310 = vector.multi_reduction <add>, %309, %cst_122 [1] : vector<8x8xf32> to vector<8xf32>
    %311 = vector.shape_cast %310 : vector<8xf32> to vector<8x1xf32>
    %312 = tpu.reciprocal %311 {approx = true} : vector<8x1xf32> -> vector<8x1xf32>
    %313 = vector.broadcast %312 : vector<8x1xf32> to vector<8x8xf32>
    %314 = arith.mulf %309, %313 : vector<8x8xf32>
    %315 = arith.truncf %314 : vector<8x8xf32> to vector<8x8xbf16>
    %cst_123 = arith.constant dense<0.000000e+00> : vector<8x8xf32>
    %316 = tpu.matmul %315, %299, %cst_123 {dimension_numbers = #tpu.dot_dimension_numbers<[1], [0], [0], [1], [0, 0, 1, 1], [], []>} : vector<8x8xbf16>, vector<8x8xbf16>, vector<8x8xf32> -> vector<8x8xf32>
    %c0_124 = arith.constant 0 : index
    %c0_125 = arith.constant 0 : index
    %317 = vector.load %arg20[%c0_124, %c0_125] : memref<16x32xf32, #tpu.memory_space<vmem>>, vector<8x8xf32>
    tpu.vector_store %arg20[%c0_124, %c0_125], %316 {strides = array<i32>} : memref<16x32xf32, #tpu.memory_space<vmem>>, vector<8x8xf32>,
    %318 = vector.extract_strided_slice %291 {offsets = [0, 8], sizes = [8, 8], strides = [1, 1]} : vector<16x32xbf16> to vector<8x8xbf16>
    %319 = vector.extract_strided_slice %293 {offsets = [0, 8], sizes = [8, 8], strides = [1, 1]} : vector<16x32xbf16> to vector<8x8xbf16>
    %320 = vector.extract_strided_slice %295 {offsets = [0, 8], sizes = [8, 8], strides = [1, 1]} : vector<16x32xbf16> to vector<8x8xbf16>
    %cst_126 = arith.constant dense<0.000000e+00> : vector<8x8xf32>
    %321 = tpu.matmul %318, %319, %cst_126 {dimension_numbers = #tpu.dot_dimension_numbers<[1], [1], [0], [0], [0, 0, 1, 0], [], []>} : vector<8x8xbf16>, vector<8x8xbf16>, vector<8x8xf32> -> vector<8x8xf32>
    %cst_127 = arith.constant 0.353553385 : f32
    %322 = vector.broadcast %cst_127 : f32 to vector<8x8xf32>
    %323 = arith.mulf %321, %322 : vector<8x8xf32>
    %324 = vector.broadcast %296 : vector<1x8xf32> to vector<8x8xf32>
    %325 = arith.addf %323, %324 : vector<8x8xf32>
    %cst_128 = arith.constant dense<0xFF800000> : vector<8xf32>
    %326 = vector.multi_reduction <maximumf>, %325, %cst_128 [1] : vector<8x8xf32> to vector<8xf32>
    %327 = vector.shape_cast %326 : vector<8xf32> to vector<8x1xf32>
    %328 = vector.broadcast %327 : vector<8x1xf32> to vector<8x8xf32>
    %329 = arith.subf %325, %328 : vector<8x8xf32>
    %330 = math.exp %329 : vector<8x8xf32>
    %cst_129 = arith.constant dense<0.000000e+00> : vector<8xf32>
    %331 = vector.multi_reduction <add>, %330, %cst_129 [1] : vector<8x8xf32> to vector<8xf32>
    %332 = vector.shape_cast %331 : vector<8xf32> to vector<8x1xf32>
    %333 = tpu.reciprocal %332 {approx = true} : vector<8x1xf32> -> vector<8x1xf32>
    %334 = vector.broadcast %333 : vector<8x1xf32> to vector<8x8xf32>
    %335 = arith.mulf %330, %334 : vector<8x8xf32>
    %336 = arith.truncf %335 : vector<8x8xf32> to vector<8x8xbf16>
    %cst_130 = arith.constant dense<0.000000e+00> : vector<8x8xf32>
    %337 = tpu.matmul %336, %320, %cst_130 {dimension_numbers = #tpu.dot_dimension_numbers<[1], [0], [0], [1], [0, 0, 1, 1], [], []>} : vector<8x8xbf16>, vector<8x8xbf16>, vector<8x8xf32> -> vector<8x8xf32>
    %c0_131 = arith.constant 0 : index
    %c8_132 = arith.constant 8 : index
    %338 = vector.load %arg20[%c0_131, %c8_132] : memref<16x32xf32, #tpu.memory_space<vmem>>, vector<8x8xf32>
    tpu.vector_store %arg20[%c0_131, %c8_132], %337 {strides = array<i32>} : memref<16x32xf32, #tpu.memory_space<vmem>>, vector<8x8xf32>,
    %339 = vector.extract_strided_slice %291 {offsets = [0, 16], sizes = [8, 8], strides = [1, 1]} : vector<16x32xbf16> to vector<8x8xbf16>
    %340 = vector.extract_strided_slice %293 {offsets = [0, 16], sizes = [8, 8], strides = [1, 1]} : vector<16x32xbf16> to vector<8x8xbf16>
    %341 = vector.extract_strided_slice %295 {offsets = [0, 16], sizes = [8, 8], strides = [1, 1]} : vector<16x32xbf16> to vector<8x8xbf16>
    %cst_133 = arith.constant dense<0.000000e+00> : vector<8x8xf32>
    %342 = tpu.matmul %339, %340, %cst_133 {dimension_numbers = #tpu.dot_dimension_numbers<[1], [1], [0], [0], [0, 0, 1, 0], [], []>} : vector<8x8xbf16>, vector<8x8xbf16>, vector<8x8xf32> -> vector<8x8xf32>
    %cst_134 = arith.constant 0.353553385 : f32
    %343 = vector.broadcast %cst_134 : f32 to vector<8x8xf32>
    %344 = arith.mulf %342, %343 : vector<8x8xf32>
    %345 = vector.broadcast %296 : vector<1x8xf32> to vector<8x8xf32>
    %346 = arith.addf %344, %345 : vector<8x8xf32>
    %cst_135 = arith.constant dense<0xFF800000> : vector<8xf32>
    %347 = vector.multi_reduction <maximumf>, %346, %cst_135 [1] : vector<8x8xf32> to vector<8xf32>
    %348 = vector.shape_cast %347 : vector<8xf32> to vector<8x1xf32>
    %349 = vector.broadcast %348 : vector<8x1xf32> to vector<8x8xf32>
    %350 = arith.subf %346, %349 : vector<8x8xf32>
    %351 = math.exp %350 : vector<8x8xf32>
    %cst_136 = arith.constant dense<0.000000e+00> : vector<8xf32>
    %352 = vector.multi_reduction <add>, %351, %cst_136 [1] : vector<8x8xf32> to vector<8xf32>
    %353 = vector.shape_cast %352 : vector<8xf32> to vector<8x1xf32>
    %354 = tpu.reciprocal %353 {approx = true} : vector<8x1xf32> -> vector<8x1xf32>
    %355 = vector.broadcast %354 : vector<8x1xf32> to vector<8x8xf32>
    %356 = arith.mulf %351, %355 : vector<8x8xf32>
    %357 = arith.truncf %356 : vector<8x8xf32> to vector<8x8xbf16>
    %cst_137 = arith.constant dense<0.000000e+00> : vector<8x8xf32>
    %358 = tpu.matmul %357, %341, %cst_137 {dimension_numbers = #tpu.dot_dimension_numbers<[1], [0], [0], [1], [0, 0, 1, 1], [], []>} : vector<8x8xbf16>, vector<8x8xbf16>, vector<8x8xf32> -> vector<8x8xf32>
    %c0_138 = arith.constant 0 : index
    %c16_139 = arith.constant 16 : index
    %359 = vector.load %arg20[%c0_138, %c16_139] : memref<16x32xf32, #tpu.memory_space<vmem>>, vector<8x8xf32>
    tpu.vector_store %arg20[%c0_138, %c16_139], %358 {strides = array<i32>} : memref<16x32xf32, #tpu.memory_space<vmem>>, vector<8x8xf32>,
    %360 = vector.extract_strided_slice %291 {offsets = [0, 24], sizes = [8, 8], strides = [1, 1]} : vector<16x32xbf16> to vector<8x8xbf16>
    %361 = vector.extract_strided_slice %293 {offsets = [0, 24], sizes = [8, 8], strides = [1, 1]} : vector<16x32xbf16> to vector<8x8xbf16>
    %362 = vector.extract_strided_slice %295 {offsets = [0, 24], sizes = [8, 8], strides = [1, 1]} : vector<16x32xbf16> to vector<8x8xbf16>
    %cst_140 = arith.constant dense<0.000000e+00> : vector<8x8xf32>
    %363 = tpu.matmul %360, %361, %cst_140 {dimension_numbers = #tpu.dot_dimension_numbers<[1], [1], [0], [0], [0, 0, 1, 0], [], []>} : vector<8x8xbf16>, vector<8x8xbf16>, vector<8x8xf32> -> vector<8x8xf32>
    %cst_141 = arith.constant 0.353553385 : f32
    %364 = vector.broadcast %cst_141 : f32 to vector<8x8xf32>
    %365 = arith.mulf %363, %364 : vector<8x8xf32>
    %366 = vector.broadcast %296 : vector<1x8xf32> to vector<8x8xf32>
    %367 = arith.addf %365, %366 : vector<8x8xf32>
    %cst_142 = arith.constant dense<0xFF800000> : vector<8xf32>
    %368 = vector.multi_reduction <maximumf>, %367, %cst_142 [1] : vector<8x8xf32> to vector<8xf32>
    %369 = vector.shape_cast %368 : vector<8xf32> to vector<8x1xf32>
    %370 = vector.broadcast %369 : vector<8x1xf32> to vector<8x8xf32>
    %371 = arith.subf %367, %370 : vector<8x8xf32>
    %372 = math.exp %371 : vector<8x8xf32>
    %cst_143 = arith.constant dense<0.000000e+00> : vector<8xf32>
    %373 = vector.multi_reduction <add>, %372, %cst_143 [1] : vector<8x8xf32> to vector<8xf32>
    %374 = vector.shape_cast %373 : vector<8xf32> to vector<8x1xf32>
    %375 = tpu.reciprocal %374 {approx = true} : vector<8x1xf32> -> vector<8x1xf32>
    %376 = vector.broadcast %375 : vector<8x1xf32> to vector<8x8xf32>
    %377 = arith.mulf %372, %376 : vector<8x8xf32>
    %378 = arith.truncf %377 : vector<8x8xf32> to vector<8x8xbf16>
    %cst_144 = arith.constant dense<0.000000e+00> : vector<8x8xf32>
    %379 = tpu.matmul %378, %362, %cst_144 {dimension_numbers = #tpu.dot_dimension_numbers<[1], [0], [0], [1], [0, 0, 1, 1], [], []>} : vector<8x8xbf16>, vector<8x8xbf16>, vector<8x8xf32> -> vector<8x8xf32>
    %c0_145 = arith.constant 0 : index
    %c24_146 = arith.constant 24 : index
    %380 = vector.load %arg20[%c0_145, %c24_146] : memref<16x32xf32, #tpu.memory_space<vmem>>, vector<8x8xf32>
    tpu.vector_store %arg20[%c0_145, %c24_146], %379 {strides = array<i32>} : memref<16x32xf32, #tpu.memory_space<vmem>>, vector<8x8xf32>,
    %381 = vector.extract_strided_slice %5 {offsets = [1, 0], sizes = [1, 8], strides = [1, 1]} : vector<2x8xf32> to vector<1x8xf32>
    %382 = vector.extract_strided_slice %291 {offsets = [8, 0], sizes = [8, 8], strides = [1, 1]} : vector<16x32xbf16> to vector<8x8xbf16>
    %383 = vector.extract_strided_slice %293 {offsets = [8, 0], sizes = [8, 8], strides = [1, 1]} : vector<16x32xbf16> to vector<8x8xbf16>
    %384 = vector.extract_strided_slice %295 {offsets = [8, 0], sizes = [8, 8], strides = [1, 1]} : vector<16x32xbf16> to vector<8x8xbf16>
    %cst_147 = arith.constant dense<0.000000e+00> : vector<8x8xf32>
    %385 = tpu.matmul %382, %383, %cst_147 {dimension_numbers = #tpu.dot_dimension_numbers<[1], [1], [0], [0], [0, 0, 1, 0], [], []>} : vector<8x8xbf16>, vector<8x8xbf16>, vector<8x8xf32> -> vector<8x8xf32>
    %cst_148 = arith.constant 0.353553385 : f32
    %386 = vector.broadcast %cst_148 : f32 to vector<8x8xf32>
    %387 = arith.mulf %385, %386 : vector<8x8xf32>
    %388 = vector.broadcast %381 : vector<1x8xf32> to vector<8x8xf32>
    %389 = arith.addf %387, %388 : vector<8x8xf32>
    %cst_149 = arith.constant dense<0xFF800000> : vector<8xf32>
    %390 = vector.multi_reduction <maximumf>, %389, %cst_149 [1] : vector<8x8xf32> to vector<8xf32>
    %391 = vector.shape_cast %390 : vector<8xf32> to vector<8x1xf32>
    %392 = vector.broadcast %391 : vector<8x1xf32> to vector<8x8xf32>
    %393 = arith.subf %389, %392 : vector<8x8xf32>
    %394 = math.exp %393 : vector<8x8xf32>
    %cst_150 = arith.constant dense<0.000000e+00> : vector<8xf32>
    %395 = vector.multi_reduction <add>, %394, %cst_150 [1] : vector<8x8xf32> to vector<8xf32>
    %396 = vector.shape_cast %395 : vector<8xf32> to vector<8x1xf32>
    %397 = tpu.reciprocal %396 {approx = true} : vector<8x1xf32> -> vector<8x1xf32>
    %398 = vector.broadcast %397 : vector<8x1xf32> to vector<8x8xf32>
    %399 = arith.mulf %394, %398 : vector<8x8xf32>
    %400 = arith.truncf %399 : vector<8x8xf32> to vector<8x8xbf16>
    %cst_151 = arith.constant dense<0.000000e+00> : vector<8x8xf32>
    %401 = tpu.matmul %400, %384, %cst_151 {dimension_numbers = #tpu.dot_dimension_numbers<[1], [0], [0], [1], [0, 0, 1, 1], [], []>} : vector<8x8xbf16>, vector<8x8xbf16>, vector<8x8xf32> -> vector<8x8xf32>
    %c8_152 = arith.constant 8 : index
    %c0_153 = arith.constant 0 : index
    %402 = vector.load %arg20[%c8_152, %c0_153] : memref<16x32xf32, #tpu.memory_space<vmem>>, vector<8x8xf32>
    tpu.vector_store %arg20[%c8_152, %c0_153], %401 {strides = array<i32>} : memref<16x32xf32, #tpu.memory_space<vmem>>, vector<8x8xf32>,
    %403 = vector.extract_strided_slice %291 {offsets = [8, 8], sizes = [8, 8], strides = [1, 1]} : vector<16x32xbf16> to vector<8x8xbf16>
    %404 = vector.extract_strided_slice %293 {offsets = [8, 8], sizes = [8, 8], strides = [1, 1]} : vector<16x32xbf16> to vector<8x8xbf16>
    %405 = vector.extract_strided_slice %295 {offsets = [8, 8], sizes = [8, 8], strides = [1, 1]} : vector<16x32xbf16> to vector<8x8xbf16>
    %cst_154 = arith.constant dense<0.000000e+00> : vector<8x8xf32>
    %406 = tpu.matmul %403, %404, %cst_154 {dimension_numbers = #tpu.dot_dimension_numbers<[1], [1], [0], [0], [0, 0, 1, 0], [], []>} : vector<8x8xbf16>, vector<8x8xbf16>, vector<8x8xf32> -> vector<8x8xf32>
    %cst_155 = arith.constant 0.353553385 : f32
    %407 = vector.broadcast %cst_155 : f32 to vector<8x8xf32>
    %408 = arith.mulf %406, %407 : vector<8x8xf32>
    %409 = vector.broadcast %381 : vector<1x8xf32> to vector<8x8xf32>
    %410 = arith.addf %408, %409 : vector<8x8xf32>
    %cst_156 = arith.constant dense<0xFF800000> : vector<8xf32>
    %411 = vector.multi_reduction <maximumf>, %410, %cst_156 [1] : vector<8x8xf32> to vector<8xf32>
    %412 = vector.shape_cast %411 : vector<8xf32> to vector<8x1xf32>
    %413 = vector.broadcast %412 : vector<8x1xf32> to vector<8x8xf32>
    %414 = arith.subf %410, %413 : vector<8x8xf32>
    %415 = math.exp %414 : vector<8x8xf32>
    %cst_157 = arith.constant dense<0.000000e+00> : vector<8xf32>
    %416 = vector.multi_reduction <add>, %415, %cst_157 [1] : vector<8x8xf32> to vector<8xf32>
    %417 = vector.shape_cast %416 : vector<8xf32> to vector<8x1xf32>
    %418 = tpu.reciprocal %417 {approx = true} : vector<8x1xf32> -> vector<8x1xf32>
    %419 = vector.broadcast %418 : vector<8x1xf32> to vector<8x8xf32>
    %420 = arith.mulf %415, %419 : vector<8x8xf32>
    %421 = arith.truncf %420 : vector<8x8xf32> to vector<8x8xbf16>
    %cst_158 = arith.constant dense<0.000000e+00> : vector<8x8xf32>
    %422 = tpu.matmul %421, %405, %cst_158 {dimension_numbers = #tpu.dot_dimension_numbers<[1], [0], [0], [1], [0, 0, 1, 1], [], []>} : vector<8x8xbf16>, vector<8x8xbf16>, vector<8x8xf32> -> vector<8x8xf32>
    %c8_159 = arith.constant 8 : index
    %c8_160 = arith.constant 8 : index
    %423 = vector.load %arg20[%c8_159, %c8_160] : memref<16x32xf32, #tpu.memory_space<vmem>>, vector<8x8xf32>
    tpu.vector_store %arg20[%c8_159, %c8_160], %422 {strides = array<i32>} : memref<16x32xf32, #tpu.memory_space<vmem>>, vector<8x8xf32>,
    %424 = vector.extract_strided_slice %291 {offsets = [8, 16], sizes = [8, 8], strides = [1, 1]} : vector<16x32xbf16> to vector<8x8xbf16>
    %425 = vector.extract_strided_slice %293 {offsets = [8, 16], sizes = [8, 8], strides = [1, 1]} : vector<16x32xbf16> to vector<8x8xbf16>
    %426 = vector.extract_strided_slice %295 {offsets = [8, 16], sizes = [8, 8], strides = [1, 1]} : vector<16x32xbf16> to vector<8x8xbf16>
    %cst_161 = arith.constant dense<0.000000e+00> : vector<8x8xf32>
    %427 = tpu.matmul %424, %425, %cst_161 {dimension_numbers = #tpu.dot_dimension_numbers<[1], [1], [0], [0], [0, 0, 1, 0], [], []>} : vector<8x8xbf16>, vector<8x8xbf16>, vector<8x8xf32> -> vector<8x8xf32>
    %cst_162 = arith.constant 0.353553385 : f32
    %428 = vector.broadcast %cst_162 : f32 to vector<8x8xf32>
    %429 = arith.mulf %427, %428 : vector<8x8xf32>
    %430 = vector.broadcast %381 : vector<1x8xf32> to vector<8x8xf32>
    %431 = arith.addf %429, %430 : vector<8x8xf32>
    %cst_163 = arith.constant dense<0xFF800000> : vector<8xf32>
    %432 = vector.multi_reduction <maximumf>, %431, %cst_163 [1] : vector<8x8xf32> to vector<8xf32>
    %433 = vector.shape_cast %432 : vector<8xf32> to vector<8x1xf32>
    %434 = vector.broadcast %433 : vector<8x1xf32> to vector<8x8xf32>
    %435 = arith.subf %431, %434 : vector<8x8xf32>
    %436 = math.exp %435 : vector<8x8xf32>
    %cst_164 = arith.constant dense<0.000000e+00> : vector<8xf32>
    %437 = vector.multi_reduction <add>, %436, %cst_164 [1] : vector<8x8xf32> to vector<8xf32>
    %438 = vector.shape_cast %437 : vector<8xf32> to vector<8x1xf32>
    %439 = tpu.reciprocal %438 {approx = true} : vector<8x1xf32> -> vector<8x1xf32>
    %440 = vector.broadcast %439 : vector<8x1xf32> to vector<8x8xf32>
    %441 = arith.mulf %436, %440 : vector<8x8xf32>
    %442 = arith.truncf %441 : vector<8x8xf32> to vector<8x8xbf16>
    %cst_165 = arith.constant dense<0.000000e+00> : vector<8x8xf32>
    %443 = tpu.matmul %442, %426, %cst_165 {dimension_numbers = #tpu.dot_dimension_numbers<[1], [0], [0], [1], [0, 0, 1, 1], [], []>} : vector<8x8xbf16>, vector<8x8xbf16>, vector<8x8xf32> -> vector<8x8xf32>
    %c8_166 = arith.constant 8 : index
    %c16_167 = arith.constant 16 : index
    %444 = vector.load %arg20[%c8_166, %c16_167] : memref<16x32xf32, #tpu.memory_space<vmem>>, vector<8x8xf32>
    tpu.vector_store %arg20[%c8_166, %c16_167], %443 {strides = array<i32>} : memref<16x32xf32, #tpu.memory_space<vmem>>, vector<8x8xf32>,
    %445 = vector.extract_strided_slice %291 {offsets = [8, 24], sizes = [8, 8], strides = [1, 1]} : vector<16x32xbf16> to vector<8x8xbf16>
    %446 = vector.extract_strided_slice %293 {offsets = [8, 24], sizes = [8, 8], strides = [1, 1]} : vector<16x32xbf16> to vector<8x8xbf16>
    %447 = vector.extract_strided_slice %295 {offsets = [8, 24], sizes = [8, 8], strides = [1, 1]} : vector<16x32xbf16> to vector<8x8xbf16>
    %cst_168 = arith.constant dense<0.000000e+00> : vector<8x8xf32>
    %448 = tpu.matmul %445, %446, %cst_168 {dimension_numbers = #tpu.dot_dimension_numbers<[1], [1], [0], [0], [0, 0, 1, 0], [], []>} : vector<8x8xbf16>, vector<8x8xbf16>, vector<8x8xf32> -> vector<8x8xf32>
    %cst_169 = arith.constant 0.353553385 : f32
    %449 = vector.broadcast %cst_169 : f32 to vector<8x8xf32>
    %450 = arith.mulf %448, %449 : vector<8x8xf32>
    %451 = vector.broadcast %381 : vector<1x8xf32> to vector<8x8xf32>
    %452 = arith.addf %450, %451 : vector<8x8xf32>
    %cst_170 = arith.constant dense<0xFF800000> : vector<8xf32>
    %453 = vector.multi_reduction <maximumf>, %452, %cst_170 [1] : vector<8x8xf32> to vector<8xf32>
    %454 = vector.shape_cast %453 : vector<8xf32> to vector<8x1xf32>
    %455 = vector.broadcast %454 : vector<8x1xf32> to vector<8x8xf32>
    %456 = arith.subf %452, %455 : vector<8x8xf32>
    %457 = math.exp %456 : vector<8x8xf32>
    %cst_171 = arith.constant dense<0.000000e+00> : vector<8xf32>
    %458 = vector.multi_reduction <add>, %457, %cst_171 [1] : vector<8x8xf32> to vector<8xf32>
    %459 = vector.shape_cast %458 : vector<8xf32> to vector<8x1xf32>
    %460 = tpu.reciprocal %459 {approx = true} : vector<8x1xf32> -> vector<8x1xf32>
    %461 = vector.broadcast %460 : vector<8x1xf32> to vector<8x8xf32>
    %462 = arith.mulf %457, %461 : vector<8x8xf32>
    %463 = arith.truncf %462 : vector<8x8xf32> to vector<8x8xbf16>
    %cst_172 = arith.constant dense<0.000000e+00> : vector<8x8xf32>
    %464 = tpu.matmul %463, %447, %cst_172 {dimension_numbers = #tpu.dot_dimension_numbers<[1], [0], [0], [1], [0, 0, 1, 1], [], []>} : vector<8x8xbf16>, vector<8x8xbf16>, vector<8x8xf32> -> vector<8x8xf32>
    %c8_173 = arith.constant 8 : index
    %c24_174 = arith.constant 24 : index
    %465 = vector.load %arg20[%c8_173, %c24_174] : memref<16x32xf32, #tpu.memory_space<vmem>>, vector<8x8xf32>
    tpu.vector_store %arg20[%c8_173, %c24_174], %464 {strides = array<i32>} : memref<16x32xf32, #tpu.memory_space<vmem>>, vector<8x8xf32>,
    %c0_175 = arith.constant 0 : index
    %c0_176 = arith.constant 0 : index
    %466 = vector.load %arg20[%c0_175, %c0_176] : memref<16x32xf32, #tpu.memory_space<vmem>>, vector<16x32xf32>
    %467 = arith.truncf %466 : vector<16x32xf32> to vector<16x32xbf16>
    %c1_177 = arith.constant 1 : index
    %c0_178 = arith.constant 0 : index
    %c0_179 = arith.constant 0 : index
    %468 = vector.load %arg4[%c1_177, %c0_178, %c0_179] : memref<2x32x32xbf16, #tpu.memory_space<vmem>>, vector<1x32x32xbf16>
    %469 = vector.shape_cast %468 : vector<1x32x32xbf16> to vector<32x32xbf16>
    %cst_180 = arith.constant dense<0.000000e+00> : vector<16x32xf32>
    %470 = tpu.matmul %467, %469, %cst_180 {dimension_numbers = #tpu.dot_dimension_numbers<[1], [0], [0], [1], [0, 0, 1, 1], [], []>} : vector<16x32xbf16>, vector<32x32xbf16>, vector<16x32xf32> -> vector<16x32xf32>
    %c1_181 = arith.constant 1 : index
    %c0_182 = arith.constant 0 : index
    %c0_183 = arith.constant 0 : index
    %471 = vector.load %arg5[%c1_181, %c0_182, %c0_183] : memref<2x1x32xf32, #tpu.memory_space<vmem>>, vector<1x1x32xf32>
    %472 = vector.shape_cast %471 : vector<1x1x32xf32> to vector<1x32xf32>
    %473 = vector.broadcast %472 : vector<1x32xf32> to vector<16x32xf32>
    %474 = arith.addf %470, %473 : vector<16x32xf32>
    %475 = arith.addf %281, %474 : vector<16x32xf32>
    %c1_184 = arith.constant 1 : index
    %c0_185 = arith.constant 0 : index
    %c0_186 = arith.constant 0 : index
    %476 = vector.load %arg6[%c1_184, %c0_185, %c0_186] : memref<2x1x32xf32, #tpu.memory_space<vmem>>, vector<1x1x32xf32>
    %477 = vector.shape_cast %476 : vector<1x1x32xf32> to vector<1x32xf32>
    %c1_187 = arith.constant 1 : index
    %c0_188 = arith.constant 0 : index
    %c0_189 = arith.constant 0 : index
    %478 = vector.load %arg7[%c1_187, %c0_188, %c0_189] : memref<2x1x32xf32, #tpu.memory_space<vmem>>, vector<1x1x32xf32>
    %479 = vector.shape_cast %478 : vector<1x1x32xf32> to vector<1x32xf32>
    %cst_190 = arith.constant dense<0.000000e+00> : vector<16xf32>
    %480 = vector.multi_reduction <add>, %475, %cst_190 [1] : vector<16x32xf32> to vector<16xf32>
    %481 = vector.shape_cast %480 : vector<16xf32> to vector<16x1xf32>
    %cst_191 = arith.constant 3.200000e+01 : f32
    %482 = vector.broadcast %cst_191 : f32 to vector<16x1xf32>
    %483 = arith.divf %481, %482 : vector<16x1xf32>
    %484 = vector.broadcast %483 : vector<16x1xf32> to vector<16x32xf32>
    %485 = arith.subf %475, %484 : vector<16x32xf32>
    %486 = arith.mulf %485, %485 : vector<16x32xf32>
    %cst_192 = arith.constant dense<0.000000e+00> : vector<16xf32>
    %487 = vector.multi_reduction <add>, %486, %cst_192 [1] : vector<16x32xf32> to vector<16xf32>
    %488 = vector.shape_cast %487 : vector<16xf32> to vector<16x1xf32>
    %cst_193 = arith.constant 3.200000e+01 : f32
    %489 = vector.broadcast %cst_193 : f32 to vector<16x1xf32>
    %490 = arith.divf %488, %489 : vector<16x1xf32>
    %491 = vector.broadcast %483 : vector<16x1xf32> to vector<16x32xf32>
    %492 = arith.subf %475, %491 : vector<16x32xf32>
    %cst_194 = arith.constant 9.99999974E-6 : f32
    %493 = vector.broadcast %cst_194 : f32 to vector<16x1xf32>
    %494 = arith.addf %490, %493 : vector<16x1xf32>
    %495 = math.rsqrt %494 : vector<16x1xf32>
    %496 = vector.broadcast %495 : vector<16x1xf32> to vector<16x32xf32>
    %497 = arith.mulf %492, %496 : vector<16x32xf32>
    %498 = vector.broadcast %477 : vector<1x32xf32> to vector<16x32xf32>
    %499 = arith.mulf %497, %498 : vector<16x32xf32>
    %500 = vector.broadcast %479 : vector<1x32xf32> to vector<16x32xf32>
    %501 = arith.addf %499, %500 : vector<16x32xf32>
    %502 = arith.truncf %501 : vector<16x32xf32> to vector<16x32xbf16>
    %c1_195 = arith.constant 1 : index
    %c0_196 = arith.constant 0 : index
    %c0_197 = arith.constant 0 : index
    %503 = vector.load %arg8[%c1_195, %c0_196, %c0_197] : memref<2x32x128xbf16, #tpu.memory_space<vmem>>, vector<1x32x128xbf16>
    %504 = vector.shape_cast %503 : vector<1x32x128xbf16> to vector<32x128xbf16>
    %cst_198 = arith.constant dense<0.000000e+00> : vector<16x128xf32>
    %505 = tpu.matmul %502, %504, %cst_198 {dimension_numbers = #tpu.dot_dimension_numbers<[1], [0], [0], [1], [0, 0, 1, 1], [], []>} : vector<16x32xbf16>, vector<32x128xbf16>, vector<16x128xf32> -> vector<16x128xf32>
    %c1_199 = arith.constant 1 : index
    %c0_200 = arith.constant 0 : index
    %c0_201 = arith.constant 0 : index
    %506 = vector.load %arg9[%c1_199, %c0_200, %c0_201] : memref<2x1x128xf32, #tpu.memory_space<vmem>>, vector<1x1x128xf32>
    %507 = vector.shape_cast %506 : vector<1x1x128xf32> to vector<1x128xf32>
    %508 = vector.broadcast %507 : vector<1x128xf32> to vector<16x128xf32>
    %509 = arith.addf %505, %508 : vector<16x128xf32>
    %cst_202 = arith.constant 5.000000e-01 : f32
    %510 = vector.broadcast %cst_202 : f32 to vector<16x128xf32>
    %511 = arith.mulf %510, %509 : vector<16x128xf32>
    %cst_203 = arith.constant 4.471500e-02 : f32
    %512 = vector.broadcast %cst_203 : f32 to vector<16x128xf32>
    %513 = arith.mulf %512, %509 : vector<16x128xf32>
    %514 = arith.mulf %513, %509 : vector<16x128xf32>
    %515 = arith.mulf %514, %509 : vector<16x128xf32>
    %516 = arith.addf %509, %515 : vector<16x128xf32>
    %cst_204 = arith.constant 0.797884583 : f32
    %517 = vector.broadcast %cst_204 : f32 to vector<16x128xf32>
    %518 = arith.mulf %517, %516 : vector<16x128xf32>
    %519 = math.tanh %518 : vector<16x128xf32>
    %cst_205 = arith.constant 1.000000e+00 : f32
    %520 = vector.broadcast %cst_205 : f32 to vector<16x128xf32>
    %521 = arith.addf %520, %519 : vector<16x128xf32>
    %522 = arith.mulf %511, %521 : vector<16x128xf32>
    %523 = arith.truncf %522 : vector<16x128xf32> to vector<16x128xbf16>
    %c1_206 = arith.constant 1 : index
    %c0_207 = arith.constant 0 : index
    %c0_208 = arith.constant 0 : index
    %524 = vector.load %arg10[%c1_206, %c0_207, %c0_208] : memref<2x128x32xbf16, #tpu.memory_space<vmem>>, vector<1x128x32xbf16>
    %525 = vector.shape_cast %524 : vector<1x128x32xbf16> to vector<128x32xbf16>
    %cst_209 = arith.constant dense<0.000000e+00> : vector<16x32xf32>
    %526 = tpu.matmul %523, %525, %cst_209 {dimension_numbers = #tpu.dot_dimension_numbers<[1], [0], [0], [1], [0, 0, 1, 1], [], []>} : vector<16x128xbf16>, vector<128x32xbf16>, vector<16x32xf32> -> vector<16x32xf32>
    %c1_210 = arith.constant 1 : index
    %c0_211 = arith.constant 0 : index
    %c0_212 = arith.constant 0 : index
    %527 = vector.load %arg11[%c1_210, %c0_211, %c0_212] : memref<2x1x32xf32, #tpu.memory_space<vmem>>, vector<1x1x32xf32>
    %528 = vector.shape_cast %527 : vector<1x1x32xf32> to vector<1x32xf32>
    %529 = vector.broadcast %528 : vector<1x32xf32> to vector<16x32xf32>
    %530 = arith.addf %526, %529 : vector<16x32xf32>
    %531 = arith.addf %501, %530 : vector<16x32xf32>
    %c1_213 = arith.constant 1 : index
    %c0_214 = arith.constant 0 : index
    %c0_215 = arith.constant 0 : index
    %532 = vector.load %arg12[%c1_213, %c0_214, %c0_215] : memref<2x1x32xf32, #tpu.memory_space<vmem>>, vector<1x1x32xf32>
    %533 = vector.shape_cast %532 : vector<1x1x32xf32> to vector<1x32xf32>
    %c1_216 = arith.constant 1 : index
    %c0_217 = arith.constant 0 : index
    %c0_218 = arith.constant 0 : index
    %534 = vector.load %arg13[%c1_216, %c0_217, %c0_218] : memref<2x1x32xf32, #tpu.memory_space<vmem>>, vector<1x1x32xf32>
    %535 = vector.shape_cast %534 : vector<1x1x32xf32> to vector<1x32xf32>
    %cst_219 = arith.constant dense<0.000000e+00> : vector<16xf32>
    %536 = vector.multi_reduction <add>, %531, %cst_219 [1] : vector<16x32xf32> to vector<16xf32>
    %537 = vector.shape_cast %536 : vector<16xf32> to vector<16x1xf32>
    %cst_220 = arith.constant 3.200000e+01 : f32
    %538 = vector.broadcast %cst_220 : f32 to vector<16x1xf32>
    %539 = arith.divf %537, %538 : vector<16x1xf32>
    %540 = vector.broadcast %539 : vector<16x1xf32> to vector<16x32xf32>
    %541 = arith.subf %531, %540 : vector<16x32xf32>
    %542 = arith.mulf %541, %541 : vector<16x32xf32>
    %cst_221 = arith.constant dense<0.000000e+00> : vector<16xf32>
    %543 = vector.multi_reduction <add>, %542, %cst_221 [1] : vector<16x32xf32> to vector<16xf32>
    %544 = vector.shape_cast %543 : vector<16xf32> to vector<16x1xf32>
    %cst_222 = arith.constant 3.200000e+01 : f32
    %545 = vector.broadcast %cst_222 : f32 to vector<16x1xf32>
    %546 = arith.divf %544, %545 : vector<16x1xf32>
    %547 = vector.broadcast %539 : vector<16x1xf32> to vector<16x32xf32>
    %548 = arith.subf %531, %547 : vector<16x32xf32>
    %cst_223 = arith.constant 9.99999974E-6 : f32
    %549 = vector.broadcast %cst_223 : f32 to vector<16x1xf32>
    %550 = arith.addf %546, %549 : vector<16x1xf32>
    %551 = math.rsqrt %550 : vector<16x1xf32>
    %552 = vector.broadcast %551 : vector<16x1xf32> to vector<16x32xf32>
    %553 = arith.mulf %548, %552 : vector<16x32xf32>
    %554 = vector.broadcast %533 : vector<1x32xf32> to vector<16x32xf32>
    %555 = arith.mulf %553, %554 : vector<16x32xf32>
    %556 = vector.broadcast %535 : vector<1x32xf32> to vector<16x32xf32>
    %557 = arith.addf %555, %556 : vector<16x32xf32>
    %558 = arith.truncf %557 : vector<16x32xf32> to vector<16x32xbf16>
    %c0_224 = arith.constant 0 : index
    %c0_225 = arith.constant 0 : index
    %559 = vector.load %arg14[%c0_224, %c0_225] : memref<32x32xbf16, #tpu.memory_space<vmem>>, vector<32x32xbf16>
    %cst_226 = arith.constant dense<0.000000e+00> : vector<16x32xf32>
    %560 = tpu.matmul %558, %559, %cst_226 {dimension_numbers = #tpu.dot_dimension_numbers<[1], [0], [0], [1], [0, 0, 1, 1], [], []>} : vector<16x32xbf16>, vector<32x32xbf16>, vector<16x32xf32> -> vector<16x32xf32>
    %c0_227 = arith.constant 0 : index
    %c0_228 = arith.constant 0 : index
    %561 = vector.load %arg15[%c0_227, %c0_228] : memref<1x32xf32, #tpu.memory_space<vmem>>, vector<1x32xf32>
    %562 = vector.broadcast %561 : vector<1x32xf32> to vector<16x32xf32>
    %563 = arith.addf %560, %562 : vector<16x32xf32>
    %564 = arith.truncf %563 : vector<16x32xf32> to vector<16x32xbf16>
    %c0_229 = arith.constant 0 : index
    %c0_230 = arith.constant 0 : index
    %565 = vector.load %arg16[%c0_229, %c0_230] : memref<32x18xbf16, #tpu.memory_space<vmem>>, vector<32x18xbf16>
    %cst_231 = arith.constant dense<0.000000e+00> : vector<16x18xf32>
    %566 = tpu.matmul %564, %565, %cst_231 {dimension_numbers = #tpu.dot_dimension_numbers<[1], [0], [0], [1], [0, 0, 1, 1], [], []>} : vector<16x32xbf16>, vector<32x18xbf16>, vector<16x18xf32> -> vector<16x18xf32>
    %c0_232 = arith.constant 0 : index
    %c0_233 = arith.constant 0 : index
    %567 = vector.load %arg17[%c0_232, %c0_233] : memref<1x18xf32, #tpu.memory_space<vmem>>, vector<1x18xf32>
    %568 = vector.broadcast %567 : vector<1x18xf32> to vector<16x18xf32>
    %569 = arith.addf %566, %568 : vector<16x18xf32>
    %570 = math.tanh %563 : vector<16x32xf32>
    %571 = vector.extract_strided_slice %570 {offsets = [0, 0], sizes = [1, 32], strides = [1, 1]} : vector<16x32xf32> to vector<1x32xf32>
    %c0_234 = arith.constant 0 : index
    %c0_235 = arith.constant 0 : index
    %572 = vector.load %arg18[%c0_234, %c0_235] : memref<2x32xf32, #tpu.memory_space<vmem>>, vector<1x32xf32>
    tpu.vector_store %arg18[%c0_234, %c0_235], %571 {strides = array<i32>} : memref<2x32xf32, #tpu.memory_space<vmem>>, vector<1x32xf32>,
    %573 = vector.extract_strided_slice %569 {offsets = [0, 0], sizes = [1, 18], strides = [1, 1]} : vector<16x18xf32> to vector<1x18xf32>
    %c0_236 = arith.constant 0 : index
    %c0_237 = arith.constant 0 : index
    %574 = vector.load %arg19[%c0_236, %c0_237] : memref<2x18xf32, #tpu.memory_space<vmem>>, vector<1x18xf32>
    tpu.vector_store %arg19[%c0_236, %c0_237], %573 {strides = array<i32>} : memref<2x18xf32, #tpu.memory_space<vmem>>, vector<1x18xf32>,
    %575 = vector.extract_strided_slice %570 {offsets = [8, 0], sizes = [1, 32], strides = [1, 1]} : vector<16x32xf32> to vector<1x32xf32>
    %c1_238 = arith.constant 1 : index
    %c0_239 = arith.constant 0 : index
    %576 = vector.load %arg18[%c1_238, %c0_239] : memref<2x32xf32, #tpu.memory_space<vmem>>, vector<1x32xf32>
    tpu.vector_store %arg18[%c1_238, %c0_239], %575 {strides = array<i32>} : memref<2x32xf32, #tpu.memory_space<vmem>>, vector<1x32xf32>,
    %577 = vector.extract_strided_slice %569 {offsets = [8, 0], sizes = [1, 18], strides = [1, 1]} : vector<16x18xf32> to vector<1x18xf32>
    %c1_240 = arith.constant 1 : index
    %c0_241 = arith.constant 0 : index
    %578 = vector.load %arg19[%c1_240, %c0_241] : memref<2x18xf32, #tpu.memory_space<vmem>>, vector<1x18xf32>
    tpu.vector_store %arg19[%c1_240, %c0_241], %577 {strides = array<i32>} : memref<2x18xf32, #tpu.memory_space<vmem>>, vector<1x18xf32>,
    return
  }
}

</mosaic_0001>

<llo_original>
// kernel: tpu_custom_call.1
$region0: #{tpu_custom_call.1}
  #allocation0 [shape = 'u32[]', space=smem, size = 0x4, offset = 0x4, fixed_abs, tag = 'smem constant byte address 0x4 - core index']
  #allocation1 [shape = 'u32[144,128]{1,0:T(1,128)}', space=vmem, size = 0x12000, scoped, tag = 'internal scratch']
  #allocation2 [shape = 'f32[16,32]{1,0:T(8,128)}', space=vmem, size = 0x2000, scoped, tag = 'scratch operand']
  %s0 = inlined_call_operand.vmem [shape: f32[16,32], index: 0, kind: input, shape index: {}]
  %s1 = inlined_call_operand.vmem [shape: f32[2,8], index: 1, kind: input, shape index: {}]
  %s2 = inlined_call_operand.vmem [shape: bf16[2,32,96], index: 2, kind: input, shape index: {}]
  %s3 = inlined_call_operand.vmem [shape: f32[2,1,96], index: 3, kind: input, shape index: {}]
  %s4 = inlined_call_operand.vmem [shape: bf16[2,32,32], index: 4, kind: input, shape index: {}]
  %s5 = inlined_call_operand.vmem [shape: f32[2,1,32], index: 5, kind: input, shape index: {}]
  %s6 = inlined_call_operand.vmem [shape: f32[2,1,32], index: 6, kind: input, shape index: {}]
  %s7 = inlined_call_operand.vmem [shape: f32[2,1,32], index: 7, kind: input, shape index: {}]
  %s8 = inlined_call_operand.vmem [shape: bf16[2,32,128], index: 8, kind: input, shape index: {}]
  %s9 = inlined_call_operand.vmem [shape: f32[2,1,128], index: 9, kind: input, shape index: {}]
  %s10 = inlined_call_operand.vmem [shape: bf16[2,128,32], index: 10, kind: input, shape index: {}]
  %s11 = inlined_call_operand.vmem [shape: f32[2,1,32], index: 11, kind: input, shape index: {}]
  %s12 = inlined_call_operand.vmem [shape: f32[2,1,32], index: 12, kind: input, shape index: {}]
  %s13 = inlined_call_operand.vmem [shape: f32[2,1,32], index: 13, kind: input, shape index: {}]
  %s14 = inlined_call_operand.vmem [shape: bf16[32,32], index: 14, kind: input, shape index: {}]
  %s15 = inlined_call_operand.vmem [shape: f32[1,32], index: 15, kind: input, shape index: {}]
  %s16 = inlined_call_operand.vmem [shape: bf16[32,18], index: 16, kind: input, shape index: {}]
  %s17 = inlined_call_operand.vmem [shape: f32[1,18], index: 17, kind: input, shape index: {}]
  %s18 = inlined_call_operand.hbm [shape: f32[2,32], index: 18, kind: output, shape index: {0}]
  %s19 = inlined_call_operand.hbm [shape: f32[2,18], index: 19, kind: output, shape index: {1}]
  %20 = xla_tuple %s18, %s19
  %s21 = sld [smem:[#allocation0]]
  $region90: #{tpu_custom_call.1} parent=0
    _
  %s23 = ssub.s32 1, %s21
  %s24 = scalar_select 0, %s23, %s21
  $region1: #{tpu_custom_call.1} parent=0
    #allocation3 [shape = 'u8[1024]{0}', space=vmem, size = 0x400, scoped, tag = 'output window, operand 0, single buffered']
    #allocation4 [shape = 's32[1]{0}', space=sflag, size = 0x4, scoped, tag = 'scoped memory for tpu_custom_call.1']
    #allocation5 [shape = 'u8[1024]{0}', space=vmem, size = 0x400, scoped, tag = 'output window, operand 1, single buffered']
    #allocation6 [shape = 's32[1]{0}', space=sflag, size = 0x4, scoped, tag = 'scoped memory for tpu_custom_call.1']
    %25 = vsyncpa [#allocation4], 0
    %26 = vsyncpa [#allocation6], 0
    // Predicated region
    $region2: #{tpu_custom_call.1} parent=1 // pred_check
      _
    $region3: #{tpu_custom_call.1} parent=1 // pred_check_branch
      %28 = sbr.rel (0) target = $region5
    $region4: #{tpu_custom_call.1} parent=1 // pred_region
      _
    $region5: #{tpu_custom_call.1} parent=1 // pred_fallthru
      _
    // Predicated region
    $region6: #{tpu_custom_call.1} parent=1 // pred_check
      _
    $region7: #{tpu_custom_call.1} parent=1 // pred_check_branch
      %30 = sbr.rel (0) target = $region9
    $region8: #{tpu_custom_call.1} parent=1 // pred_region
      _
    $region9: #{tpu_custom_call.1} parent=1 // pred_fallthru
      _
    // Predicated region
    $region10: #{tpu_custom_call.1} parent=1 // pred_check
      _
    $region11: #{tpu_custom_call.1} parent=1 // pred_check_branch
      %32 = sbr.rel (0) target = $region13
    $region12: #{tpu_custom_call.1} parent=1 // pred_region
      _
    $region13: #{tpu_custom_call.1} parent=1 // pred_fallthru
      _
    // Predicated region
    $region14: #{tpu_custom_call.1} parent=1 // pred_check
      _
    $region15: #{tpu_custom_call.1} parent=1 // pred_check_branch
      %34 = sbr.rel (0) target = $region17
    $region16: #{tpu_custom_call.1} parent=1 // pred_region
      _
    $region17: #{tpu_custom_call.1} parent=1 // pred_fallthru
      _
    // Predicated region
    $region18: #{tpu_custom_call.1} parent=1 // pred_check
      _
    $region19: #{tpu_custom_call.1} parent=1 // pred_check_branch
      %36 = sbr.rel (0) target = $region21
    $region20: #{tpu_custom_call.1} parent=1 // pred_region
      _
    $region21: #{tpu_custom_call.1} parent=1 // pred_fallthru
      _
    // Predicated region
    $region22: #{tpu_custom_call.1} parent=1 // pred_check
      _
    $region23: #{tpu_custom_call.1} parent=1 // pred_check_branch
      %38 = sbr.rel (0) target = $region25
    $region24: #{tpu_custom_call.1} parent=1 // pred_region
      _
    $region25: #{tpu_custom_call.1} parent=1 // pred_fallthru
      _
    // Predicated region
    $region26: #{tpu_custom_call.1} parent=1 // pred_check
      _
    $region27: #{tpu_custom_call.1} parent=1 // pred_check_branch
      %40 = sbr.rel (0) target = $region29
    $region28: #{tpu_custom_call.1} parent=1 // pred_region
      _
    $region29: #{tpu_custom_call.1} parent=1 // pred_fallthru
      _
    // Predicated region
    $region30: #{tpu_custom_call.1} parent=1 // pred_check
      _
    $region31: #{tpu_custom_call.1} parent=1 // pred_check_branch
      %42 = sbr.rel (0) target = $region33
    $region32: #{tpu_custom_call.1} parent=1 // pred_region
      _
    $region33: #{tpu_custom_call.1} parent=1 // pred_fallthru
      _
    // Predicated region
    $region34: #{tpu_custom_call.1} parent=1 // pred_check
      _
    $region35: #{tpu_custom_call.1} parent=1 // pred_check_branch
      %44 = sbr.rel (0) target = $region37
    $region36: #{tpu_custom_call.1} parent=1 // pred_region
      _
    $region37: #{tpu_custom_call.1} parent=1 // pred_fallthru
      _
    // Predicated region
    $region38: #{tpu_custom_call.1} parent=1 // pred_check
      _
    $region39: #{tpu_custom_call.1} parent=1 // pred_check_branch
      %46 = sbr.rel (0) target = $region41
    $region40: #{tpu_custom_call.1} parent=1 // pred_region
      _
    $region41: #{tpu_custom_call.1} parent=1 // pred_fallthru
      _
    // Predicated region
    $region42: #{tpu_custom_call.1} parent=1 // pred_check
      _
    $region43: #{tpu_custom_call.1} parent=1 // pred_check_branch
      %48 = sbr.rel (0) target = $region45
    $region44: #{tpu_custom_call.1} parent=1 // pred_region
      _
    $region45: #{tpu_custom_call.1} parent=1 // pred_fallthru
      _
    // Predicated region
    $region46: #{tpu_custom_call.1} parent=1 // pred_check
      _
    $region47: #{tpu_custom_call.1} parent=1 // pred_check_branch
      %50 = sbr.rel (0) target = $region49
    $region48: #{tpu_custom_call.1} parent=1 // pred_region
      _
    $region49: #{tpu_custom_call.1} parent=1 // pred_fallthru
      _
    // Predicated region
    $region50: #{tpu_custom_call.1} parent=1 // pred_check
      _
    $region51: #{tpu_custom_call.1} parent=1 // pred_check_branch
      %52 = sbr.rel (0) target = $region53
    $region52: #{tpu_custom_call.1} parent=1 // pred_region
      _
    $region53: #{tpu_custom_call.1} parent=1 // pred_fallthru
      _
    // Predicated region
    $region54: #{tpu_custom_call.1} parent=1 // pred_check
      _
    $region55: #{tpu_custom_call.1} parent=1 // pred_check_branch
      %54 = sbr.rel (0) target = $region57
    $region56: #{tpu_custom_call.1} parent=1 // pred_region
      _
    $region57: #{tpu_custom_call.1} parent=1 // pred_fallthru
      _
    // Predicated region
    $region58: #{tpu_custom_call.1} parent=1 // pred_check
      _
    $region59: #{tpu_custom_call.1} parent=1 // pred_check_branch
      %56 = sbr.rel (0) target = $region61
    $region60: #{tpu_custom_call.1} parent=1 // pred_region
      _
    $region61: #{tpu_custom_call.1} parent=1 // pred_fallthru
      _
    // Predicated region
    $region62: #{tpu_custom_call.1} parent=1 // pred_check
      _
    $region63: #{tpu_custom_call.1} parent=1 // pred_check_branch
      %58 = sbr.rel (0) target = $region65
    $region64: #{tpu_custom_call.1} parent=1 // pred_region
      _
    $region65: #{tpu_custom_call.1} parent=1 // pred_fallthru
      _
    // Predicated region
    $region66: #{tpu_custom_call.1} parent=1 // pred_check
      _
    $region67: #{tpu_custom_call.1} parent=1 // pred_check_branch
      %60 = sbr.rel (0) target = $region69
    $region68: #{tpu_custom_call.1} parent=1 // pred_region
      _
    $region69: #{tpu_custom_call.1} parent=1 // pred_fallthru
      _
    // Predicated region
    $region70: #{tpu_custom_call.1} parent=1 // pred_check
      _
    $region71: #{tpu_custom_call.1} parent=1 // pred_check_branch
      %62 = sbr.rel (0) target = $region73
    $region72: #{tpu_custom_call.1} parent=1 // pred_region
      _
    $region73: #{tpu_custom_call.1} parent=1 // pred_fallthru
      _
    %v64 = vld [vmem:[%s0] sm:$0xff]
    %v65 = vld [vmem:[%s0 + $0x8] sm:$0xff]
    %v66 = vld [vmem:[%s1] sm:$0x3]
    %v67 = vsub.f32 1.0, %v66
    %v68 = vmul.f32 %v67, -1e+09
    %v69 = vpack.c.bf16 %v65, %v64
    %v70 = vld [vmem:[%s2] sm:$0xf]
    %v71 = vld [vmem:[%s2 + $0x4] sm:$0xf]
    %v72 = vld [vmem:[%s2 + $0x8] sm:$0xf]
    %v73 = vld [vmem:[%s2 + $0xc] sm:$0xf]
    %v74 = vld [vmem:[%s3] sm:$0x1]
    %v76 = vlaneseq
    %v77 = vshrl.u32 %v76, 7
    %v78 = vsub.s32 0, %v77
    %v79 = vrot.slane %v74, %v78
    %v85 = vunpack.c.l.b16 %v70
    %v86 = vunpack.c.l.b16 %v71
    %v87 = vunpack.c.l.b16 %v72
    %v88 = vunpack.c.l.b16 %v73
    %v89 = vpack.c.b16 %v86, %v85
    %v90 = vpack.c.b16 %v88, %v87
    %vm93 = vcmask 261120
    %v95 = vsel %vm93, %v69, 0
    %97 = vmatprep.subr.bf16.mxu0 0
    %98 = vmatpush1.bf16.msra.mxu0 %v89
    %99 = vmatprep.subr.bf16.mxu0 0
    %100 = vmatpush1.bf16.msra.mxu0 %v90
    %101 = vmatprep.subr.bf16.mxu0 0
    %102 = vmatpush1.bf16.msra.mxu0 0
    %103 = vmatprep.subr.bf16.mxu0 0
    %104 = vmatpush1.bf16.msra.mxu0 0
    %105 = vmatprep.subr.bf16.mxu0 0
    %106 = vmatpush1.bf16.msra.mxu0 0
    %107 = vmatprep.subr.bf16.mxu0 0
    %108 = vmatpush1.bf16.msra.mxu0 0
    %109 = vmatprep.subr.bf16.mxu0 0
    %110 = vmatpush1.bf16.msra.mxu0 0
    %111 = vmatprep.subr.bf16.mxu0 0
    %112 = vmatpush1.bf16.msra.mxu0 0
    %113 = vmatprep.subr.bf16.mxu0 0
    %114 = vmatpush1.bf16.msra.mxu0 0
    %115 = vmatprep.subr.bf16.mxu0 0
    %116 = vmatpush1.bf16.msra.mxu0 0
    %117 = vmatprep.subr.bf16.mxu0 0
    %118 = vmatpush1.bf16.msra.mxu0 0
    %119 = vmatprep.subr.bf16.mxu0 0
    %120 = vmatpush1.bf16.msra.mxu0 0
    %121 = vmatprep.subr.bf16.mxu0 0
    %122 = vmatpush1.bf16.msra.mxu0 0
    %123 = vmatprep.subr.bf16.mxu0 0
    %124 = vmatpush1.bf16.msra.mxu0 0
    %125 = vmatprep.subr.bf16.mxu0 0
    %126 = vmatpush1.bf16.msra.mxu0 0
    %127 = vmatprep.subr.bf16.mxu0 0
    %128 = vmatpush1.bf16.msra.mxu0 0
    %129 = vmatprep.mubr.bf16.mxu0 0
    %130 = vmatmul.mubr.bf16.gmra.mrb[0].mxu0 %v95
    %v131 = vpop.f32.mrb[0].mxu0
    %v132 = vadd.f32 %v79, %v131
    %v133 = vpop.f32.mrb[0].mxu0
    %v134 = vpop.f32.mrb[0].mxu0
    %v135 = vadd.f32 %v79, %v134
    %v136 = vpop.f32.mrb[0].mxu0
    %137 = vdwg.mxu0
    %v138 = vpack.c.bf16 %v135, %v132
    %140 = vrot.lane.b32.xlu0 %v138, 96
    %v141 = vpop.permute.xlu0 %140
    %vm142 = vcmask 64512
    %v144 = vsel %vm142, %v138, 0
    %v147 = vsel %vm142, %v141, 0
    %149 = vmatprep.subr.bf16.mxu0 0
    %150 = vmatpush1.bf16.xpose.msra.mxu0 %v147
    %151 = vmatprep.subr.bf16.mxu0 0
    %152 = vmatpush1.bf16.xpose.msra.mxu0 0
    %153 = vmatprep.subr.bf16.mxu0 0
    %154 = vmatpush1.bf16.xpose.msra.mxu0 0
    %155 = vmatprep.subr.bf16.mxu0 0
    %156 = vmatpush1.bf16.xpose.msra.mxu0 0
    %157 = vmatprep.subr.bf16.mxu0 0
    %158 = vmatpush1.bf16.xpose.msra.mxu0 0
    %159 = vmatprep.subr.bf16.mxu0 0
    %160 = vmatpush1.bf16.xpose.msra.mxu0 0
    %161 = vmatprep.subr.bf16.mxu0 0
    %162 = vmatpush1.bf16.xpose.msra.mxu0 0
    %163 = vmatprep.subr.bf16.mxu0 0
    %164 = vmatpush1.bf16.xpose.msra.mxu0 0
    %165 = vmatprep.subr.bf16.mxu0 0
    %166 = vmatpush1.bf16.xpose.msra.mxu0 0
    %167 = vmatprep.subr.bf16.mxu0 0
    %168 = vmatpush1.bf16.xpose.msra.mxu0 0
    %169 = vmatprep.subr.bf16.mxu0 0
    %170 = vmatpush1.bf16.xpose.msra.mxu0 0
    %171 = vmatprep.subr.bf16.mxu0 0
    %172 = vmatpush1.bf16.xpose.msra.mxu0 0
    %173 = vmatprep.subr.bf16.mxu0 0
    %174 = vmatpush1.bf16.xpose.msra.mxu0 0
    %175 = vmatprep.subr.bf16.mxu0 0
    %176 = vmatpush1.bf16.xpose.msra.mxu0 0
    %177 = vmatprep.subr.bf16.mxu0 0
    %178 = vmatpush1.bf16.xpose.msra.mxu0 0
    %179 = vmatprep.subr.bf16.mxu0 0
    %180 = vmatpush1.bf16.xpose.msra.mxu0 0
    %181 = vmatprep.mubr.bf16.mxu0 0
    %182 = vmatmul.mubr.bf16.gmra.mrb[0].mxu0 %v144
    %v183 = vpop.f32.mrb[0].mxu0
    %v184 = vadd.f32 0.0, %v183
    %v185 = vpop.f32.mrb[0].mxu0
    %v186 = vpop.f32.mrb[0].mxu0
    %v187 = vpop.f32.mrb[0].mxu0
    %188 = vdwg.mxu0
    %v189 = vmul.f32 %v184, 0.35355338
    %v190 = vlaneseq
    %v191 = vshrl.u32 %v190, 7
    %v192 = vsub.s32 0, %v191
    %v193 = vrot.slane %v68, %v192
    %v194 = vadd.f32 %v189, %v193
    %v195 = vsel %vm142, %v194, -inf
    %196 = vmax.xlane.f32.xlu0 %v195
    %v197 = vpop.xlane.xlu0 %196
    %v198 = vsub.f32 %v194, %v197
    %v199 = vmul.f32 %v198, 1.442695
    %v200 = vpow.pop %v199
    %v201 = vsel %vm142, %v200, 0.0
    %202 = vadd.xlane.f32.xlu0 %v201
    %v203 = vpop.xlane.xlu0 %202
    %v204 = vrcp.pop %v203
    %v205 = vmul.f32 %v200, %v204
    %v206 = vpack.c.bf16 %v205, %v205
    %207 = vrot.lane.b32.xlu0 %v138, 64
    %v208 = vpop.permute.xlu0 %207
    %v210 = vsel %vm142, %v206, 0
    %vm212 = vcmask 1043456
    %v214 = vsel %vm212, %v208, 0
    %216 = vmatprep.subr.bf16.mxu0 0
    %217 = vmatpush1.bf16.msra.mxu0 %v214
    %218 = vmatprep.subr.bf16.mxu0 0
    %219 = vmatpush1.bf16.msra.mxu0 0
    %220 = vmatprep.subr.bf16.mxu0 0
    %221 = vmatpush1.bf16.msra.mxu0 0
    %222 = vmatprep.subr.bf16.mxu0 0
    %223 = vmatpush1.bf16.msra.mxu0 0
    %224 = vmatprep.subr.bf16.mxu0 0
    %225 = vmatpush1.bf16.msra.mxu0 0
    %226 = vmatprep.subr.bf16.mxu0 0
    %227 = vmatpush1.bf16.msra.mxu0 0
    %228 = vmatprep.subr.bf16.mxu0 0
    %229 = vmatpush1.bf16.msra.mxu0 0
    %230 = vmatprep.subr.bf16.mxu0 0
    %231 = vmatpush1.bf16.msra.mxu0 0
    %232 = vmatprep.subr.bf16.mxu0 0
    %233 = vmatpush1.bf16.msra.mxu0 0
    %234 = vmatprep.subr.bf16.mxu0 0
    %235 = vmatpush1.bf16.msra.mxu0 0
    %236 = vmatprep.subr.bf16.mxu0 0
    %237 = vmatpush1.bf16.msra.mxu0 0
    %238 = vmatprep.subr.bf16.mxu0 0
    %239 = vmatpush1.bf16.msra.mxu0 0
    %240 = vmatprep.subr.bf16.mxu0 0
    %241 = vmatpush1.bf16.msra.mxu0 0
    %242 = vmatprep.subr.bf16.mxu0 0
    %243 = vmatpush1.bf16.msra.mxu0 0
    %244 = vmatprep.subr.bf16.mxu0 0
    %245 = vmatpush1.bf16.msra.mxu0 0
    %246 = vmatprep.subr.bf16.mxu0 0
    %247 = vmatpush1.bf16.msra.mxu0 0
    %248 = vmatprep.mubr.bf16.mxu0 0
    %249 = vmatmul.mubr.bf16.gmra.mrb[0].mxu0 %v210
    %v250 = vpop.f32.mrb[0].mxu0
    %v251 = vadd.f32 0.0, %v250
    %v252 = vpop.f32.mrb[0].mxu0
    %v253 = vpop.f32.mrb[0].mxu0
    %v254 = vpop.f32.mrb[0].mxu0
    %255 = vdwg.mxu0
    %256 = vst.msk [vmem:[#allocation2] sm:$0xff] %vm142, %v251
    %257 = vrot.lane.b32.xlu0 %v138, 120
    %v258 = vpop.permute.xlu0 %257
    %259 = vrot.lane.b32.xlu0 %v138, 88
    %v260 = vpop.permute.xlu0 %259
    %v262 = vsel %vm142, %v258, 0
    %v265 = vsel %vm142, %v260, 0
    %267 = vmatprep.subr.bf16.mxu0 0
    %268 = vmatpush1.bf16.xpose.msra.mxu0 %v265
    %269 = vmatprep.subr.bf16.mxu0 0
    %270 = vmatpush1.bf16.xpose.msra.mxu0 0
    %271 = vmatprep.subr.bf16.mxu0 0
    %272 = vmatpush1.bf16.xpose.msra.mxu0 0
    %273 = vmatprep.subr.bf16.mxu0 0
    %274 = vmatpush1.bf16.xpose.msra.mxu0 0
    %275 = vmatprep.subr.bf16.mxu0 0
    %276 = vmatpush1.bf16.xpose.msra.mxu0 0
    %277 = vmatprep.subr.bf16.mxu0 0
    %278 = vmatpush1.bf16.xpose.msra.mxu0 0
    %279 = vmatprep.subr.bf16.mxu0 0
    %280 = vmatpush1.bf16.xpose.msra.mxu0 0
    %281 = vmatprep.subr.bf16.mxu0 0
    %282 = vmatpush1.bf16.xpose.msra.mxu0 0
    %283 = vmatprep.subr.bf16.mxu0 0
    %284 = vmatpush1.bf16.xpose.msra.mxu0 0
    %285 = vmatprep.subr.bf16.mxu0 0
    %286 = vmatpush1.bf16.xpose.msra.mxu0 0
    %287 = vmatprep.subr.bf16.mxu0 0
    %288 = vmatpush1.bf16.xpose.msra.mxu0 0
    %289 = vmatprep.subr.bf16.mxu0 0
    %290 = vmatpush1.bf16.xpose.msra.mxu0 0
    %291 = vmatprep.subr.bf16.mxu0 0
    %292 = vmatpush1.bf16.xpose.msra.mxu0 0
    %293 = vmatprep.subr.bf16.mxu0 0
    %294 = vmatpush1.bf16.xpose.msra.mxu0 0
    %295 = vmatprep.subr.bf16.mxu0 0
    %296 = vmatpush1.bf16.xpose.msra.mxu0 0
    %297 = vmatprep.subr.bf16.mxu0 0
    %298 = vmatpush1.bf16.xpose.msra.mxu0 0
    %299 = vmatprep.mubr.bf16.mxu0 0
    %300 = vmatmul.mubr.bf16.gmra.mrb[0].mxu0 %v262
    %v301 = vpop.f32.mrb[0].mxu0
    %v302 = vadd.f32 0.0, %v301
    %v303 = vpop.f32.mrb[0].mxu0
    %v304 = vpop.f32.mrb[0].mxu0
    %v305 = vpop.f32.mrb[0].mxu0
    %306 = vdwg.mxu0
    %v307 = vmul.f32 %v302, 0.35355338
    %v308 = vadd.f32 %v307, %v193
    %v309 = vsel %vm142, %v308, -inf
    %310 = vmax.xlane.f32.xlu0 %v309
    %v311 = vpop.xlane.xlu0 %310
    %v312 = vsub.f32 %v308, %v311
    %v313 = vmul.f32 %v312, 1.442695
    %v314 = vpow.pop %v313
    %v315 = vsel %vm142, %v314, 0.0
    %316 = vadd.xlane.f32.xlu0 %v315
    %v317 = vpop.xlane.xlu0 %316
    %v318 = vrcp.pop %v317
    %v319 = vmul.f32 %v314, %v318
    %v320 = vpack.c.bf16 %v319, %v319
    %321 = vrot.lane.b32.xlu0 %v138, 56
    %v322 = vpop.permute.xlu0 %321
    %v324 = vsel %vm142, %v320, 0
    %v327 = vsel %vm212, %v322, 0
    %329 = vmatprep.subr.bf16.mxu0 0
    %330 = vmatpush1.bf16.msra.mxu0 %v327
    %331 = vmatprep.subr.bf16.mxu0 0
    %332 = vmatpush1.bf16.msra.mxu0 0
    %333 = vmatprep.subr.bf16.mxu0 0
    %334 = vmatpush1.bf16.msra.mxu0 0
    %335 = vmatprep.subr.bf16.mxu0 0
    %336 = vmatpush1.bf16.msra.mxu0 0
    %337 = vmatprep.subr.bf16.mxu0 0
    %338 = vmatpush1.bf16.msra.mxu0 0
    %339 = vmatprep.subr.bf16.mxu0 0
    %340 = vmatpush1.bf16.msra.mxu0 0
    %341 = vmatprep.subr.bf16.mxu0 0
    %342 = vmatpush1.bf16.msra.mxu0 0
    %343 = vmatprep.subr.bf16.mxu0 0
    %344 = vmatpush1.bf16.msra.mxu0 0
    %345 = vmatprep.subr.bf16.mxu0 0
    %346 = vmatpush1.bf16.msra.mxu0 0
    %347 = vmatprep.subr.bf16.mxu0 0
    %348 = vmatpush1.bf16.msra.mxu0 0
    %349 = vmatprep.subr.bf16.mxu0 0
    %350 = vmatpush1.bf16.msra.mxu0 0
    %351 = vmatprep.subr.bf16.mxu0 0
    %352 = vmatpush1.bf16.msra.mxu0 0
    %353 = vmatprep.subr.bf16.mxu0 0
    %354 = vmatpush1.bf16.msra.mxu0 0
    %355 = vmatprep.subr.bf16.mxu0 0
    %356 = vmatpush1.bf16.msra.mxu0 0
    %357 = vmatprep.subr.bf16.mxu0 0
    %358 = vmatpush1.bf16.msra.mxu0 0
    %359 = vmatprep.subr.bf16.mxu0 0
    %360 = vmatpush1.bf16.msra.mxu0 0
    %361 = vmatprep.mubr.bf16.mxu0 0
    %362 = vmatmul.mubr.bf16.gmra.mrb[0].mxu0 %v324
    %v363 = vpop.f32.mrb[0].mxu0
    %v364 = vadd.f32 0.0, %v363
    %v365 = vpop.f32.mrb[0].mxu0
    %v366 = vpop.f32.mrb[0].mxu0
    %v367 = vpop.f32.mrb[0].mxu0
    %368 = vdwg.mxu0
    %370 = vrot.lane.b32.xlu0 %v364, 8
    %v371 = vpop.permute.xlu0 %370
    %vm373 = vcmask 130112
    %374 = vst.msk [vmem:[#allocation2] sm:$0xff] %vm373, %v371
    %375 = vrot.lane.b32.xlu0 %v138, 112
    %v376 = vpop.permute.xlu0 %375
    %377 = vrot.lane.b32.xlu0 %v138, 80
    %v378 = vpop.permute.xlu0 %377
    %v380 = vsel %vm142, %v376, 0
    %v383 = vsel %vm142, %v378, 0
    %385 = vmatprep.subr.bf16.mxu0 0
    %386 = vmatpush1.bf16.xpose.msra.mxu0 %v383
    %387 = vmatprep.subr.bf16.mxu0 0
    %388 = vmatpush1.bf16.xpose.msra.mxu0 0
    %389 = vmatprep.subr.bf16.mxu0 0
    %390 = vmatpush1.bf16.xpose.msra.mxu0 0
    %391 = vmatprep.subr.bf16.mxu0 0
    %392 = vmatpush1.bf16.xpose.msra.mxu0 0
    %393 = vmatprep.subr.bf16.mxu0 0
    %394 = vmatpush1.bf16.xpose.msra.mxu0 0
    %395 = vmatprep.subr.bf16.mxu0 0
    %396 = vmatpush1.bf16.xpose.msra.mxu0 0
    %397 = vmatprep.subr.bf16.mxu0 0
    %398 = vmatpush1.bf16.xpose.msra.mxu0 0
    %399 = vmatprep.subr.bf16.mxu0 0
    %400 = vmatpush1.bf16.xpose.msra.mxu0 0
    %401 = vmatprep.subr.bf16.mxu0 0
    %402 = vmatpush1.bf16.xpose.msra.mxu0 0
    %403 = vmatprep.subr.bf16.mxu0 0
    %404 = vmatpush1.bf16.xpose.msra.mxu0 0
    %405 = vmatprep.subr.bf16.mxu0 0
    %406 = vmatpush1.bf16.xpose.msra.mxu0 0
    %407 = vmatprep.subr.bf16.mxu0 0
    %408 = vmatpush1.bf16.xpose.msra.mxu0 0
    %409 = vmatprep.subr.bf16.mxu0 0
    %410 = vmatpush1.bf16.xpose.msra.mxu0 0
    %411 = vmatprep.subr.bf16.mxu0 0
    %412 = vmatpush1.bf16.xpose.msra.mxu0 0
    %413 = vmatprep.subr.bf16.mxu0 0
    %414 = vmatpush1.bf16.xpose.msra.mxu0 0
    %415 = vmatprep.subr.bf16.mxu0 0
    %416 = vmatpush1.bf16.xpose.msra.mxu0 0
    %417 = vmatprep.mubr.bf16.mxu0 0
    %418 = vmatmul.mubr.bf16.gmra.mrb[0].mxu0 %v380
    %v419 = vpop.f32.mrb[0].mxu0
    %v420 = vadd.f32 0.0, %v419
    %v421 = vpop.f32.mrb[0].mxu0
    %v422 = vpop.f32.mrb[0].mxu0
    %v423 = vpop.f32.mrb[0].mxu0
    %424 = vdwg.mxu0
    %v425 = vmul.f32 %v420, 0.35355338
    %v426 = vadd.f32 %v425, %v193
    %v427 = vsel %vm142, %v426, -inf
    %428 = vmax.xlane.f32.xlu0 %v427
    %v429 = vpop.xlane.xlu0 %428
    %v430 = vsub.f32 %v426, %v429
    %v431 = vmul.f32 %v430, 1.442695
    %v432 = vpow.pop %v431
    %v433 = vsel %vm142, %v432, 0.0
    %434 = vadd.xlane.f32.xlu0 %v433
    %v435 = vpop.xlane.xlu0 %434
    %v436 = vrcp.pop %v435
    %v437 = vmul.f32 %v432, %v436
    %v438 = vpack.c.bf16 %v437, %v437
    %439 = vrot.lane.b32.xlu0 %v138, 48
    %v440 = vpop.permute.xlu0 %439
    %v442 = vsel %vm142, %v438, 0
    %v445 = vsel %vm212, %v440, 0
    %447 = vmatprep.subr.bf16.mxu0 0
    %448 = vmatpush1.bf16.msra.mxu0 %v445
    %449 = vmatprep.subr.bf16.mxu0 0
    %450 = vmatpush1.bf16.msra.mxu0 0
    %451 = vmatprep.subr.bf16.mxu0 0
    %452 = vmatpush1.bf16.msra.mxu0 0
    %453 = vmatprep.subr.bf16.mxu0 0
    %454 = vmatpush1.bf16.msra.mxu0 0
    %455 = vmatprep.subr.bf16.mxu0 0
    %456 = vmatpush1.bf16.msra.mxu0 0
    %457 = vmatprep.subr.bf16.mxu0 0
    %458 = vmatpush1.bf16.msra.mxu0 0
    %459 = vmatprep.subr.bf16.mxu0 0
    %460 = vmatpush1.bf16.msra.mxu0 0
    %461 = vmatprep.subr.bf16.mxu0 0
    %462 = vmatpush1.bf16.msra.mxu0 0
    %463 = vmatprep.subr.bf16.mxu0 0
    %464 = vmatpush1.bf16.msra.mxu0 0
    %465 = vmatprep.subr.bf16.mxu0 0
    %466 = vmatpush1.bf16.msra.mxu0 0
    %467 = vmatprep.subr.bf16.mxu0 0
    %468 = vmatpush1.bf16.msra.mxu0 0
    %469 = vmatprep.subr.bf16.mxu0 0
    %470 = vmatpush1.bf16.msra.mxu0 0
    %471 = vmatprep.subr.bf16.mxu0 0
    %472 = vmatpush1.bf16.msra.mxu0 0
    %473 = vmatprep.subr.bf16.mxu0 0
    %474 = vmatpush1.bf16.msra.mxu0 0
    %475 = vmatprep.subr.bf16.mxu0 0
    %476 = vmatpush1.bf16.msra.mxu0 0
    %477 = vmatprep.subr.bf16.mxu0 0
    %478 = vmatpush1.bf16.msra.mxu0 0
    %479 = vmatprep.mubr.bf16.mxu0 0
    %480 = vmatmul.mubr.bf16.gmra.mrb[0].mxu0 %v442
    %v481 = vpop.f32.mrb[0].mxu0
    %v482 = vadd.f32 0.0, %v481
    %v483 = vpop.f32.mrb[0].mxu0
    %v484 = vpop.f32.mrb[0].mxu0
    %v485 = vpop.f32.mrb[0].mxu0
    %486 = vdwg.mxu0
    %488 = vrot.lane.b32.xlu0 %v482, 16
    %v489 = vpop.permute.xlu0 %488
    %vm491 = vcmask 195712
    %492 = vst.msk [vmem:[#allocation2] sm:$0xff] %vm491, %v489
    %493 = vrot.lane.b32.xlu0 %v138, 104
    %v494 = vpop.permute.xlu0 %493
    %495 = vrot.lane.b32.xlu0 %v138, 72
    %v496 = vpop.permute.xlu0 %495
    %v498 = vsel %vm142, %v494, 0
    %v501 = vsel %vm142, %v496, 0
    %503 = vmatprep.subr.bf16.mxu0 0
    %504 = vmatpush1.bf16.xpose.msra.mxu0 %v501
    %505 = vmatprep.subr.bf16.mxu0 0
    %506 = vmatpush1.bf16.xpose.msra.mxu0 0
    %507 = vmatprep.subr.bf16.mxu0 0
    %508 = vmatpush1.bf16.xpose.msra.mxu0 0
    %509 = vmatprep.subr.bf16.mxu0 0
    %510 = vmatpush1.bf16.xpose.msra.mxu0 0
    %511 = vmatprep.subr.bf16.mxu0 0
    %512 = vmatpush1.bf16.xpose.msra.mxu0 0
    %513 = vmatprep.subr.bf16.mxu0 0
    %514 = vmatpush1.bf16.xpose.msra.mxu0 0
    %515 = vmatprep.subr.bf16.mxu0 0
    %516 = vmatpush1.bf16.xpose.msra.mxu0 0
    %517 = vmatprep.subr.bf16.mxu0 0
    %518 = vmatpush1.bf16.xpose.msra.mxu0 0
    %519 = vmatprep.subr.bf16.mxu0 0
    %520 = vmatpush1.bf16.xpose.msra.mxu0 0
    %521 = vmatprep.subr.bf16.mxu0 0
    %522 = vmatpush1.bf16.xpose.msra.mxu0 0
    %523 = vmatprep.subr.bf16.mxu0 0
    %524 = vmatpush1.bf16.xpose.msra.mxu0 0
    %525 = vmatprep.subr.bf16.mxu0 0
    %526 = vmatpush1.bf16.xpose.msra.mxu0 0
    %527 = vmatprep.subr.bf16.mxu0 0
    %528 = vmatpush1.bf16.xpose.msra.mxu0 0
    %529 = vmatprep.subr.bf16.mxu0 0
    %530 = vmatpush1.bf16.xpose.msra.mxu0 0
    %531 = vmatprep.subr.bf16.mxu0 0
    %532 = vmatpush1.bf16.xpose.msra.mxu0 0
    %533 = vmatprep.subr.bf16.mxu0 0
    %534 = vmatpush1.bf16.xpose.msra.mxu0 0
    %535 = vmatprep.mubr.bf16.mxu0 0
    %536 = vmatmul.mubr.bf16.gmra.mrb[0].mxu0 %v498
    %v537 = vpop.f32.mrb[0].mxu0
    %v538 = vadd.f32 0.0, %v537
    %v539 = vpop.f32.mrb[0].mxu0
    %v540 = vpop.f32.mrb[0].mxu0
    %v541 = vpop.f32.mrb[0].mxu0
    %542 = vdwg.mxu0
    %v543 = vmul.f32 %v538, 0.35355338
    %v544 = vadd.f32 %v543, %v193
    %v545 = vsel %vm142, %v544, -inf
    %546 = vmax.xlane.f32.xlu0 %v545
    %v547 = vpop.xlane.xlu0 %546
    %v548 = vsub.f32 %v544, %v547
    %v549 = vmul.f32 %v548, 1.442695
    %v550 = vpow.pop %v549
    %v551 = vsel %vm142, %v550, 0.0
    %552 = vadd.xlane.f32.xlu0 %v551
    %v553 = vpop.xlane.xlu0 %552
    %v554 = vrcp.pop %v553
    %v555 = vmul.f32 %v550, %v554
    %v556 = vpack.c.bf16 %v555, %v555
    %557 = vrot.lane.b32.xlu0 %v138, 40
    %v558 = vpop.permute.xlu0 %557
    %v560 = vsel %vm142, %v556, 0
    %v563 = vsel %vm212, %v558, 0
    %565 = vmatprep.subr.bf16.mxu0 0
    %566 = vmatpush1.bf16.msra.mxu0 %v563
    %567 = vmatprep.subr.bf16.mxu0 0
    %568 = vmatpush1.bf16.msra.mxu0 0
    %569 = vmatprep.subr.bf16.mxu0 0
    %570 = vmatpush1.bf16.msra.mxu0 0
    %571 = vmatprep.subr.bf16.mxu0 0
    %572 = vmatpush1.bf16.msra.mxu0 0
    %573 = vmatprep.subr.bf16.mxu0 0
    %574 = vmatpush1.bf16.msra.mxu0 0
    %575 = vmatprep.subr.bf16.mxu0 0
    %576 = vmatpush1.bf16.msra.mxu0 0
    %577 = vmatprep.subr.bf16.mxu0 0
    %578 = vmatpush1.bf16.msra.mxu0 0
    %579 = vmatprep.subr.bf16.mxu0 0
    %580 = vmatpush1.bf16.msra.mxu0 0
    %581 = vmatprep.subr.bf16.mxu0 0
    %582 = vmatpush1.bf16.msra.mxu0 0
    %583 = vmatprep.subr.bf16.mxu0 0
    %584 = vmatpush1.bf16.msra.mxu0 0
    %585 = vmatprep.subr.bf16.mxu0 0
    %586 = vmatpush1.bf16.msra.mxu0 0
    %587 = vmatprep.subr.bf16.mxu0 0
    %588 = vmatpush1.bf16.msra.mxu0 0
    %589 = vmatprep.subr.bf16.mxu0 0
    %590 = vmatpush1.bf16.msra.mxu0 0
    %591 = vmatprep.subr.bf16.mxu0 0
    %592 = vmatpush1.bf16.msra.mxu0 0
    %593 = vmatprep.subr.bf16.mxu0 0
    %594 = vmatpush1.bf16.msra.mxu0 0
    %595 = vmatprep.subr.bf16.mxu0 0
    %596 = vmatpush1.bf16.msra.mxu0 0
    %597 = vmatprep.mubr.bf16.mxu0 0
    %598 = vmatmul.mubr.bf16.gmra.mrb[0].mxu0 %v560
    %v599 = vpop.f32.mrb[0].mxu0
    %v600 = vadd.f32 0.0, %v599
    %v601 = vpop.f32.mrb[0].mxu0
    %v602 = vpop.f32.mrb[0].mxu0
    %v603 = vpop.f32.mrb[0].mxu0
    %604 = vdwg.mxu0
    %606 = vrot.lane.b32.xlu0 %v600, 24
    %v607 = vpop.permute.xlu0 %606
    %vm609 = vcmask 261312
    %610 = vst.msk [vmem:[#allocation2] sm:$0xff] %vm609, %v607
    %v611 = vrot.slane %v138, 4
    %612 = vrot.lane.b32.xlu0 %v611, 96
    %v613 = vpop.permute.xlu0 %612
    %v615 = vsel %vm142, %v611, 0
    %v618 = vsel %vm142, %v613, 0
    %620 = vmatprep.subr.bf16.mxu0 0
    %621 = vmatpush1.bf16.xpose.msra.mxu0 %v618
    %622 = vmatprep.subr.bf16.mxu0 0
    %623 = vmatpush1.bf16.xpose.msra.mxu0 0
    %624 = vmatprep.subr.bf16.mxu0 0
    %625 = vmatpush1.bf16.xpose.msra.mxu0 0
    %626 = vmatprep.subr.bf16.mxu0 0
    %627 = vmatpush1.bf16.xpose.msra.mxu0 0
    %628 = vmatprep.subr.bf16.mxu0 0
    %629 = vmatpush1.bf16.xpose.msra.mxu0 0
    %630 = vmatprep.subr.bf16.mxu0 0
    %631 = vmatpush1.bf16.xpose.msra.mxu0 0
    %632 = vmatprep.subr.bf16.mxu0 0
    %633 = vmatpush1.bf16.xpose.msra.mxu0 0
    %634 = vmatprep.subr.bf16.mxu0 0
    %635 = vmatpush1.bf16.xpose.msra.mxu0 0
    %636 = vmatprep.subr.bf16.mxu0 0
    %637 = vmatpush1.bf16.xpose.msra.mxu0 0
    %638 = vmatprep.subr.bf16.mxu0 0
    %639 = vmatpush1.bf16.xpose.msra.mxu0 0
    %640 = vmatprep.subr.bf16.mxu0 0
    %641 = vmatpush1.bf16.xpose.msra.mxu0 0
    %642 = vmatprep.subr.bf16.mxu0 0
    %643 = vmatpush1.bf16.xpose.msra.mxu0 0
    %644 = vmatprep.subr.bf16.mxu0 0
    %645 = vmatpush1.bf16.xpose.msra.mxu0 0
    %646 = vmatprep.subr.bf16.mxu0 0
    %647 = vmatpush1.bf16.xpose.msra.mxu0 0
    %648 = vmatprep.subr.bf16.mxu0 0
    %649 = vmatpush1.bf16.xpose.msra.mxu0 0
    %650 = vmatprep.subr.bf16.mxu0 0
    %651 = vmatpush1.bf16.xpose.msra.mxu0 0
    %652 = vmatprep.mubr.bf16.mxu0 0
    %653 = vmatmul.mubr.bf16.gmra.mrb[0].mxu0 %v615
    %v654 = vpop.f32.mrb[0].mxu0
    %v655 = vadd.f32 0.0, %v654
    %v656 = vpop.f32.mrb[0].mxu0
    %v657 = vpop.f32.mrb[0].mxu0
    %v658 = vpop.f32.mrb[0].mxu0
    %659 = vdwg.mxu0
    %v660 = vmul.f32 %v655, 0.35355338
    %v661 = vlaneseq
    %v662 = vshrl.u32 %v661, 7
    %v663 = vsub.s32 1, %v662
    %v664 = vrot.slane %v68, %v663
    %v665 = vadd.f32 %v660, %v664
    %v666 = vsel %vm142, %v665, -inf
    %667 = vmax.xlane.f32.xlu0 %v666
    %v668 = vpop.xlane.xlu0 %667
    %v669 = vsub.f32 %v665, %v668
    %v670 = vmul.f32 %v669, 1.442695
    %v671 = vpow.pop %v670
    %v672 = vsel %vm142, %v671, 0.0
    %673 = vadd.xlane.f32.xlu0 %v672
    %v674 = vpop.xlane.xlu0 %673
    %v675 = vrcp.pop %v674
    %v676 = vmul.f32 %v671, %v675
    %v677 = vpack.c.bf16 %v676, %v676
    %678 = vrot.lane.b32.xlu0 %v611, 64
    %v679 = vpop.permute.xlu0 %678
    %v681 = vsel %vm142, %v677, 0
    %v684 = vsel %vm212, %v679, 0
    %686 = vmatprep.subr.bf16.mxu0 0
    %687 = vmatpush1.bf16.msra.mxu0 %v684
    %688 = vmatprep.subr.bf16.mxu0 0
    %689 = vmatpush1.bf16.msra.mxu0 0
    %690 = vmatprep.subr.bf16.mxu0 0
    %691 = vmatpush1.bf16.msra.mxu0 0
    %692 = vmatprep.subr.bf16.mxu0 0
    %693 = vmatpush1.bf16.msra.mxu0 0
    %694 = vmatprep.subr.bf16.mxu0 0
    %695 = vmatpush1.bf16.msra.mxu0 0
    %696 = vmatprep.subr.bf16.mxu0 0
    %697 = vmatpush1.bf16.msra.mxu0 0
    %698 = vmatprep.subr.bf16.mxu0 0
    %699 = vmatpush1.bf16.msra.mxu0 0
    %700 = vmatprep.subr.bf16.mxu0 0
    %701 = vmatpush1.bf16.msra.mxu0 0
    %702 = vmatprep.subr.bf16.mxu0 0
    %703 = vmatpush1.bf16.msra.mxu0 0
    %704 = vmatprep.subr.bf16.mxu0 0
    %705 = vmatpush1.bf16.msra.mxu0 0
    %706 = vmatprep.subr.bf16.mxu0 0
    %707 = vmatpush1.bf16.msra.mxu0 0
    %708 = vmatprep.subr.bf16.mxu0 0
    %709 = vmatpush1.bf16.msra.mxu0 0
    %710 = vmatprep.subr.bf16.mxu0 0
    %711 = vmatpush1.bf16.msra.mxu0 0
    %712 = vmatprep.subr.bf16.mxu0 0
    %713 = vmatpush1.bf16.msra.mxu0 0
    %714 = vmatprep.subr.bf16.mxu0 0
    %715 = vmatpush1.bf16.msra.mxu0 0
    %716 = vmatprep.subr.bf16.mxu0 0
    %717 = vmatpush1.bf16.msra.mxu0 0
    %718 = vmatprep.mubr.bf16.mxu0 0
    %719 = vmatmul.mubr.bf16.gmra.mrb[0].mxu0 %v681
    %v720 = vpop.f32.mrb[0].mxu0
    %v721 = vadd.f32 0.0, %v720
    %v722 = vpop.f32.mrb[0].mxu0
    %v723 = vpop.f32.mrb[0].mxu0
    %v724 = vpop.f32.mrb[0].mxu0
    %725 = vdwg.mxu0
    %726 = vst.msk [vmem:[#allocation2 + $0x8] sm:$0xff] %vm142, %v721
    %727 = vrot.lane.b32.xlu0 %v611, 120
    %v728 = vpop.permute.xlu0 %727
    %729 = vrot.lane.b32.xlu0 %v611, 88
    %v730 = vpop.permute.xlu0 %729
    %v732 = vsel %vm142, %v728, 0
    %v735 = vsel %vm142, %v730, 0
    %737 = vmatprep.subr.bf16.mxu0 0
    %738 = vmatpush1.bf16.xpose.msra.mxu0 %v735
    %739 = vmatprep.subr.bf16.mxu0 0
    %740 = vmatpush1.bf16.xpose.msra.mxu0 0
    %741 = vmatprep.subr.bf16.mxu0 0
    %742 = vmatpush1.bf16.xpose.msra.mxu0 0
    %743 = vmatprep.subr.bf16.mxu0 0
    %744 = vmatpush1.bf16.xpose.msra.mxu0 0
    %745 = vmatprep.subr.bf16.mxu0 0
    %746 = vmatpush1.bf16.xpose.msra.mxu0 0
    %747 = vmatprep.subr.bf16.mxu0 0
    %748 = vmatpush1.bf16.xpose.msra.mxu0 0
    %749 = vmatprep.subr.bf16.mxu0 0
    %750 = vmatpush1.bf16.xpose.msra.mxu0 0
    %751 = vmatprep.subr.bf16.mxu0 0
    %752 = vmatpush1.bf16.xpose.msra.mxu0 0
    %753 = vmatprep.subr.bf16.mxu0 0
    %754 = vmatpush1.bf16.xpose.msra.mxu0 0
    %755 = vmatprep.subr.bf16.mxu0 0
    %756 = vmatpush1.bf16.xpose.msra.mxu0 0
    %757 = vmatprep.subr.bf16.mxu0 0
    %758 = vmatpush1.bf16.xpose.msra.mxu0 0
    %759 = vmatprep.subr.bf16.mxu0 0
    %760 = vmatpush1.bf16.xpose.msra.mxu0 0
    %761 = vmatprep.subr.bf16.mxu0 0
    %762 = vmatpush1.bf16.xpose.msra.mxu0 0
    %763 = vmatprep.subr.bf16.mxu0 0
    %764 = vmatpush1.bf16.xpose.msra.mxu0 0
    %765 = vmatprep.subr.bf16.mxu0 0
    %766 = vmatpush1.bf16.xpose.msra.mxu0 0
    %767 = vmatprep.subr.bf16.mxu0 0
    %768 = vmatpush1.bf16.xpose.msra.mxu0 0
    %769 = vmatprep.mubr.bf16.mxu0 0
    %770 = vmatmul.mubr.bf16.gmra.mrb[0].mxu0 %v732
    %v771 = vpop.f32.mrb[0].mxu0
    %v772 = vadd.f32 0.0, %v771
    %v773 = vpop.f32.mrb[0].mxu0
    %v774 = vpop.f32.mrb[0].mxu0
    %v775 = vpop.f32.mrb[0].mxu0
    %776 = vdwg.mxu0
    %v777 = vmul.f32 %v772, 0.35355338
    %v778 = vadd.f32 %v777, %v664
    %v779 = vsel %vm142, %v778, -inf
    %780 = vmax.xlane.f32.xlu0 %v779
    %v781 = vpop.xlane.xlu0 %780
    %v782 = vsub.f32 %v778, %v781
    %v783 = vmul.f32 %v782, 1.442695
    %v784 = vpow.pop %v783
    %v785 = vsel %vm142, %v784, 0.0
    %786 = vadd.xlane.f32.xlu0 %v785
    %v787 = vpop.xlane.xlu0 %786
    %v788 = vrcp.pop %v787
    %v789 = vmul.f32 %v784, %v788
    %v790 = vpack.c.bf16 %v789, %v789
    %791 = vrot.lane.b32.xlu0 %v611, 56
    %v792 = vpop.permute.xlu0 %791
    %v794 = vsel %vm142, %v790, 0
    %v797 = vsel %vm212, %v792, 0
    %799 = vmatprep.subr.bf16.mxu0 0
    %800 = vmatpush1.bf16.msra.mxu0 %v797
    %801 = vmatprep.subr.bf16.mxu0 0
    %802 = vmatpush1.bf16.msra.mxu0 0
    %803 = vmatprep.subr.bf16.mxu0 0
    %804 = vmatpush1.bf16.msra.mxu0 0
    %805 = vmatprep.subr.bf16.mxu0 0
    %806 = vmatpush1.bf16.msra.mxu0 0
    %807 = vmatprep.subr.bf16.mxu0 0
    %808 = vmatpush1.bf16.msra.mxu0 0
    %809 = vmatprep.subr.bf16.mxu0 0
    %810 = vmatpush1.bf16.msra.mxu0 0
    %811 = vmatprep.subr.bf16.mxu0 0
    %812 = vmatpush1.bf16.msra.mxu0 0
    %813 = vmatprep.subr.bf16.mxu0 0
    %814 = vmatpush1.bf16.msra.mxu0 0
    %815 = vmatprep.subr.bf16.mxu0 0
    %816 = vmatpush1.bf16.msra.mxu0 0
    %817 = vmatprep.subr.bf16.mxu0 0
    %818 = vmatpush1.bf16.msra.mxu0 0
    %819 = vmatprep.subr.bf16.mxu0 0
    %820 = vmatpush1.bf16.msra.mxu0 0
    %821 = vmatprep.subr.bf16.mxu0 0
    %822 = vmatpush1.bf16.msra.mxu0 0
    %823 = vmatprep.subr.bf16.mxu0 0
    %824 = vmatpush1.bf16.msra.mxu0 0
    %825 = vmatprep.subr.bf16.mxu0 0
    %826 = vmatpush1.bf16.msra.mxu0 0
    %827 = vmatprep.subr.bf16.mxu0 0
    %828 = vmatpush1.bf16.msra.mxu0 0
    %829 = vmatprep.subr.bf16.mxu0 0
    %830 = vmatpush1.bf16.msra.mxu0 0
    %831 = vmatprep.mubr.bf16.mxu0 0
    %832 = vmatmul.mubr.bf16.gmra.mrb[0].mxu0 %v794
    %v833 = vpop.f32.mrb[0].mxu0
    %v834 = vadd.f32 0.0, %v833
    %v835 = vpop.f32.mrb[0].mxu0
    %v836 = vpop.f32.mrb[0].mxu0
    %v837 = vpop.f32.mrb[0].mxu0
    %838 = vdwg.mxu0
    %840 = vrot.lane.b32.xlu0 %v834, 8
    %v841 = vpop.permute.xlu0 %840
    %843 = vst.msk [vmem:[#allocation2 + $0x8] sm:$0xff] %vm373, %v841
    %844 = vrot.lane.b32.xlu0 %v611, 112
    %v845 = vpop.permute.xlu0 %844
    %846 = vrot.lane.b32.xlu0 %v611, 80
    %v847 = vpop.permute.xlu0 %846
    %v849 = vsel %vm142, %v845, 0
    %v852 = vsel %vm142, %v847, 0
    %854 = vmatprep.subr.bf16.mxu0 0
    %855 = vmatpush1.bf16.xpose.msra.mxu0 %v852
    %856 = vmatprep.subr.bf16.mxu0 0
    %857 = vmatpush1.bf16.xpose.msra.mxu0 0
    %858 = vmatprep.subr.bf16.mxu0 0
    %859 = vmatpush1.bf16.xpose.msra.mxu0 0
    %860 = vmatprep.subr.bf16.mxu0 0
    %861 = vmatpush1.bf16.xpose.msra.mxu0 0
    %862 = vmatprep.subr.bf16.mxu0 0
    %863 = vmatpush1.bf16.xpose.msra.mxu0 0
    %864 = vmatprep.subr.bf16.mxu0 0
    %865 = vmatpush1.bf16.xpose.msra.mxu0 0
    %866 = vmatprep.subr.bf16.mxu0 0
    %867 = vmatpush1.bf16.xpose.msra.mxu0 0
    %868 = vmatprep.subr.bf16.mxu0 0
    %869 = vmatpush1.bf16.xpose.msra.mxu0 0
    %870 = vmatprep.subr.bf16.mxu0 0
    %871 = vmatpush1.bf16.xpose.msra.mxu0 0
    %872 = vmatprep.subr.bf16.mxu0 0
    %873 = vmatpush1.bf16.xpose.msra.mxu0 0
    %874 = vmatprep.subr.bf16.mxu0 0
    %875 = vmatpush1.bf16.xpose.msra.mxu0 0
    %876 = vmatprep.subr.bf16.mxu0 0
    %877 = vmatpush1.bf16.xpose.msra.mxu0 0
    %878 = vmatprep.subr.bf16.mxu0 0
    %879 = vmatpush1.bf16.xpose.msra.mxu0 0
    %880 = vmatprep.subr.bf16.mxu0 0
    %881 = vmatpush1.bf16.xpose.msra.mxu0 0
    %882 = vmatprep.subr.bf16.mxu0 0
    %883 = vmatpush1.bf16.xpose.msra.mxu0 0
    %884 = vmatprep.subr.bf16.mxu0 0
    %885 = vmatpush1.bf16.xpose.msra.mxu0 0
    %886 = vmatprep.mubr.bf16.mxu0 0
    %887 = vmatmul.mubr.bf16.gmra.mrb[0].mxu0 %v849
    %v888 = vpop.f32.mrb[0].mxu0
    %v889 = vadd.f32 0.0, %v888
    %v890 = vpop.f32.mrb[0].mxu0
    %v891 = vpop.f32.mrb[0].mxu0
    %v892 = vpop.f32.mrb[0].mxu0
    %893 = vdwg.mxu0
    %v894 = vmul.f32 %v889, 0.35355338
    %v895 = vadd.f32 %v894, %v664
    %v896 = vsel %vm142, %v895, -inf
    %897 = vmax.xlane.f32.xlu0 %v896
    %v898 = vpop.xlane.xlu0 %897
    %v899 = vsub.f32 %v895, %v898
    %v900 = vmul.f32 %v899, 1.442695
    %v901 = vpow.pop %v900
    %v902 = vsel %vm142, %v901, 0.0
    %903 = vadd.xlane.f32.xlu0 %v902
    %v904 = vpop.xlane.xlu0 %903
    %v905 = vrcp.pop %v904
    %v906 = vmul.f32 %v901, %v905
    %v907 = vpack.c.bf16 %v906, %v906
    %908 = vrot.lane.b32.xlu0 %v611, 48
    %v909 = vpop.permute.xlu0 %908
    %v911 = vsel %vm142, %v907, 0
    %v914 = vsel %vm212, %v909, 0
    %916 = vmatprep.subr.bf16.mxu0 0
    %917 = vmatpush1.bf16.msra.mxu0 %v914
    %918 = vmatprep.subr.bf16.mxu0 0
    %919 = vmatpush1.bf16.msra.mxu0 0
    %920 = vmatprep.subr.bf16.mxu0 0
    %921 = vmatpush1.bf16.msra.mxu0 0
    %922 = vmatprep.subr.bf16.mxu0 0
    %923 = vmatpush1.bf16.msra.mxu0 0
    %924 = vmatprep.subr.bf16.mxu0 0
    %925 = vmatpush1.bf16.msra.mxu0 0
    %926 = vmatprep.subr.bf16.mxu0 0
    %927 = vmatpush1.bf16.msra.mxu0 0
    %928 = vmatprep.subr.bf16.mxu0 0
    %929 = vmatpush1.bf16.msra.mxu0 0
    %930 = vmatprep.subr.bf16.mxu0 0
    %931 = vmatpush1.bf16.msra.mxu0 0
    %932 = vmatprep.subr.bf16.mxu0 0
    %933 = vmatpush1.bf16.msra.mxu0 0
    %934 = vmatprep.subr.bf16.mxu0 0
    %935 = vmatpush1.bf16.msra.mxu0 0
    %936 = vmatprep.subr.bf16.mxu0 0
    %937 = vmatpush1.bf16.msra.mxu0 0
    %938 = vmatprep.subr.bf16.mxu0 0
    %939 = vmatpush1.bf16.msra.mxu0 0
    %940 = vmatprep.subr.bf16.mxu0 0
    %941 = vmatpush1.bf16.msra.mxu0 0
    %942 = vmatprep.subr.bf16.mxu0 0
    %943 = vmatpush1.bf16.msra.mxu0 0
    %944 = vmatprep.subr.bf16.mxu0 0
    %945 = vmatpush1.bf16.msra.mxu0 0
    %946 = vmatprep.subr.bf16.mxu0 0
    %947 = vmatpush1.bf16.msra.mxu0 0
    %948 = vmatprep.mubr.bf16.mxu0 0
    %949 = vmatmul.mubr.bf16.gmra.mrb[0].mxu0 %v911
    %v950 = vpop.f32.mrb[0].mxu0
    %v951 = vadd.f32 0.0, %v950
    %v952 = vpop.f32.mrb[0].mxu0
    %v953 = vpop.f32.mrb[0].mxu0
    %v954 = vpop.f32.mrb[0].mxu0
    %955 = vdwg.mxu0
    %957 = vrot.lane.b32.xlu0 %v951, 16
    %v958 = vpop.permute.xlu0 %957
    %960 = vst.msk [vmem:[#allocation2 + $0x8] sm:$0xff] %vm491, %v958
    %961 = vrot.lane.b32.xlu0 %v611, 104
    %v962 = vpop.permute.xlu0 %961
    %963 = vrot.lane.b32.xlu0 %v611, 72
    %v964 = vpop.permute.xlu0 %963
    %v966 = vsel %vm142, %v962, 0
    %v969 = vsel %vm142, %v964, 0
    %971 = vmatprep.subr.bf16.mxu0 0
    %972 = vmatpush1.bf16.xpose.msra.mxu0 %v969
    %973 = vmatprep.subr.bf16.mxu0 0
    %974 = vmatpush1.bf16.xpose.msra.mxu0 0
    %975 = vmatprep.subr.bf16.mxu0 0
    %976 = vmatpush1.bf16.xpose.msra.mxu0 0
    %977 = vmatprep.subr.bf16.mxu0 0
    %978 = vmatpush1.bf16.xpose.msra.mxu0 0
    %979 = vmatprep.subr.bf16.mxu0 0
    %980 = vmatpush1.bf16.xpose.msra.mxu0 0
    %981 = vmatprep.subr.bf16.mxu0 0
    %982 = vmatpush1.bf16.xpose.msra.mxu0 0
    %983 = vmatprep.subr.bf16.mxu0 0
    %984 = vmatpush1.bf16.xpose.msra.mxu0 0
    %985 = vmatprep.subr.bf16.mxu0 0
    %986 = vmatpush1.bf16.xpose.msra.mxu0 0
    %987 = vmatprep.subr.bf16.mxu0 0
    %988 = vmatpush1.bf16.xpose.msra.mxu0 0
    %989 = vmatprep.subr.bf16.mxu0 0
    %990 = vmatpush1.bf16.xpose.msra.mxu0 0
    %991 = vmatprep.subr.bf16.mxu0 0
    %992 = vmatpush1.bf16.xpose.msra.mxu0 0
    %993 = vmatprep.subr.bf16.mxu0 0
    %994 = vmatpush1.bf16.xpose.msra.mxu0 0
    %995 = vmatprep.subr.bf16.mxu0 0
    %996 = vmatpush1.bf16.xpose.msra.mxu0 0
    %997 = vmatprep.subr.bf16.mxu0 0
    %998 = vmatpush1.bf16.xpose.msra.mxu0 0
    %999 = vmatprep.subr.bf16.mxu0 0
    %1000 = vmatpush1.bf16.xpose.msra.mxu0 0
    %1001 = vmatprep.subr.bf16.mxu0 0
    %1002 = vmatpush1.bf16.xpose.msra.mxu0 0
    %1003 = vmatprep.mubr.bf16.mxu0 0
    %1004 = vmatmul.mubr.bf16.gmra.mrb[0].mxu0 %v966
    %v1005 = vpop.f32.mrb[0].mxu0
    %v1006 = vadd.f32 0.0, %v1005
    %v1007 = vpop.f32.mrb[0].mxu0
    %v1008 = vpop.f32.mrb[0].mxu0
    %v1009 = vpop.f32.mrb[0].mxu0
    %1010 = vdwg.mxu0
    %v1011 = vmul.f32 %v1006, 0.35355338
    %v1012 = vadd.f32 %v1011, %v664
    %v1013 = vsel %vm142, %v1012, -inf
    %1014 = vmax.xlane.f32.xlu0 %v1013
    %v1015 = vpop.xlane.xlu0 %1014
    %v1016 = vsub.f32 %v1012, %v1015
    %v1017 = vmul.f32 %v1016, 1.442695
    %v1018 = vpow.pop %v1017
    %v1019 = vsel %vm142, %v1018, 0.0
    %1020 = vadd.xlane.f32.xlu0 %v1019
    %v1021 = vpop.xlane.xlu0 %1020
    %v1022 = vrcp.pop %v1021
    %v1023 = vmul.f32 %v1018, %v1022
    %v1024 = vpack.c.bf16 %v1023, %v1023
    %1025 = vrot.lane.b32.xlu0 %v611, 40
    %v1026 = vpop.permute.xlu0 %1025
    %v1028 = vsel %vm142, %v1024, 0
    %v1031 = vsel %vm212, %v1026, 0
    %1033 = vmatprep.subr.bf16.mxu0 0
    %1034 = vmatpush1.bf16.msra.mxu0 %v1031
    %1035 = vmatprep.subr.bf16.mxu0 0
    %1036 = vmatpush1.bf16.msra.mxu0 0
    %1037 = vmatprep.subr.bf16.mxu0 0
    %1038 = vmatpush1.bf16.msra.mxu0 0
    %1039 = vmatprep.subr.bf16.mxu0 0
    %1040 = vmatpush1.bf16.msra.mxu0 0
    %1041 = vmatprep.subr.bf16.mxu0 0
    %1042 = vmatpush1.bf16.msra.mxu0 0
    %1043 = vmatprep.subr.bf16.mxu0 0
    %1044 = vmatpush1.bf16.msra.mxu0 0
    %1045 = vmatprep.subr.bf16.mxu0 0
    %1046 = vmatpush1.bf16.msra.mxu0 0
    %1047 = vmatprep.subr.bf16.mxu0 0
    %1048 = vmatpush1.bf16.msra.mxu0 0
    %1049 = vmatprep.subr.bf16.mxu0 0
    %1050 = vmatpush1.bf16.msra.mxu0 0
    %1051 = vmatprep.subr.bf16.mxu0 0
    %1052 = vmatpush1.bf16.msra.mxu0 0
    %1053 = vmatprep.subr.bf16.mxu0 0
    %1054 = vmatpush1.bf16.msra.mxu0 0
    %1055 = vmatprep.subr.bf16.mxu0 0
    %1056 = vmatpush1.bf16.msra.mxu0 0
    %1057 = vmatprep.subr.bf16.mxu0 0
    %1058 = vmatpush1.bf16.msra.mxu0 0
    %1059 = vmatprep.subr.bf16.mxu0 0
    %1060 = vmatpush1.bf16.msra.mxu0 0
    %1061 = vmatprep.subr.bf16.mxu0 0
    %1062 = vmatpush1.bf16.msra.mxu0 0
    %1063 = vmatprep.subr.bf16.mxu0 0
    %1064 = vmatpush1.bf16.msra.mxu0 0
    %1065 = vmatprep.mubr.bf16.mxu0 0
    %1066 = vmatmul.mubr.bf16.gmra.mrb[0].mxu0 %v1028
    %v1067 = vpop.f32.mrb[0].mxu0
    %v1068 = vadd.f32 0.0, %v1067
    %v1069 = vpop.f32.mrb[0].mxu0
    %v1070 = vpop.f32.mrb[0].mxu0
    %v1071 = vpop.f32.mrb[0].mxu0
    %1072 = vdwg.mxu0
    %1074 = vrot.lane.b32.xlu0 %v1068, 24
    %v1075 = vpop.permute.xlu0 %1074
    %1077 = vst.msk [vmem:[#allocation2 + $0x8] sm:$0xff] %vm609, %v1075
    %v1078 = vld [vmem:[#allocation2] sm:$0xff]
    %v1079 = vld [vmem:[#allocation2 + $0x8] sm:$0xff]
    %v1080 = vpack.c.bf16 %v1079, %v1078
    %v1081 = vld [vmem:[%s4] sm:$0xf]
    %v1082 = vld [vmem:[%s4 + $0x4] sm:$0xf]
    %v1083 = vld [vmem:[%s4 + $0x8] sm:$0xf]
    %v1084 = vld [vmem:[%s4 + $0xc] sm:$0xf]
    %v1085 = vld [vmem:[%s5] sm:$0x1]
    %v1087 = vlaneseq
    %v1088 = vshrl.u32 %v1087, 7
    %v1089 = vsub.s32 0, %v1088
    %v1090 = vrot.slane %v1085, %v1089
    %v1096 = vunpack.c.l.b16 %v1081
    %v1097 = vunpack.c.l.b16 %v1082
    %v1098 = vunpack.c.l.b16 %v1083
    %v1099 = vunpack.c.l.b16 %v1084
    %v1100 = vpack.c.b16 %v1097, %v1096
    %v1101 = vpack.c.b16 %v1099, %v1098
    %v1105 = vsel %vm93, %v1080, 0
    %1107 = vmatprep.subr.bf16.mxu0 0
    %1108 = vmatpush1.bf16.msra.mxu0 %v1100
    %1109 = vmatprep.subr.bf16.mxu0 0
    %1110 = vmatpush1.bf16.msra.mxu0 %v1101
    %1111 = vmatprep.subr.bf16.mxu0 0
    %1112 = vmatpush1.bf16.msra.mxu0 0
    %1113 = vmatprep.subr.bf16.mxu0 0
    %1114 = vmatpush1.bf16.msra.mxu0 0
    %1115 = vmatprep.subr.bf16.mxu0 0
    %1116 = vmatpush1.bf16.msra.mxu0 0
    %1117 = vmatprep.subr.bf16.mxu0 0
    %1118 = vmatpush1.bf16.msra.mxu0 0
    %1119 = vmatprep.subr.bf16.mxu0 0
    %1120 = vmatpush1.bf16.msra.mxu0 0
    %1121 = vmatprep.subr.bf16.mxu0 0
    %1122 = vmatpush1.bf16.msra.mxu0 0
    %1123 = vmatprep.subr.bf16.mxu0 0
    %1124 = vmatpush1.bf16.msra.mxu0 0
    %1125 = vmatprep.subr.bf16.mxu0 0
    %1126 = vmatpush1.bf16.msra.mxu0 0
    %1127 = vmatprep.subr.bf16.mxu0 0
    %1128 = vmatpush1.bf16.msra.mxu0 0
    %1129 = vmatprep.subr.bf16.mxu0 0
    %1130 = vmatpush1.bf16.msra.mxu0 0
    %1131 = vmatprep.subr.bf16.mxu0 0
    %1132 = vmatpush1.bf16.msra.mxu0 0
    %1133 = vmatprep.subr.bf16.mxu0 0
    %1134 = vmatpush1.bf16.msra.mxu0 0
    %1135 = vmatprep.subr.bf16.mxu0 0
    %1136 = vmatpush1.bf16.msra.mxu0 0
    %1137 = vmatprep.subr.bf16.mxu0 0
    %1138 = vmatpush1.bf16.msra.mxu0 0
    %1139 = vmatprep.mubr.bf16.mxu0 0
    %1140 = vmatmul.mubr.bf16.gmra.mrb[0].mxu0 %v1105
    %v1141 = vpop.f32.mrb[0].mxu0
    %v1142 = vadd.f32 %v1090, %v1141
    %v1143 = vpop.f32.mrb[0].mxu0
    %v1144 = vpop.f32.mrb[0].mxu0
    %v1145 = vadd.f32 %v1090, %v1144
    %v1146 = vpop.f32.mrb[0].mxu0
    %1147 = vdwg.mxu0
    %v1148 = vadd.f32 %v64, %v1142
    %v1149 = vadd.f32 %v65, %v1145
    %v1150 = vld [vmem:[%s6] sm:$0x1]
    %v1151 = vld [vmem:[%s7] sm:$0x1]
    %v1152 = vsel %vm93, %v1148, 0.0
    %1153 = vadd.xlane.f32.xlu0 %v1152
    %v1154 = vpop.xlane.xlu0 %1153
    %v1155 = vsel %vm93, %v1149, 0.0
    %1156 = vadd.xlane.f32.xlu0 %v1155
    %v1157 = vpop.xlane.xlu0 %1156
    %v1158 = vrcp.pop 32.0
    %v1159 = vmul.f32 %v1154, %v1158
    %v1160 = vmul.f32 %v1157, %v1158
    %v1161 = vsub.f32 %v1148, %v1159
    %v1162 = vsub.f32 %v1149, %v1160
    %v1163 = vmul.f32 %v1161, %v1161
    %v1164 = vmul.f32 %v1162, %v1162
    %v1165 = vsel %vm93, %v1163, 0.0
    %1166 = vadd.xlane.f32.xlu0 %v1165
    %v1167 = vpop.xlane.xlu0 %1166
    %v1168 = vsel %vm93, %v1164, 0.0
    %1169 = vadd.xlane.f32.xlu0 %v1168
    %v1170 = vpop.xlane.xlu0 %1169
    %v1171 = vmul.f32 %v1167, %v1158
    %v1172 = vmul.f32 %v1170, %v1158
    %v1173 = vadd.f32 %v1171, 1e-05
    %v1174 = vadd.f32 %v1172, 1e-05
    %v1175 = vrsqrt.pop %v1173
    %v1176 = vrsqrt.pop %v1174
    %v1177 = vmul.f32 %v1161, %v1175
    %v1178 = vmul.f32 %v1162, %v1176
    %v1180 = vlaneseq
    %v1181 = vshrl.u32 %v1180, 7
    %v1182 = vsub.s32 0, %v1181
    %v1183 = vrot.slane %v1150, %v1182
    %v1185 = vmul.f32 %v1177, %v1183
    %v1186 = vmul.f32 %v1178, %v1183
    %v1188 = vlaneseq
    %v1189 = vshrl.u32 %v1188, 7
    %v1190 = vsub.s32 0, %v1189
    %v1191 = vrot.slane %v1151, %v1190
    %v1193 = vadd.f32 %v1185, %v1191
    %v1194 = vadd.f32 %v1186, %v1191
    %v1195 = vpack.c.bf16 %v1194, %v1193
    %v1196 = vld [vmem:[%s8] sm:$0xf]
    %v1197 = vld [vmem:[%s8 + $0x4] sm:$0xf]
    %v1198 = vld [vmem:[%s8 + $0x8] sm:$0xf]
    %v1199 = vld [vmem:[%s8 + $0xc] sm:$0xf]
    %v1200 = vld [vmem:[%s9] sm:$0x1]
    %v1202 = vlaneseq
    %v1203 = vshrl.u32 %v1202, 7
    %v1204 = vsub.s32 0, %v1203
    %v1205 = vrot.slane %v1200, %v1204
    %v1211 = vunpack.c.l.b16 %v1196
    %v1212 = vunpack.c.l.b16 %v1197
    %v1213 = vunpack.c.l.b16 %v1198
    %v1214 = vunpack.c.l.b16 %v1199
    %v1215 = vpack.c.b16 %v1212, %v1211
    %v1216 = vpack.c.b16 %v1214, %v1213
    %v1220 = vsel %vm93, %v1195, 0
    %1222 = vmatprep.subr.bf16.mxu0 0
    %1223 = vmatpush1.bf16.msra.mxu0 %v1215
    %1224 = vmatprep.subr.bf16.mxu0 0
    %1225 = vmatpush1.bf16.msra.mxu0 %v1216
    %1226 = vmatprep.subr.bf16.mxu0 0
    %1227 = vmatpush1.bf16.msra.mxu0 0
    %1228 = vmatprep.subr.bf16.mxu0 0
    %1229 = vmatpush1.bf16.msra.mxu0 0
    %1230 = vmatprep.subr.bf16.mxu0 0
    %1231 = vmatpush1.bf16.msra.mxu0 0
    %1232 = vmatprep.subr.bf16.mxu0 0
    %1233 = vmatpush1.bf16.msra.mxu0 0
    %1234 = vmatprep.subr.bf16.mxu0 0
    %1235 = vmatpush1.bf16.msra.mxu0 0
    %1236 = vmatprep.subr.bf16.mxu0 0
    %1237 = vmatpush1.bf16.msra.mxu0 0
    %1238 = vmatprep.subr.bf16.mxu0 0
    %1239 = vmatpush1.bf16.msra.mxu0 0
    %1240 = vmatprep.subr.bf16.mxu0 0
    %1241 = vmatpush1.bf16.msra.mxu0 0
    %1242 = vmatprep.subr.bf16.mxu0 0
    %1243 = vmatpush1.bf16.msra.mxu0 0
    %1244 = vmatprep.subr.bf16.mxu0 0
    %1245 = vmatpush1.bf16.msra.mxu0 0
    %1246 = vmatprep.subr.bf16.mxu0 0
    %1247 = vmatpush1.bf16.msra.mxu0 0
    %1248 = vmatprep.subr.bf16.mxu0 0
    %1249 = vmatpush1.bf16.msra.mxu0 0
    %1250 = vmatprep.subr.bf16.mxu0 0
    %1251 = vmatpush1.bf16.msra.mxu0 0
    %1252 = vmatprep.subr.bf16.mxu0 0
    %1253 = vmatpush1.bf16.msra.mxu0 0
    %1254 = vmatprep.mubr.bf16.mxu0 0
    %1255 = vmatmul.mubr.bf16.gmra.mrb[0].mxu0 %v1220
    %v1256 = vpop.f32.mrb[0].mxu0
    %v1257 = vadd.f32 %v1205, %v1256
    %v1258 = vpop.f32.mrb[0].mxu0
    %v1259 = vpop.f32.mrb[0].mxu0
    %v1260 = vadd.f32 %v1205, %v1259
    %v1261 = vpop.f32.mrb[0].mxu0
    %1262 = vdwg.mxu0
    %v1263 = vmul.f32 %v1257, 0.5
    %v1264 = vmul.f32 %v1260, 0.5
    %v1265 = vmul.f32 %v1257, 0.044715
    %v1266 = vmul.f32 %v1260, 0.044715
    %v1267 = vmul.f32 %v1265, %v1257
    %v1268 = vmul.f32 %v1266, %v1260
    %v1269 = vmul.f32 %v1267, %v1257
    %v1270 = vmul.f32 %v1268, %v1260
    %v1271 = vadd.f32 %v1257, %v1269
    %v1272 = vadd.f32 %v1260, %v1270
    %v1273 = vmul.f32 %v1271, 0.7978846
    %v1274 = vmul.f32 %v1272, 0.7978846
    %v1275 = vtanh.pop %v1273
    %v1276 = vtanh.pop %v1274
    %v1277 = vadd.f32 %v1275, 1.0
    %v1278 = vadd.f32 %v1276, 1.0
    %v1279 = vmul.f32 %v1263, %v1277
    %v1280 = vmul.f32 %v1264, %v1278
    %v1281 = vpack.c.bf16 %v1280, %v1279
    %v1282 = vld [vmem:[%s10] sm:$0xf]
    %v1283 = vld [vmem:[%s10 + $0x4] sm:$0xf]
    %v1284 = vld [vmem:[%s10 + $0x8] sm:$0xf]
    %v1285 = vld [vmem:[%s10 + $0xc] sm:$0xf]
    %v1286 = vld [vmem:[%s10 + $0x10] sm:$0xf]
    %v1287 = vld [vmem:[%s10 + $0x14] sm:$0xf]
    %v1288 = vld [vmem:[%s10 + $0x18] sm:$0xf]
    %v1289 = vld [vmem:[%s10 + $0x1c] sm:$0xf]
    %v1290 = vld [vmem:[%s10 + $0x20] sm:$0xf]
    %v1291 = vld [vmem:[%s10 + $0x24] sm:$0xf]
    %v1292 = vld [vmem:[%s10 + $0x28] sm:$0xf]
    %v1293 = vld [vmem:[%s10 + $0x2c] sm:$0xf]
    %v1294 = vld [vmem:[%s10 + $0x30] sm:$0xf]
    %v1295 = vld [vmem:[%s10 + $0x34] sm:$0xf]
    %v1296 = vld [vmem:[%s10 + $0x38] sm:$0xf]
    %v1297 = vld [vmem:[%s10 + $0x3c] sm:$0xf]
    %v1298 = vld [vmem:[%s11] sm:$0x1]
    %v1300 = vlaneseq
    %v1301 = vshrl.u32 %v1300, 7
    %v1302 = vsub.s32 0, %v1301
    %v1303 = vrot.slane %v1298, %v1302
    %v1321 = vunpack.c.l.b16 %v1282
    %v1322 = vunpack.c.l.b16 %v1283
    %v1323 = vunpack.c.l.b16 %v1284
    %v1324 = vunpack.c.l.b16 %v1285
    %v1325 = vunpack.c.l.b16 %v1286
    %v1326 = vunpack.c.l.b16 %v1287
    %v1327 = vunpack.c.l.b16 %v1288
    %v1328 = vunpack.c.l.b16 %v1289
    %v1329 = vunpack.c.l.b16 %v1290
    %v1330 = vunpack.c.l.b16 %v1291
    %v1331 = vunpack.c.l.b16 %v1292
    %v1332 = vunpack.c.l.b16 %v1293
    %v1333 = vunpack.c.l.b16 %v1294
    %v1334 = vunpack.c.l.b16 %v1295
    %v1335 = vunpack.c.l.b16 %v1296
    %v1336 = vunpack.c.l.b16 %v1297
    %v1337 = vpack.c.b16 %v1322, %v1321
    %v1338 = vpack.c.b16 %v1324, %v1323
    %v1339 = vpack.c.b16 %v1326, %v1325
    %v1340 = vpack.c.b16 %v1328, %v1327
    %v1341 = vpack.c.b16 %v1330, %v1329
    %v1342 = vpack.c.b16 %v1332, %v1331
    %v1343 = vpack.c.b16 %v1334, %v1333
    %v1344 = vpack.c.b16 %v1336, %v1335
    %1353 = vmatprep.subr.bf16.mxu0 0
    %1354 = vmatpush1.bf16.msra.mxu0 %v1337
    %1355 = vmatprep.subr.bf16.mxu0 0
    %1356 = vmatpush1.bf16.msra.mxu0 %v1338
    %1357 = vmatprep.subr.bf16.mxu0 0
    %1358 = vmatpush1.bf16.msra.mxu0 %v1339
    %1359 = vmatprep.subr.bf16.mxu0 0
    %1360 = vmatpush1.bf16.msra.mxu0 %v1340
    %1361 = vmatprep.subr.bf16.mxu0 0
    %1362 = vmatpush1.bf16.msra.mxu0 %v1341
    %1363 = vmatprep.subr.bf16.mxu0 0
    %1364 = vmatpush1.bf16.msra.mxu0 %v1342
    %1365 = vmatprep.subr.bf16.mxu0 0
    %1366 = vmatpush1.bf16.msra.mxu0 %v1343
    %1367 = vmatprep.subr.bf16.mxu0 0
    %1368 = vmatpush1.bf16.msra.mxu0 %v1344
    %1369 = vmatprep.subr.bf16.mxu0 0
    %1370 = vmatpush1.bf16.msra.mxu0 0
    %1371 = vmatprep.subr.bf16.mxu0 0
    %1372 = vmatpush1.bf16.msra.mxu0 0
    %1373 = vmatprep.subr.bf16.mxu0 0
    %1374 = vmatpush1.bf16.msra.mxu0 0
    %1375 = vmatprep.subr.bf16.mxu0 0
    %1376 = vmatpush1.bf16.msra.mxu0 0
    %1377 = vmatprep.subr.bf16.mxu0 0
    %1378 = vmatpush1.bf16.msra.mxu0 0
    %1379 = vmatprep.subr.bf16.mxu0 0
    %1380 = vmatpush1.bf16.msra.mxu0 0
    %1381 = vmatprep.subr.bf16.mxu0 0
    %1382 = vmatpush1.bf16.msra.mxu0 0
    %1383 = vmatprep.subr.bf16.mxu0 0
    %1384 = vmatpush1.bf16.msra.mxu0 0
    %1385 = vmatprep.mubr.bf16.mxu0 0
    %1386 = vmatmul.mubr.bf16.gmra.mrb[0].mxu0 %v1281
    %v1387 = vpop.f32.mrb[0].mxu0
    %v1388 = vadd.f32 %v1303, %v1387
    %v1389 = vpop.f32.mrb[0].mxu0
    %v1390 = vpop.f32.mrb[0].mxu0
    %v1391 = vadd.f32 %v1303, %v1390
    %v1392 = vpop.f32.mrb[0].mxu0
    %1393 = vdwg.mxu0
    %v1394 = vadd.f32 %v1193, %v1388
    %v1395 = vadd.f32 %v1194, %v1391
    %v1396 = vld [vmem:[%s12] sm:$0x1]
    %v1397 = vld [vmem:[%s13] sm:$0x1]
    %v1398 = vsel %vm93, %v1394, 0.0
    %1399 = vadd.xlane.f32.xlu0 %v1398
    %v1400 = vpop.xlane.xlu0 %1399
    %v1401 = vsel %vm93, %v1395, 0.0
    %1402 = vadd.xlane.f32.xlu0 %v1401
    %v1403 = vpop.xlane.xlu0 %1402
    %v1404 = vmul.f32 %v1400, %v1158
    %v1405 = vmul.f32 %v1403, %v1158
    %v1406 = vsub.f32 %v1394, %v1404
    %v1407 = vsub.f32 %v1395, %v1405
    %v1408 = vmul.f32 %v1406, %v1406
    %v1409 = vmul.f32 %v1407, %v1407
    %v1410 = vsel %vm93, %v1408, 0.0
    %1411 = vadd.xlane.f32.xlu0 %v1410
    %v1412 = vpop.xlane.xlu0 %1411
    %v1413 = vsel %vm93, %v1409, 0.0
    %1414 = vadd.xlane.f32.xlu0 %v1413
    %v1415 = vpop.xlane.xlu0 %1414
    %v1416 = vmul.f32 %v1412, %v1158
    %v1417 = vmul.f32 %v1415, %v1158
    %v1418 = vadd.f32 %v1416, 1e-05
    %v1419 = vadd.f32 %v1417, 1e-05
    %v1420 = vrsqrt.pop %v1418
    %v1421 = vrsqrt.pop %v1419
    %v1422 = vmul.f32 %v1406, %v1420
    %v1423 = vmul.f32 %v1407, %v1421
    %v1425 = vlaneseq
    %v1426 = vshrl.u32 %v1425, 7
    %v1427 = vsub.s32 0, %v1426
    %v1428 = vrot.slane %v1396, %v1427
    %v1430 = vmul.f32 %v1422, %v1428
    %v1431 = vmul.f32 %v1423, %v1428
    %v1433 = vlaneseq
    %v1434 = vshrl.u32 %v1433, 7
    %v1435 = vsub.s32 0, %v1434
    %v1436 = vrot.slane %v1397, %v1435
    %v1438 = vadd.f32 %v1430, %v1436
    %v1439 = vadd.f32 %v1431, %v1436
    %v1440 = vpack.c.bf16 %v1439, %v1438
    %s1441 = scalar_lea.vmem %s2, 16
    %v1442 = vld [vmem:[%s1441] sm:$0xf]
    %v1443 = vld [vmem:[%s1441 + $0x4] sm:$0xf]
    %v1444 = vld [vmem:[%s1441 + $0x8] sm:$0xf]
    %v1445 = vld [vmem:[%s1441 + $0xc] sm:$0xf]
    %s1446 = scalar_lea.vmem %s3, 1
    %v1447 = vld [vmem:[%s1446] sm:$0x1]
    %v1449 = vlaneseq
    %v1450 = vshrl.u32 %v1449, 7
    %v1451 = vsub.s32 0, %v1450
    %v1452 = vrot.slane %v1447, %v1451
    %v1458 = vunpack.c.l.b16 %v1442
    %v1459 = vunpack.c.l.b16 %v1443
    %v1460 = vunpack.c.l.b16 %v1444
    %v1461 = vunpack.c.l.b16 %v1445
    %v1462 = vpack.c.b16 %v1459, %v1458
    %v1463 = vpack.c.b16 %v1461, %v1460
    %v1467 = vsel %vm93, %v1440, 0
    %1469 = vmatprep.subr.bf16.mxu0 0
    %1470 = vmatpush1.bf16.msra.mxu0 %v1462
    %1471 = vmatprep.subr.bf16.mxu0 0
    %1472 = vmatpush1.bf16.msra.mxu0 %v1463
    %1473 = vmatprep.subr.bf16.mxu0 0
    %1474 = vmatpush1.bf16.msra.mxu0 0
    %1475 = vmatprep.subr.bf16.mxu0 0
    %1476 = vmatpush1.bf16.msra.mxu0 0
    %1477 = vmatprep.subr.bf16.mxu0 0
    %1478 = vmatpush1.bf16.msra.mxu0 0
    %1479 = vmatprep.subr.bf16.mxu0 0
    %1480 = vmatpush1.bf16.msra.mxu0 0
    %1481 = vmatprep.subr.bf16.mxu0 0
    %1482 = vmatpush1.bf16.msra.mxu0 0
    %1483 = vmatprep.subr.bf16.mxu0 0
    %1484 = vmatpush1.bf16.msra.mxu0 0
    %1485 = vmatprep.subr.bf16.mxu0 0
    %1486 = vmatpush1.bf16.msra.mxu0 0
    %1487 = vmatprep.subr.bf16.mxu0 0
    %1488 = vmatpush1.bf16.msra.mxu0 0
    %1489 = vmatprep.subr.bf16.mxu0 0
    %1490 = vmatpush1.bf16.msra.mxu0 0
    %1491 = vmatprep.subr.bf16.mxu0 0
    %1492 = vmatpush1.bf16.msra.mxu0 0
    %1493 = vmatprep.subr.bf16.mxu0 0
    %1494 = vmatpush1.bf16.msra.mxu0 0
    %1495 = vmatprep.subr.bf16.mxu0 0
    %1496 = vmatpush1.bf16.msra.mxu0 0
    %1497 = vmatprep.subr.bf16.mxu0 0
    %1498 = vmatpush1.bf16.msra.mxu0 0
    %1499 = vmatprep.subr.bf16.mxu0 0
    %1500 = vmatpush1.bf16.msra.mxu0 0
    %1501 = vmatprep.mubr.bf16.mxu0 0
    %1502 = vmatmul.mubr.bf16.gmra.mrb[0].mxu0 %v1467
    %v1503 = vpop.f32.mrb[0].mxu0
    %v1504 = vadd.f32 %v1452, %v1503
    %v1505 = vpop.f32.mrb[0].mxu0
    %v1506 = vpop.f32.mrb[0].mxu0
    %v1507 = vadd.f32 %v1452, %v1506
    %v1508 = vpop.f32.mrb[0].mxu0
    %1509 = vdwg.mxu0
    %v1510 = vpack.c.bf16 %v1507, %v1504
    %1512 = vrot.lane.b32.xlu0 %v1510, 96
    %v1513 = vpop.permute.xlu0 %1512
    %v1515 = vsel %vm142, %v1510, 0
    %v1518 = vsel %vm142, %v1513, 0
    %1520 = vmatprep.subr.bf16.mxu0 0
    %1521 = vmatpush1.bf16.xpose.msra.mxu0 %v1518
    %1522 = vmatprep.subr.bf16.mxu0 0
    %1523 = vmatpush1.bf16.xpose.msra.mxu0 0
    %1524 = vmatprep.subr.bf16.mxu0 0
    %1525 = vmatpush1.bf16.xpose.msra.mxu0 0
    %1526 = vmatprep.subr.bf16.mxu0 0
    %1527 = vmatpush1.bf16.xpose.msra.mxu0 0
    %1528 = vmatprep.subr.bf16.mxu0 0
    %1529 = vmatpush1.bf16.xpose.msra.mxu0 0
    %1530 = vmatprep.subr.bf16.mxu0 0
    %1531 = vmatpush1.bf16.xpose.msra.mxu0 0
    %1532 = vmatprep.subr.bf16.mxu0 0
    %1533 = vmatpush1.bf16.xpose.msra.mxu0 0
    %1534 = vmatprep.subr.bf16.mxu0 0
    %1535 = vmatpush1.bf16.xpose.msra.mxu0 0
    %1536 = vmatprep.subr.bf16.mxu0 0
    %1537 = vmatpush1.bf16.xpose.msra.mxu0 0
    %1538 = vmatprep.subr.bf16.mxu0 0
    %1539 = vmatpush1.bf16.xpose.msra.mxu0 0
    %1540 = vmatprep.subr.bf16.mxu0 0
    %1541 = vmatpush1.bf16.xpose.msra.mxu0 0
    %1542 = vmatprep.subr.bf16.mxu0 0
    %1543 = vmatpush1.bf16.xpose.msra.mxu0 0
    %1544 = vmatprep.subr.bf16.mxu0 0
    %1545 = vmatpush1.bf16.xpose.msra.mxu0 0
    %1546 = vmatprep.subr.bf16.mxu0 0
    %1547 = vmatpush1.bf16.xpose.msra.mxu0 0
    %1548 = vmatprep.subr.bf16.mxu0 0
    %1549 = vmatpush1.bf16.xpose.msra.mxu0 0
    %1550 = vmatprep.subr.bf16.mxu0 0
    %1551 = vmatpush1.bf16.xpose.msra.mxu0 0
    %1552 = vmatprep.mubr.bf16.mxu0 0
    %1553 = vmatmul.mubr.bf16.gmra.mrb[0].mxu0 %v1515
    %v1554 = vpop.f32.mrb[0].mxu0
    %v1555 = vadd.f32 0.0, %v1554
    %v1556 = vpop.f32.mrb[0].mxu0
    %v1557 = vpop.f32.mrb[0].mxu0
    %v1558 = vpop.f32.mrb[0].mxu0
    %1559 = vdwg.mxu0
    %v1560 = vmul.f32 %v1555, 0.35355338
    %v1561 = vadd.f32 %v1560, %v193
    %v1562 = vsel %vm142, %v1561, -inf
    %1563 = vmax.xlane.f32.xlu0 %v1562
    %v1564 = vpop.xlane.xlu0 %1563
    %v1565 = vsub.f32 %v1561, %v1564
    %v1566 = vmul.f32 %v1565, 1.442695
    %v1567 = vpow.pop %v1566
    %v1568 = vsel %vm142, %v1567, 0.0
    %1569 = vadd.xlane.f32.xlu0 %v1568
    %v1570 = vpop.xlane.xlu0 %1569
    %v1571 = vrcp.pop %v1570
    %v1572 = vmul.f32 %v1567, %v1571
    %v1573 = vpack.c.bf16 %v1572, %v1572
    %1574 = vrot.lane.b32.xlu0 %v1510, 64
    %v1575 = vpop.permute.xlu0 %1574
    %v1577 = vsel %vm142, %v1573, 0
    %v1580 = vsel %vm212, %v1575, 0
    %1582 = vmatprep.subr.bf16.mxu0 0
    %1583 = vmatpush1.bf16.msra.mxu0 %v1580
    %1584 = vmatprep.subr.bf16.mxu0 0
    %1585 = vmatpush1.bf16.msra.mxu0 0
    %1586 = vmatprep.subr.bf16.mxu0 0
    %1587 = vmatpush1.bf16.msra.mxu0 0
    %1588 = vmatprep.subr.bf16.mxu0 0
    %1589 = vmatpush1.bf16.msra.mxu0 0
    %1590 = vmatprep.subr.bf16.mxu0 0
    %1591 = vmatpush1.bf16.msra.mxu0 0
    %1592 = vmatprep.subr.bf16.mxu0 0
    %1593 = vmatpush1.bf16.msra.mxu0 0
    %1594 = vmatprep.subr.bf16.mxu0 0
    %1595 = vmatpush1.bf16.msra.mxu0 0
    %1596 = vmatprep.subr.bf16.mxu0 0
    %1597 = vmatpush1.bf16.msra.mxu0 0
    %1598 = vmatprep.subr.bf16.mxu0 0
    %1599 = vmatpush1.bf16.msra.mxu0 0
    %1600 = vmatprep.subr.bf16.mxu0 0
    %1601 = vmatpush1.bf16.msra.mxu0 0
    %1602 = vmatprep.subr.bf16.mxu0 0
    %1603 = vmatpush1.bf16.msra.mxu0 0
    %1604 = vmatprep.subr.bf16.mxu0 0
    %1605 = vmatpush1.bf16.msra.mxu0 0
    %1606 = vmatprep.subr.bf16.mxu0 0
    %1607 = vmatpush1.bf16.msra.mxu0 0
    %1608 = vmatprep.subr.bf16.mxu0 0
    %1609 = vmatpush1.bf16.msra.mxu0 0
    %1610 = vmatprep.subr.bf16.mxu0 0
    %1611 = vmatpush1.bf16.msra.mxu0 0
    %1612 = vmatprep.subr.bf16.mxu0 0
    %1613 = vmatpush1.bf16.msra.mxu0 0
    %1614 = vmatprep.mubr.bf16.mxu0 0
    %1615 = vmatmul.mubr.bf16.gmra.mrb[0].mxu0 %v1577
    %v1616 = vpop.f32.mrb[0].mxu0
    %v1617 = vadd.f32 0.0, %v1616
    %v1618 = vpop.f32.mrb[0].mxu0
    %v1619 = vpop.f32.mrb[0].mxu0
    %v1620 = vpop.f32.mrb[0].mxu0
    %1621 = vdwg.mxu0
    %1622 = vst.msk [vmem:[#allocation2] sm:$0xff] %vm142, %v1617
    %1623 = vrot.lane.b32.xlu0 %v1510, 120
    %v1624 = vpop.permute.xlu0 %1623
    %1625 = vrot.lane.b32.xlu0 %v1510, 88
    %v1626 = vpop.permute.xlu0 %1625
    %v1628 = vsel %vm142, %v1624, 0
    %v1631 = vsel %vm142, %v1626, 0
    %1633 = vmatprep.subr.bf16.mxu0 0
    %1634 = vmatpush1.bf16.xpose.msra.mxu0 %v1631
    %1635 = vmatprep.subr.bf16.mxu0 0
    %1636 = vmatpush1.bf16.xpose.msra.mxu0 0
    %1637 = vmatprep.subr.bf16.mxu0 0
    %1638 = vmatpush1.bf16.xpose.msra.mxu0 0
    %1639 = vmatprep.subr.bf16.mxu0 0
    %1640 = vmatpush1.bf16.xpose.msra.mxu0 0
    %1641 = vmatprep.subr.bf16.mxu0 0
    %1642 = vmatpush1.bf16.xpose.msra.mxu0 0
    %1643 = vmatprep.subr.bf16.mxu0 0
    %1644 = vmatpush1.bf16.xpose.msra.mxu0 0
    %1645 = vmatprep.subr.bf16.mxu0 0
    %1646 = vmatpush1.bf16.xpose.msra.mxu0 0
    %1647 = vmatprep.subr.bf16.mxu0 0
    %1648 = vmatpush1.bf16.xpose.msra.mxu0 0
    %1649 = vmatprep.subr.bf16.mxu0 0
    %1650 = vmatpush1.bf16.xpose.msra.mxu0 0
    %1651 = vmatprep.subr.bf16.mxu0 0
    %1652 = vmatpush1.bf16.xpose.msra.mxu0 0
    %1653 = vmatprep.subr.bf16.mxu0 0
    %1654 = vmatpush1.bf16.xpose.msra.mxu0 0
    %1655 = vmatprep.subr.bf16.mxu0 0
    %1656 = vmatpush1.bf16.xpose.msra.mxu0 0
    %1657 = vmatprep.subr.bf16.mxu0 0
    %1658 = vmatpush1.bf16.xpose.msra.mxu0 0
    %1659 = vmatprep.subr.bf16.mxu0 0
    %1660 = vmatpush1.bf16.xpose.msra.mxu0 0
    %1661 = vmatprep.subr.bf16.mxu0 0
    %1662 = vmatpush1.bf16.xpose.msra.mxu0 0
    %1663 = vmatprep.subr.bf16.mxu0 0
    %1664 = vmatpush1.bf16.xpose.msra.mxu0 0
    %1665 = vmatprep.mubr.bf16.mxu0 0
    %1666 = vmatmul.mubr.bf16.gmra.mrb[0].mxu0 %v1628
    %v1667 = vpop.f32.mrb[0].mxu0
    %v1668 = vadd.f32 0.0, %v1667
    %v1669 = vpop.f32.mrb[0].mxu0
    %v1670 = vpop.f32.mrb[0].mxu0
    %v1671 = vpop.f32.mrb[0].mxu0
    %1672 = vdwg.mxu0
    %v1673 = vmul.f32 %v1668, 0.35355338
    %v1674 = vadd.f32 %v1673, %v193
    %v1675 = vsel %vm142, %v1674, -inf
    %1676 = vmax.xlane.f32.xlu0 %v1675
    %v1677 = vpop.xlane.xlu0 %1676
    %v1678 = vsub.f32 %v1674, %v1677
    %v1679 = vmul.f32 %v1678, 1.442695
    %v1680 = vpow.pop %v1679
    %v1681 = vsel %vm142, %v1680, 0.0
    %1682 = vadd.xlane.f32.xlu0 %v1681
    %v1683 = vpop.xlane.xlu0 %1682
    %v1684 = vrcp.pop %v1683
    %v1685 = vmul.f32 %v1680, %v1684
    %v1686 = vpack.c.bf16 %v1685, %v1685
    %1687 = vrot.lane.b32.xlu0 %v1510, 56
    %v1688 = vpop.permute.xlu0 %1687
    %v1690 = vsel %vm142, %v1686, 0
    %v1693 = vsel %vm212, %v1688, 0
    %1695 = vmatprep.subr.bf16.mxu0 0
    %1696 = vmatpush1.bf16.msra.mxu0 %v1693
    %1697 = vmatprep.subr.bf16.mxu0 0
    %1698 = vmatpush1.bf16.msra.mxu0 0
    %1699 = vmatprep.subr.bf16.mxu0 0
    %1700 = vmatpush1.bf16.msra.mxu0 0
    %1701 = vmatprep.subr.bf16.mxu0 0
    %1702 = vmatpush1.bf16.msra.mxu0 0
    %1703 = vmatprep.subr.bf16.mxu0 0
    %1704 = vmatpush1.bf16.msra.mxu0 0
    %1705 = vmatprep.subr.bf16.mxu0 0
    %1706 = vmatpush1.bf16.msra.mxu0 0
    %1707 = vmatprep.subr.bf16.mxu0 0
    %1708 = vmatpush1.bf16.msra.mxu0 0
    %1709 = vmatprep.subr.bf16.mxu0 0
    %1710 = vmatpush1.bf16.msra.mxu0 0
    %1711 = vmatprep.subr.bf16.mxu0 0
    %1712 = vmatpush1.bf16.msra.mxu0 0
    %1713 = vmatprep.subr.bf16.mxu0 0
    %1714 = vmatpush1.bf16.msra.mxu0 0
    %1715 = vmatprep.subr.bf16.mxu0 0
    %1716 = vmatpush1.bf16.msra.mxu0 0
    %1717 = vmatprep.subr.bf16.mxu0 0
    %1718 = vmatpush1.bf16.msra.mxu0 0
    %1719 = vmatprep.subr.bf16.mxu0 0
    %1720 = vmatpush1.bf16.msra.mxu0 0
    %1721 = vmatprep.subr.bf16.mxu0 0
    %1722 = vmatpush1.bf16.msra.mxu0 0
    %1723 = vmatprep.subr.bf16.mxu0 0
    %1724 = vmatpush1.bf16.msra.mxu0 0
    %1725 = vmatprep.subr.bf16.mxu0 0
    %1726 = vmatpush1.bf16.msra.mxu0 0
    %1727 = vmatprep.mubr.bf16.mxu0 0
    %1728 = vmatmul.mubr.bf16.gmra.mrb[0].mxu0 %v1690
    %v1729 = vpop.f32.mrb[0].mxu0
    %v1730 = vadd.f32 0.0, %v1729
    %v1731 = vpop.f32.mrb[0].mxu0
    %v1732 = vpop.f32.mrb[0].mxu0
    %v1733 = vpop.f32.mrb[0].mxu0
    %1734 = vdwg.mxu0
    %1736 = vrot.lane.b32.xlu0 %v1730, 8
    %v1737 = vpop.permute.xlu0 %1736
    %1739 = vst.msk [vmem:[#allocation2] sm:$0xff] %vm373, %v1737
    %1740 = vrot.lane.b32.xlu0 %v1510, 112
    %v1741 = vpop.permute.xlu0 %1740
    %1742 = vrot.lane.b32.xlu0 %v1510, 80
    %v1743 = vpop.permute.xlu0 %1742
    %v1745 = vsel %vm142, %v1741, 0
    %v1748 = vsel %vm142, %v1743, 0
    %1750 = vmatprep.subr.bf16.mxu0 0
    %1751 = vmatpush1.bf16.xpose.msra.mxu0 %v1748
    %1752 = vmatprep.subr.bf16.mxu0 0
    %1753 = vmatpush1.bf16.xpose.msra.mxu0 0
    %1754 = vmatprep.subr.bf16.mxu0 0
    %1755 = vmatpush1.bf16.xpose.msra.mxu0 0
    %1756 = vmatprep.subr.bf16.mxu0 0
    %1757 = vmatpush1.bf16.xpose.msra.mxu0 0
    %1758 = vmatprep.subr.bf16.mxu0 0
    %1759 = vmatpush1.bf16.xpose.msra.mxu0 0
    %1760 = vmatprep.subr.bf16.mxu0 0
    %1761 = vmatpush1.bf16.xpose.msra.mxu0 0
    %1762 = vmatprep.subr.bf16.mxu0 0
    %1763 = vmatpush1.bf16.xpose.msra.mxu0 0
    %1764 = vmatprep.subr.bf16.mxu0 0
    %1765 = vmatpush1.bf16.xpose.msra.mxu0 0
    %1766 = vmatprep.subr.bf16.mxu0 0
    %1767 = vmatpush1.bf16.xpose.msra.mxu0 0
    %1768 = vmatprep.subr.bf16.mxu0 0
    %1769 = vmatpush1.bf16.xpose.msra.mxu0 0
    %1770 = vmatprep.subr.bf16.mxu0 0
    %1771 = vmatpush1.bf16.xpose.msra.mxu0 0
    %1772 = vmatprep.subr.bf16.mxu0 0
    %1773 = vmatpush1.bf16.xpose.msra.mxu0 0
    %1774 = vmatprep.subr.bf16.mxu0 0
    %1775 = vmatpush1.bf16.xpose.msra.mxu0 0
    %1776 = vmatprep.subr.bf16.mxu0 0
    %1777 = vmatpush1.bf16.xpose.msra.mxu0 0
    %1778 = vmatprep.subr.bf16.mxu0 0
    %1779 = vmatpush1.bf16.xpose.msra.mxu0 0
    %1780 = vmatprep.subr.bf16.mxu0 0
    %1781 = vmatpush1.bf16.xpose.msra.mxu0 0
    %1782 = vmatprep.mubr.bf16.mxu0 0
    %1783 = vmatmul.mubr.bf16.gmra.mrb[0].mxu0 %v1745
    %v1784 = vpop.f32.mrb[0].mxu0
    %v1785 = vadd.f32 0.0, %v1784
    %v1786 = vpop.f32.mrb[0].mxu0
    %v1787 = vpop.f32.mrb[0].mxu0
    %v1788 = vpop.f32.mrb[0].mxu0
    %1789 = vdwg.mxu0
    %v1790 = vmul.f32 %v1785, 0.35355338
    %v1791 = vadd.f32 %v1790, %v193
    %v1792 = vsel %vm142, %v1791, -inf
    %1793 = vmax.xlane.f32.xlu0 %v1792
    %v1794 = vpop.xlane.xlu0 %1793
    %v1795 = vsub.f32 %v1791, %v1794
    %v1796 = vmul.f32 %v1795, 1.442695
    %v1797 = vpow.pop %v1796
    %v1798 = vsel %vm142, %v1797, 0.0
    %1799 = vadd.xlane.f32.xlu0 %v1798
    %v1800 = vpop.xlane.xlu0 %1799
    %v1801 = vrcp.pop %v1800
    %v1802 = vmul.f32 %v1797, %v1801
    %v1803 = vpack.c.bf16 %v1802, %v1802
    %1804 = vrot.lane.b32.xlu0 %v1510, 48
    %v1805 = vpop.permute.xlu0 %1804
    %v1807 = vsel %vm142, %v1803, 0
    %v1810 = vsel %vm212, %v1805, 0
    %1812 = vmatprep.subr.bf16.mxu0 0
    %1813 = vmatpush1.bf16.msra.mxu0 %v1810
    %1814 = vmatprep.subr.bf16.mxu0 0
    %1815 = vmatpush1.bf16.msra.mxu0 0
    %1816 = vmatprep.subr.bf16.mxu0 0
    %1817 = vmatpush1.bf16.msra.mxu0 0
    %1818 = vmatprep.subr.bf16.mxu0 0
    %1819 = vmatpush1.bf16.msra.mxu0 0
    %1820 = vmatprep.subr.bf16.mxu0 0
    %1821 = vmatpush1.bf16.msra.mxu0 0
    %1822 = vmatprep.subr.bf16.mxu0 0
    %1823 = vmatpush1.bf16.msra.mxu0 0
    %1824 = vmatprep.subr.bf16.mxu0 0
    %1825 = vmatpush1.bf16.msra.mxu0 0
    %1826 = vmatprep.subr.bf16.mxu0 0
    %1827 = vmatpush1.bf16.msra.mxu0 0
    %1828 = vmatprep.subr.bf16.mxu0 0
    %1829 = vmatpush1.bf16.msra.mxu0 0
    %1830 = vmatprep.subr.bf16.mxu0 0
    %1831 = vmatpush1.bf16.msra.mxu0 0
    %1832 = vmatprep.subr.bf16.mxu0 0
    %1833 = vmatpush1.bf16.msra.mxu0 0
    %1834 = vmatprep.subr.bf16.mxu0 0
    %1835 = vmatpush1.bf16.msra.mxu0 0
    %1836 = vmatprep.subr.bf16.mxu0 0
    %1837 = vmatpush1.bf16.msra.mxu0 0
    %1838 = vmatprep.subr.bf16.mxu0 0
    %1839 = vmatpush1.bf16.msra.mxu0 0
    %1840 = vmatprep.subr.bf16.mxu0 0
    %1841 = vmatpush1.bf16.msra.mxu0 0
    %1842 = vmatprep.subr.bf16.mxu0 0
    %1843 = vmatpush1.bf16.msra.mxu0 0
    %1844 = vmatprep.mubr.bf16.mxu0 0
    %1845 = vmatmul.mubr.bf16.gmra.mrb[0].mxu0 %v1807
    %v1846 = vpop.f32.mrb[0].mxu0
    %v1847 = vadd.f32 0.0, %v1846
    %v1848 = vpop.f32.mrb[0].mxu0
    %v1849 = vpop.f32.mrb[0].mxu0
    %v1850 = vpop.f32.mrb[0].mxu0
    %1851 = vdwg.mxu0
    %1853 = vrot.lane.b32.xlu0 %v1847, 16
    %v1854 = vpop.permute.xlu0 %1853
    %1856 = vst.msk [vmem:[#allocation2] sm:$0xff] %vm491, %v1854
    %1857 = vrot.lane.b32.xlu0 %v1510, 104
    %v1858 = vpop.permute.xlu0 %1857
    %1859 = vrot.lane.b32.xlu0 %v1510, 72
    %v1860 = vpop.permute.xlu0 %1859
    %v1862 = vsel %vm142, %v1858, 0
    %v1865 = vsel %vm142, %v1860, 0
    %1867 = vmatprep.subr.bf16.mxu0 0
    %1868 = vmatpush1.bf16.xpose.msra.mxu0 %v1865
    %1869 = vmatprep.subr.bf16.mxu0 0
    %1870 = vmatpush1.bf16.xpose.msra.mxu0 0
    %1871 = vmatprep.subr.bf16.mxu0 0
    %1872 = vmatpush1.bf16.xpose.msra.mxu0 0
    %1873 = vmatprep.subr.bf16.mxu0 0
    %1874 = vmatpush1.bf16.xpose.msra.mxu0 0
    %1875 = vmatprep.subr.bf16.mxu0 0
    %1876 = vmatpush1.bf16.xpose.msra.mxu0 0
    %1877 = vmatprep.subr.bf16.mxu0 0
    %1878 = vmatpush1.bf16.xpose.msra.mxu0 0
    %1879 = vmatprep.subr.bf16.mxu0 0
    %1880 = vmatpush1.bf16.xpose.msra.mxu0 0
    %1881 = vmatprep.subr.bf16.mxu0 0
    %1882 = vmatpush1.bf16.xpose.msra.mxu0 0
    %1883 = vmatprep.subr.bf16.mxu0 0
    %1884 = vmatpush1.bf16.xpose.msra.mxu0 0
    %1885 = vmatprep.subr.bf16.mxu0 0
    %1886 = vmatpush1.bf16.xpose.msra.mxu0 0
    %1887 = vmatprep.subr.bf16.mxu0 0
    %1888 = vmatpush1.bf16.xpose.msra.mxu0 0
    %1889 = vmatprep.subr.bf16.mxu0 0
    %1890 = vmatpush1.bf16.xpose.msra.mxu0 0
    %1891 = vmatprep.subr.bf16.mxu0 0
    %1892 = vmatpush1.bf16.xpose.msra.mxu0 0
    %1893 = vmatprep.subr.bf16.mxu0 0
    %1894 = vmatpush1.bf16.xpose.msra.mxu0 0
    %1895 = vmatprep.subr.bf16.mxu0 0
    %1896 = vmatpush1.bf16.xpose.msra.mxu0 0
    %1897 = vmatprep.subr.bf16.mxu0 0
    %1898 = vmatpush1.bf16.xpose.msra.mxu0 0
    %1899 = vmatprep.mubr.bf16.mxu0 0
    %1900 = vmatmul.mubr.bf16.gmra.mrb[0].mxu0 %v1862
    %v1901 = vpop.f32.mrb[0].mxu0
    %v1902 = vadd.f32 0.0, %v1901
    %v1903 = vpop.f32.mrb[0].mxu0
    %v1904 = vpop.f32.mrb[0].mxu0
    %v1905 = vpop.f32.mrb[0].mxu0
    %1906 = vdwg.mxu0
    %v1907 = vmul.f32 %v1902, 0.35355338
    %v1908 = vadd.f32 %v1907, %v193
    %v1909 = vsel %vm142, %v1908, -inf
    %1910 = vmax.xlane.f32.xlu0 %v1909
    %v1911 = vpop.xlane.xlu0 %1910
    %v1912 = vsub.f32 %v1908, %v1911
    %v1913 = vmul.f32 %v1912, 1.442695
    %v1914 = vpow.pop %v1913
    %v1915 = vsel %vm142, %v1914, 0.0
    %1916 = vadd.xlane.f32.xlu0 %v1915
    %v1917 = vpop.xlane.xlu0 %1916
    %v1918 = vrcp.pop %v1917
    %v1919 = vmul.f32 %v1914, %v1918
    %v1920 = vpack.c.bf16 %v1919, %v1919
    %1921 = vrot.lane.b32.xlu0 %v1510, 40
    %v1922 = vpop.permute.xlu0 %1921
    %v1924 = vsel %vm142, %v1920, 0
    %v1927 = vsel %vm212, %v1922, 0
    %1929 = vmatprep.subr.bf16.mxu0 0
    %1930 = vmatpush1.bf16.msra.mxu0 %v1927
    %1931 = vmatprep.subr.bf16.mxu0 0
    %1932 = vmatpush1.bf16.msra.mxu0 0
    %1933 = vmatprep.subr.bf16.mxu0 0
    %1934 = vmatpush1.bf16.msra.mxu0 0
    %1935 = vmatprep.subr.bf16.mxu0 0
    %1936 = vmatpush1.bf16.msra.mxu0 0
    %1937 = vmatprep.subr.bf16.mxu0 0
    %1938 = vmatpush1.bf16.msra.mxu0 0
    %1939 = vmatprep.subr.bf16.mxu0 0
    %1940 = vmatpush1.bf16.msra.mxu0 0
    %1941 = vmatprep.subr.bf16.mxu0 0
    %1942 = vmatpush1.bf16.msra.mxu0 0
    %1943 = vmatprep.subr.bf16.mxu0 0
    %1944 = vmatpush1.bf16.msra.mxu0 0
    %1945 = vmatprep.subr.bf16.mxu0 0
    %1946 = vmatpush1.bf16.msra.mxu0 0
    %1947 = vmatprep.subr.bf16.mxu0 0
    %1948 = vmatpush1.bf16.msra.mxu0 0
    %1949 = vmatprep.subr.bf16.mxu0 0
    %1950 = vmatpush1.bf16.msra.mxu0 0
    %1951 = vmatprep.subr.bf16.mxu0 0
    %1952 = vmatpush1.bf16.msra.mxu0 0
    %1953 = vmatprep.subr.bf16.mxu0 0
    %1954 = vmatpush1.bf16.msra.mxu0 0
    %1955 = vmatprep.subr.bf16.mxu0 0
    %1956 = vmatpush1.bf16.msra.mxu0 0
    %1957 = vmatprep.subr.bf16.mxu0 0
    %1958 = vmatpush1.bf16.msra.mxu0 0
    %1959 = vmatprep.subr.bf16.mxu0 0
    %1960 = vmatpush1.bf16.msra.mxu0 0
    %1961 = vmatprep.mubr.bf16.mxu0 0
    %1962 = vmatmul.mubr.bf16.gmra.mrb[0].mxu0 %v1924
    %v1963 = vpop.f32.mrb[0].mxu0
    %v1964 = vadd.f32 0.0, %v1963
    %v1965 = vpop.f32.mrb[0].mxu0
    %v1966 = vpop.f32.mrb[0].mxu0
    %v1967 = vpop.f32.mrb[0].mxu0
    %1968 = vdwg.mxu0
    %1970 = vrot.lane.b32.xlu0 %v1964, 24
    %v1971 = vpop.permute.xlu0 %1970
    %1973 = vst.msk [vmem:[#allocation2] sm:$0xff] %vm609, %v1971
    %v1974 = vrot.slane %v1510, 4
    %1975 = vrot.lane.b32.xlu0 %v1974, 96
    %v1976 = vpop.permute.xlu0 %1975
    %v1978 = vsel %vm142, %v1974, 0
    %v1981 = vsel %vm142, %v1976, 0
    %1983 = vmatprep.subr.bf16.mxu0 0
    %1984 = vmatpush1.bf16.xpose.msra.mxu0 %v1981
    %1985 = vmatprep.subr.bf16.mxu0 0
    %1986 = vmatpush1.bf16.xpose.msra.mxu0 0
    %1987 = vmatprep.subr.bf16.mxu0 0
    %1988 = vmatpush1.bf16.xpose.msra.mxu0 0
    %1989 = vmatprep.subr.bf16.mxu0 0
    %1990 = vmatpush1.bf16.xpose.msra.mxu0 0
    %1991 = vmatprep.subr.bf16.mxu0 0
    %1992 = vmatpush1.bf16.xpose.msra.mxu0 0
    %1993 = vmatprep.subr.bf16.mxu0 0
    %1994 = vmatpush1.bf16.xpose.msra.mxu0 0
    %1995 = vmatprep.subr.bf16.mxu0 0
    %1996 = vmatpush1.bf16.xpose.msra.mxu0 0
    %1997 = vmatprep.subr.bf16.mxu0 0
    %1998 = vmatpush1.bf16.xpose.msra.mxu0 0
    %1999 = vmatprep.subr.bf16.mxu0 0
    %2000 = vmatpush1.bf16.xpose.msra.mxu0 0
    %2001 = vmatprep.subr.bf16.mxu0 0
    %2002 = vmatpush1.bf16.xpose.msra.mxu0 0
    %2003 = vmatprep.subr.bf16.mxu0 0
    %2004 = vmatpush1.bf16.xpose.msra.mxu0 0
    %2005 = vmatprep.subr.bf16.mxu0 0
    %2006 = vmatpush1.bf16.xpose.msra.mxu0 0
    %2007 = vmatprep.subr.bf16.mxu0 0
    %2008 = vmatpush1.bf16.xpose.msra.mxu0 0
    %2009 = vmatprep.subr.bf16.mxu0 0
    %2010 = vmatpush1.bf16.xpose.msra.mxu0 0
    %2011 = vmatprep.subr.bf16.mxu0 0
    %2012 = vmatpush1.bf16.xpose.msra.mxu0 0
    %2013 = vmatprep.subr.bf16.mxu0 0
    %2014 = vmatpush1.bf16.xpose.msra.mxu0 0
    %2015 = vmatprep.mubr.bf16.mxu0 0
    %2016 = vmatmul.mubr.bf16.gmra.mrb[0].mxu0 %v1978
    %v2017 = vpop.f32.mrb[0].mxu0
    %v2018 = vadd.f32 0.0, %v2017
    %v2019 = vpop.f32.mrb[0].mxu0
    %v2020 = vpop.f32.mrb[0].mxu0
    %v2021 = vpop.f32.mrb[0].mxu0
    %2022 = vdwg.mxu0
    %v2023 = vmul.f32 %v2018, 0.35355338
    %v2024 = vadd.f32 %v2023, %v664
    %v2025 = vsel %vm142, %v2024, -inf
    %2026 = vmax.xlane.f32.xlu0 %v2025
    %v2027 = vpop.xlane.xlu0 %2026
    %v2028 = vsub.f32 %v2024, %v2027
    %v2029 = vmul.f32 %v2028, 1.442695
    %v2030 = vpow.pop %v2029
    %v2031 = vsel %vm142, %v2030, 0.0
    %2032 = vadd.xlane.f32.xlu0 %v2031
    %v2033 = vpop.xlane.xlu0 %2032
    %v2034 = vrcp.pop %v2033
    %v2035 = vmul.f32 %v2030, %v2034
    %v2036 = vpack.c.bf16 %v2035, %v2035
    %2037 = vrot.lane.b32.xlu0 %v1974, 64
    %v2038 = vpop.permute.xlu0 %2037
    %v2040 = vsel %vm142, %v2036, 0
    %v2043 = vsel %vm212, %v2038, 0
    %2045 = vmatprep.subr.bf16.mxu0 0
    %2046 = vmatpush1.bf16.msra.mxu0 %v2043
    %2047 = vmatprep.subr.bf16.mxu0 0
    %2048 = vmatpush1.bf16.msra.mxu0 0
    %2049 = vmatprep.subr.bf16.mxu0 0
    %2050 = vmatpush1.bf16.msra.mxu0 0
    %2051 = vmatprep.subr.bf16.mxu0 0
    %2052 = vmatpush1.bf16.msra.mxu0 0
    %2053 = vmatprep.subr.bf16.mxu0 0
    %2054 = vmatpush1.bf16.msra.mxu0 0
    %2055 = vmatprep.subr.bf16.mxu0 0
    %2056 = vmatpush1.bf16.msra.mxu0 0
    %2057 = vmatprep.subr.bf16.mxu0 0
    %2058 = vmatpush1.bf16.msra.mxu0 0
    %2059 = vmatprep.subr.bf16.mxu0 0
    %2060 = vmatpush1.bf16.msra.mxu0 0
    %2061 = vmatprep.subr.bf16.mxu0 0
    %2062 = vmatpush1.bf16.msra.mxu0 0
    %2063 = vmatprep.subr.bf16.mxu0 0
    %2064 = vmatpush1.bf16.msra.mxu0 0
    %2065 = vmatprep.subr.bf16.mxu0 0
    %2066 = vmatpush1.bf16.msra.mxu0 0
    %2067 = vmatprep.subr.bf16.mxu0 0
    %2068 = vmatpush1.bf16.msra.mxu0 0
    %2069 = vmatprep.subr.bf16.mxu0 0
    %2070 = vmatpush1.bf16.msra.mxu0 0
    %2071 = vmatprep.subr.bf16.mxu0 0
    %2072 = vmatpush1.bf16.msra.mxu0 0
    %2073 = vmatprep.subr.bf16.mxu0 0
    %2074 = vmatpush1.bf16.msra.mxu0 0
    %2075 = vmatprep.subr.bf16.mxu0 0
    %2076 = vmatpush1.bf16.msra.mxu0 0
    %2077 = vmatprep.mubr.bf16.mxu0 0
    %2078 = vmatmul.mubr.bf16.gmra.mrb[0].mxu0 %v2040
    %v2079 = vpop.f32.mrb[0].mxu0
    %v2080 = vadd.f32 0.0, %v2079
    %v2081 = vpop.f32.mrb[0].mxu0
    %v2082 = vpop.f32.mrb[0].mxu0
    %v2083 = vpop.f32.mrb[0].mxu0
    %2084 = vdwg.mxu0
    %2085 = vst.msk [vmem:[#allocation2 + $0x8] sm:$0xff] %vm142, %v2080
    %2086 = vrot.lane.b32.xlu0 %v1974, 120
    %v2087 = vpop.permute.xlu0 %2086
    %2088 = vrot.lane.b32.xlu0 %v1974, 88
    %v2089 = vpop.permute.xlu0 %2088
    %v2091 = vsel %vm142, %v2087, 0
    %v2094 = vsel %vm142, %v2089, 0
    %2096 = vmatprep.subr.bf16.mxu0 0
    %2097 = vmatpush1.bf16.xpose.msra.mxu0 %v2094
    %2098 = vmatprep.subr.bf16.mxu0 0
    %2099 = vmatpush1.bf16.xpose.msra.mxu0 0
    %2100 = vmatprep.subr.bf16.mxu0 0
    %2101 = vmatpush1.bf16.xpose.msra.mxu0 0
    %2102 = vmatprep.subr.bf16.mxu0 0
    %2103 = vmatpush1.bf16.xpose.msra.mxu0 0
    %2104 = vmatprep.subr.bf16.mxu0 0
    %2105 = vmatpush1.bf16.xpose.msra.mxu0 0
    %2106 = vmatprep.subr.bf16.mxu0 0
    %2107 = vmatpush1.bf16.xpose.msra.mxu0 0
    %2108 = vmatprep.subr.bf16.mxu0 0
    %2109 = vmatpush1.bf16.xpose.msra.mxu0 0
    %2110 = vmatprep.subr.bf16.mxu0 0
    %2111 = vmatpush1.bf16.xpose.msra.mxu0 0
    %2112 = vmatprep.subr.bf16.mxu0 0
    %2113 = vmatpush1.bf16.xpose.msra.mxu0 0
    %2114 = vmatprep.subr.bf16.mxu0 0
    %2115 = vmatpush1.bf16.xpose.msra.mxu0 0
    %2116 = vmatprep.subr.bf16.mxu0 0
    %2117 = vmatpush1.bf16.xpose.msra.mxu0 0
    %2118 = vmatprep.subr.bf16.mxu0 0
    %2119 = vmatpush1.bf16.xpose.msra.mxu0 0
    %2120 = vmatprep.subr.bf16.mxu0 0
    %2121 = vmatpush1.bf16.xpose.msra.mxu0 0
    %2122 = vmatprep.subr.bf16.mxu0 0
    %2123 = vmatpush1.bf16.xpose.msra.mxu0 0
    %2124 = vmatprep.subr.bf16.mxu0 0
    %2125 = vmatpush1.bf16.xpose.msra.mxu0 0
    %2126 = vmatprep.subr.bf16.mxu0 0
    %2127 = vmatpush1.bf16.xpose.msra.mxu0 0
    %2128 = vmatprep.mubr.bf16.mxu0 0
    %2129 = vmatmul.mubr.bf16.gmra.mrb[0].mxu0 %v2091
    %v2130 = vpop.f32.mrb[0].mxu0
    %v2131 = vadd.f32 0.0, %v2130
    %v2132 = vpop.f32.mrb[0].mxu0
    %v2133 = vpop.f32.mrb[0].mxu0
    %v2134 = vpop.f32.mrb[0].mxu0
    %2135 = vdwg.mxu0
    %v2136 = vmul.f32 %v2131, 0.35355338
    %v2137 = vadd.f32 %v2136, %v664
    %v2138 = vsel %vm142, %v2137, -inf
    %2139 = vmax.xlane.f32.xlu0 %v2138
    %v2140 = vpop.xlane.xlu0 %2139
    %v2141 = vsub.f32 %v2137, %v2140
    %v2142 = vmul.f32 %v2141, 1.442695
    %v2143 = vpow.pop %v2142
    %v2144 = vsel %vm142, %v2143, 0.0
    %2145 = vadd.xlane.f32.xlu0 %v2144
    %v2146 = vpop.xlane.xlu0 %2145
    %v2147 = vrcp.pop %v2146
    %v2148 = vmul.f32 %v2143, %v2147
    %v2149 = vpack.c.bf16 %v2148, %v2148
    %2150 = vrot.lane.b32.xlu0 %v1974, 56
    %v2151 = vpop.permute.xlu0 %2150
    %v2153 = vsel %vm142, %v2149, 0
    %v2156 = vsel %vm212, %v2151, 0
    %2158 = vmatprep.subr.bf16.mxu0 0
    %2159 = vmatpush1.bf16.msra.mxu0 %v2156
    %2160 = vmatprep.subr.bf16.mxu0 0
    %2161 = vmatpush1.bf16.msra.mxu0 0
    %2162 = vmatprep.subr.bf16.mxu0 0
    %2163 = vmatpush1.bf16.msra.mxu0 0
    %2164 = vmatprep.subr.bf16.mxu0 0
    %2165 = vmatpush1.bf16.msra.mxu0 0
    %2166 = vmatprep.subr.bf16.mxu0 0
    %2167 = vmatpush1.bf16.msra.mxu0 0
    %2168 = vmatprep.subr.bf16.mxu0 0
    %2169 = vmatpush1.bf16.msra.mxu0 0
    %2170 = vmatprep.subr.bf16.mxu0 0
    %2171 = vmatpush1.bf16.msra.mxu0 0
    %2172 = vmatprep.subr.bf16.mxu0 0
    %2173 = vmatpush1.bf16.msra.mxu0 0
    %2174 = vmatprep.subr.bf16.mxu0 0
    %2175 = vmatpush1.bf16.msra.mxu0 0
    %2176 = vmatprep.subr.bf16.mxu0 0
    %2177 = vmatpush1.bf16.msra.mxu0 0
    %2178 = vmatprep.subr.bf16.mxu0 0
    %2179 = vmatpush1.bf16.msra.mxu0 0
    %2180 = vmatprep.subr.bf16.mxu0 0
    %2181 = vmatpush1.bf16.msra.mxu0 0
    %2182 = vmatprep.subr.bf16.mxu0 0
    %2183 = vmatpush1.bf16.msra.mxu0 0
    %2184 = vmatprep.subr.bf16.mxu0 0
    %2185 = vmatpush1.bf16.msra.mxu0 0
    %2186 = vmatprep.subr.bf16.mxu0 0
    %2187 = vmatpush1.bf16.msra.mxu0 0
    %2188 = vmatprep.subr.bf16.mxu0 0
    %2189 = vmatpush1.bf16.msra.mxu0 0
    %2190 = vmatprep.mubr.bf16.mxu0 0
    %2191 = vmatmul.mubr.bf16.gmra.mrb[0].mxu0 %v2153
    %v2192 = vpop.f32.mrb[0].mxu0
    %v2193 = vadd.f32 0.0, %v2192
    %v2194 = vpop.f32.mrb[0].mxu0
    %v2195 = vpop.f32.mrb[0].mxu0
    %v2196 = vpop.f32.mrb[0].mxu0
    %2197 = vdwg.mxu0
    %2199 = vrot.lane.b32.xlu0 %v2193, 8
    %v2200 = vpop.permute.xlu0 %2199
    %2202 = vst.msk [vmem:[#allocation2 + $0x8] sm:$0xff] %vm373, %v2200
    %2203 = vrot.lane.b32.xlu0 %v1974, 112
    %v2204 = vpop.permute.xlu0 %2203
    %2205 = vrot.lane.b32.xlu0 %v1974, 80
    %v2206 = vpop.permute.xlu0 %2205
    %v2208 = vsel %vm142, %v2204, 0
    %v2211 = vsel %vm142, %v2206, 0
    %2213 = vmatprep.subr.bf16.mxu0 0
    %2214 = vmatpush1.bf16.xpose.msra.mxu0 %v2211
    %2215 = vmatprep.subr.bf16.mxu0 0
    %2216 = vmatpush1.bf16.xpose.msra.mxu0 0
    %2217 = vmatprep.subr.bf16.mxu0 0
    %2218 = vmatpush1.bf16.xpose.msra.mxu0 0
    %2219 = vmatprep.subr.bf16.mxu0 0
    %2220 = vmatpush1.bf16.xpose.msra.mxu0 0
    %2221 = vmatprep.subr.bf16.mxu0 0
    %2222 = vmatpush1.bf16.xpose.msra.mxu0 0
    %2223 = vmatprep.subr.bf16.mxu0 0
    %2224 = vmatpush1.bf16.xpose.msra.mxu0 0
    %2225 = vmatprep.subr.bf16.mxu0 0
    %2226 = vmatpush1.bf16.xpose.msra.mxu0 0
    %2227 = vmatprep.subr.bf16.mxu0 0
    %2228 = vmatpush1.bf16.xpose.msra.mxu0 0
    %2229 = vmatprep.subr.bf16.mxu0 0
    %2230 = vmatpush1.bf16.xpose.msra.mxu0 0
    %2231 = vmatprep.subr.bf16.mxu0 0
    %2232 = vmatpush1.bf16.xpose.msra.mxu0 0
    %2233 = vmatprep.subr.bf16.mxu0 0
    %2234 = vmatpush1.bf16.xpose.msra.mxu0 0
    %2235 = vmatprep.subr.bf16.mxu0 0
    %2236 = vmatpush1.bf16.xpose.msra.mxu0 0
    %2237 = vmatprep.subr.bf16.mxu0 0
    %2238 = vmatpush1.bf16.xpose.msra.mxu0 0
    %2239 = vmatprep.subr.bf16.mxu0 0
    %2240 = vmatpush1.bf16.xpose.msra.mxu0 0
    %2241 = vmatprep.subr.bf16.mxu0 0
    %2242 = vmatpush1.bf16.xpose.msra.mxu0 0
    %2243 = vmatprep.subr.bf16.mxu0 0
    %2244 = vmatpush1.bf16.xpose.msra.mxu0 0
    %2245 = vmatprep.mubr.bf16.mxu0 0
    %2246 = vmatmul.mubr.bf16.gmra.mrb[0].mxu0 %v2208
    %v2247 = vpop.f32.mrb[0].mxu0
    %v2248 = vadd.f32 0.0, %v2247
    %v2249 = vpop.f32.mrb[0].mxu0
    %v2250 = vpop.f32.mrb[0].mxu0
    %v2251 = vpop.f32.mrb[0].mxu0
    %2252 = vdwg.mxu0
    %v2253 = vmul.f32 %v2248, 0.35355338
    %v2254 = vadd.f32 %v2253, %v664
    %v2255 = vsel %vm142, %v2254, -inf
    %2256 = vmax.xlane.f32.xlu0 %v2255
    %v2257 = vpop.xlane.xlu0 %2256
    %v2258 = vsub.f32 %v2254, %v2257
    %v2259 = vmul.f32 %v2258, 1.442695
    %v2260 = vpow.pop %v2259
    %v2261 = vsel %vm142, %v2260, 0.0
    %2262 = vadd.xlane.f32.xlu0 %v2261
    %v2263 = vpop.xlane.xlu0 %2262
    %v2264 = vrcp.pop %v2263
    %v2265 = vmul.f32 %v2260, %v2264
    %v2266 = vpack.c.bf16 %v2265, %v2265
    %2267 = vrot.lane.b32.xlu0 %v1974, 48
    %v2268 = vpop.permute.xlu0 %2267
    %v2270 = vsel %vm142, %v2266, 0
    %v2273 = vsel %vm212, %v2268, 0
    %2275 = vmatprep.subr.bf16.mxu0 0
    %2276 = vmatpush1.bf16.msra.mxu0 %v2273
    %2277 = vmatprep.subr.bf16.mxu0 0
    %2278 = vmatpush1.bf16.msra.mxu0 0
    %2279 = vmatprep.subr.bf16.mxu0 0
    %2280 = vmatpush1.bf16.msra.mxu0 0
    %2281 = vmatprep.subr.bf16.mxu0 0
    %2282 = vmatpush1.bf16.msra.mxu0 0
    %2283 = vmatprep.subr.bf16.mxu0 0
    %2284 = vmatpush1.bf16.msra.mxu0 0
    %2285 = vmatprep.subr.bf16.mxu0 0
    %2286 = vmatpush1.bf16.msra.mxu0 0
    %2287 = vmatprep.subr.bf16.mxu0 0
    %2288 = vmatpush1.bf16.msra.mxu0 0
    %2289 = vmatprep.subr.bf16.mxu0 0
    %2290 = vmatpush1.bf16.msra.mxu0 0
    %2291 = vmatprep.subr.bf16.mxu0 0
    %2292 = vmatpush1.bf16.msra.mxu0 0
    %2293 = vmatprep.subr.bf16.mxu0 0
    %2294 = vmatpush1.bf16.msra.mxu0 0
    %2295 = vmatprep.subr.bf16.mxu0 0
    %2296 = vmatpush1.bf16.msra.mxu0 0
    %2297 = vmatprep.subr.bf16.mxu0 0
    %2298 = vmatpush1.bf16.msra.mxu0 0
    %2299 = vmatprep.subr.bf16.mxu0 0
    %2300 = vmatpush1.bf16.msra.mxu0 0
    %2301 = vmatprep.subr.bf16.mxu0 0
    %2302 = vmatpush1.bf16.msra.mxu0 0
    %2303 = vmatprep.subr.bf16.mxu0 0
    %2304 = vmatpush1.bf16.msra.mxu0 0
    %2305 = vmatprep.subr.bf16.mxu0 0
    %2306 = vmatpush1.bf16.msra.mxu0 0
    %2307 = vmatprep.mubr.bf16.mxu0 0
    %2308 = vmatmul.mubr.bf16.gmra.mrb[0].mxu0 %v2270
    %v2309 = vpop.f32.mrb[0].mxu0
    %v2310 = vadd.f32 0.0, %v2309
    %v2311 = vpop.f32.mrb[0].mxu0
    %v2312 = vpop.f32.mrb[0].mxu0
    %v2313 = vpop.f32.mrb[0].mxu0
    %2314 = vdwg.mxu0
    %2316 = vrot.lane.b32.xlu0 %v2310, 16
    %v2317 = vpop.permute.xlu0 %2316
    %2319 = vst.msk [vmem:[#allocation2 + $0x8] sm:$0xff] %vm491, %v2317
    %2320 = vrot.lane.b32.xlu0 %v1974, 104
    %v2321 = vpop.permute.xlu0 %2320
    %2322 = vrot.lane.b32.xlu0 %v1974, 72
    %v2323 = vpop.permute.xlu0 %2322
    %v2325 = vsel %vm142, %v2321, 0
    %v2328 = vsel %vm142, %v2323, 0
    %2330 = vmatprep.subr.bf16.mxu0 0
    %2331 = vmatpush1.bf16.xpose.msra.mxu0 %v2328
    %2332 = vmatprep.subr.bf16.mxu0 0
    %2333 = vmatpush1.bf16.xpose.msra.mxu0 0
    %2334 = vmatprep.subr.bf16.mxu0 0
    %2335 = vmatpush1.bf16.xpose.msra.mxu0 0
    %2336 = vmatprep.subr.bf16.mxu0 0
    %2337 = vmatpush1.bf16.xpose.msra.mxu0 0
    %2338 = vmatprep.subr.bf16.mxu0 0
    %2339 = vmatpush1.bf16.xpose.msra.mxu0 0
    %2340 = vmatprep.subr.bf16.mxu0 0
    %2341 = vmatpush1.bf16.xpose.msra.mxu0 0
    %2342 = vmatprep.subr.bf16.mxu0 0
    %2343 = vmatpush1.bf16.xpose.msra.mxu0 0
    %2344 = vmatprep.subr.bf16.mxu0 0
    %2345 = vmatpush1.bf16.xpose.msra.mxu0 0
    %2346 = vmatprep.subr.bf16.mxu0 0
    %2347 = vmatpush1.bf16.xpose.msra.mxu0 0
    %2348 = vmatprep.subr.bf16.mxu0 0
    %2349 = vmatpush1.bf16.xpose.msra.mxu0 0
    %2350 = vmatprep.subr.bf16.mxu0 0
    %2351 = vmatpush1.bf16.xpose.msra.mxu0 0
    %2352 = vmatprep.subr.bf16.mxu0 0
    %2353 = vmatpush1.bf16.xpose.msra.mxu0 0
    %2354 = vmatprep.subr.bf16.mxu0 0
    %2355 = vmatpush1.bf16.xpose.msra.mxu0 0
    %2356 = vmatprep.subr.bf16.mxu0 0
    %2357 = vmatpush1.bf16.xpose.msra.mxu0 0
    %2358 = vmatprep.subr.bf16.mxu0 0
    %2359 = vmatpush1.bf16.xpose.msra.mxu0 0
    %2360 = vmatprep.subr.bf16.mxu0 0
    %2361 = vmatpush1.bf16.xpose.msra.mxu0 0
    %2362 = vmatprep.mubr.bf16.mxu0 0
    %2363 = vmatmul.mubr.bf16.gmra.mrb[0].mxu0 %v2325
    %v2364 = vpop.f32.mrb[0].mxu0
    %v2365 = vadd.f32 0.0, %v2364
    %v2366 = vpop.f32.mrb[0].mxu0
    %v2367 = vpop.f32.mrb[0].mxu0
    %v2368 = vpop.f32.mrb[0].mxu0
    %2369 = vdwg.mxu0
    %v2370 = vmul.f32 %v2365, 0.35355338
    %v2371 = vadd.f32 %v2370, %v664
    %v2372 = vsel %vm142, %v2371, -inf
    %2373 = vmax.xlane.f32.xlu0 %v2372
    %v2374 = vpop.xlane.xlu0 %2373
    %v2375 = vsub.f32 %v2371, %v2374
    %v2376 = vmul.f32 %v2375, 1.442695
    %v2377 = vpow.pop %v2376
    %v2378 = vsel %vm142, %v2377, 0.0
    %2379 = vadd.xlane.f32.xlu0 %v2378
    %v2380 = vpop.xlane.xlu0 %2379
    %v2381 = vrcp.pop %v2380
    %v2382 = vmul.f32 %v2377, %v2381
    %v2383 = vpack.c.bf16 %v2382, %v2382
    %2384 = vrot.lane.b32.xlu0 %v1974, 40
    %v2385 = vpop.permute.xlu0 %2384
    %v2387 = vsel %vm142, %v2383, 0
    %v2390 = vsel %vm212, %v2385, 0
    %2392 = vmatprep.subr.bf16.mxu0 0
    %2393 = vmatpush1.bf16.msra.mxu0 %v2390
    %2394 = vmatprep.subr.bf16.mxu0 0
    %2395 = vmatpush1.bf16.msra.mxu0 0
    %2396 = vmatprep.subr.bf16.mxu0 0
    %2397 = vmatpush1.bf16.msra.mxu0 0
    %2398 = vmatprep.subr.bf16.mxu0 0
    %2399 = vmatpush1.bf16.msra.mxu0 0
    %2400 = vmatprep.subr.bf16.mxu0 0
    %2401 = vmatpush1.bf16.msra.mxu0 0
    %2402 = vmatprep.subr.bf16.mxu0 0
    %2403 = vmatpush1.bf16.msra.mxu0 0
    %2404 = vmatprep.subr.bf16.mxu0 0
    %2405 = vmatpush1.bf16.msra.mxu0 0
    %2406 = vmatprep.subr.bf16.mxu0 0
    %2407 = vmatpush1.bf16.msra.mxu0 0
    %2408 = vmatprep.subr.bf16.mxu0 0
    %2409 = vmatpush1.bf16.msra.mxu0 0
    %2410 = vmatprep.subr.bf16.mxu0 0
    %2411 = vmatpush1.bf16.msra.mxu0 0
    %2412 = vmatprep.subr.bf16.mxu0 0
    %2413 = vmatpush1.bf16.msra.mxu0 0
    %2414 = vmatprep.subr.bf16.mxu0 0
    %2415 = vmatpush1.bf16.msra.mxu0 0
    %2416 = vmatprep.subr.bf16.mxu0 0
    %2417 = vmatpush1.bf16.msra.mxu0 0
    %2418 = vmatprep.subr.bf16.mxu0 0
    %2419 = vmatpush1.bf16.msra.mxu0 0
    %2420 = vmatprep.subr.bf16.mxu0 0
    %2421 = vmatpush1.bf16.msra.mxu0 0
    %2422 = vmatprep.subr.bf16.mxu0 0
    %2423 = vmatpush1.bf16.msra.mxu0 0
    %2424 = vmatprep.mubr.bf16.mxu0 0
    %2425 = vmatmul.mubr.bf16.gmra.mrb[0].mxu0 %v2387
    %v2426 = vpop.f32.mrb[0].mxu0
    %v2427 = vadd.f32 0.0, %v2426
    %v2428 = vpop.f32.mrb[0].mxu0
    %v2429 = vpop.f32.mrb[0].mxu0
    %v2430 = vpop.f32.mrb[0].mxu0
    %2431 = vdwg.mxu0
    %2433 = vrot.lane.b32.xlu0 %v2427, 24
    %v2434 = vpop.permute.xlu0 %2433
    %2436 = vst.msk [vmem:[#allocation2 + $0x8] sm:$0xff] %vm609, %v2434
    %v2437 = vld [vmem:[#allocation2] sm:$0xff]
    %v2438 = vld [vmem:[#allocation2 + $0x8] sm:$0xff]
    %v2439 = vpack.c.bf16 %v2438, %v2437
    %s2440 = scalar_lea.vmem %s4, 16
    %v2441 = vld [vmem:[%s2440] sm:$0xf]
    %v2442 = vld [vmem:[%s2440 + $0x4] sm:$0xf]
    %v2443 = vld [vmem:[%s2440 + $0x8] sm:$0xf]
    %v2444 = vld [vmem:[%s2440 + $0xc] sm:$0xf]
    %s2445 = scalar_lea.vmem %s5, 1
    %v2446 = vld [vmem:[%s2445] sm:$0x1]
    %v2448 = vlaneseq
    %v2449 = vshrl.u32 %v2448, 7
    %v2450 = vsub.s32 0, %v2449
    %v2451 = vrot.slane %v2446, %v2450
    %v2457 = vunpack.c.l.b16 %v2441
    %v2458 = vunpack.c.l.b16 %v2442
    %v2459 = vunpack.c.l.b16 %v2443
    %v2460 = vunpack.c.l.b16 %v2444
    %v2461 = vpack.c.b16 %v2458, %v2457
    %v2462 = vpack.c.b16 %v2460, %v2459
    %v2466 = vsel %vm93, %v2439, 0
    %2468 = vmatprep.subr.bf16.mxu0 0
    %2469 = vmatpush1.bf16.msra.mxu0 %v2461
    %2470 = vmatprep.subr.bf16.mxu0 0
    %2471 = vmatpush1.bf16.msra.mxu0 %v2462
    %2472 = vmatprep.subr.bf16.mxu0 0
    %2473 = vmatpush1.bf16.msra.mxu0 0
    %2474 = vmatprep.subr.bf16.mxu0 0
    %2475 = vmatpush1.bf16.msra.mxu0 0
    %2476 = vmatprep.subr.bf16.mxu0 0
    %2477 = vmatpush1.bf16.msra.mxu0 0
    %2478 = vmatprep.subr.bf16.mxu0 0
    %2479 = vmatpush1.bf16.msra.mxu0 0
    %2480 = vmatprep.subr.bf16.mxu0 0
    %2481 = vmatpush1.bf16.msra.mxu0 0
    %2482 = vmatprep.subr.bf16.mxu0 0
    %2483 = vmatpush1.bf16.msra.mxu0 0
    %2484 = vmatprep.subr.bf16.mxu0 0
    %2485 = vmatpush1.bf16.msra.mxu0 0
    %2486 = vmatprep.subr.bf16.mxu0 0
    %2487 = vmatpush1.bf16.msra.mxu0 0
    %2488 = vmatprep.subr.bf16.mxu0 0
    %2489 = vmatpush1.bf16.msra.mxu0 0
    %2490 = vmatprep.subr.bf16.mxu0 0
    %2491 = vmatpush1.bf16.msra.mxu0 0
    %2492 = vmatprep.subr.bf16.mxu0 0
    %2493 = vmatpush1.bf16.msra.mxu0 0
    %2494 = vmatprep.subr.bf16.mxu0 0
    %2495 = vmatpush1.bf16.msra.mxu0 0
    %2496 = vmatprep.subr.bf16.mxu0 0
    %2497 = vmatpush1.bf16.msra.mxu0 0
    %2498 = vmatprep.subr.bf16.mxu0 0
    %2499 = vmatpush1.bf16.msra.mxu0 0
    %2500 = vmatprep.mubr.bf16.mxu0 0
    %2501 = vmatmul.mubr.bf16.gmra.mrb[0].mxu0 %v2466
    %v2502 = vpop.f32.mrb[0].mxu0
    %v2503 = vadd.f32 %v2451, %v2502
    %v2504 = vpop.f32.mrb[0].mxu0
    %v2505 = vpop.f32.mrb[0].mxu0
    %v2506 = vadd.f32 %v2451, %v2505
    %v2507 = vpop.f32.mrb[0].mxu0
    %2508 = vdwg.mxu0
    %v2509 = vadd.f32 %v1438, %v2503
    %v2510 = vadd.f32 %v1439, %v2506
    %s2511 = scalar_lea.vmem %s6, 1
    %v2512 = vld [vmem:[%s2511] sm:$0x1]
    %s2513 = scalar_lea.vmem %s7, 1
    %v2514 = vld [vmem:[%s2513] sm:$0x1]
    %v2515 = vsel %vm93, %v2509, 0.0
    %2516 = vadd.xlane.f32.xlu0 %v2515
    %v2517 = vpop.xlane.xlu0 %2516
    %v2518 = vsel %vm93, %v2510, 0.0
    %2519 = vadd.xlane.f32.xlu0 %v2518
    %v2520 = vpop.xlane.xlu0 %2519
    %v2521 = vmul.f32 %v2517, %v1158
    %v2522 = vmul.f32 %v2520, %v1158
    %v2523 = vsub.f32 %v2509, %v2521
    %v2524 = vsub.f32 %v2510, %v2522
    %v2525 = vmul.f32 %v2523, %v2523
    %v2526 = vmul.f32 %v2524, %v2524
    %v2527 = vsel %vm93, %v2525, 0.0
    %2528 = vadd.xlane.f32.xlu0 %v2527
    %v2529 = vpop.xlane.xlu0 %2528
    %v2530 = vsel %vm93, %v2526, 0.0
    %2531 = vadd.xlane.f32.xlu0 %v2530
    %v2532 = vpop.xlane.xlu0 %2531
    %v2533 = vmul.f32 %v2529, %v1158
    %v2534 = vmul.f32 %v2532, %v1158
    %v2535 = vadd.f32 %v2533, 1e-05
    %v2536 = vadd.f32 %v2534, 1e-05
    %v2537 = vrsqrt.pop %v2535
    %v2538 = vrsqrt.pop %v2536
    %v2539 = vmul.f32 %v2523, %v2537
    %v2540 = vmul.f32 %v2524, %v2538
    %v2542 = vlaneseq
    %v2543 = vshrl.u32 %v2542, 7
    %v2544 = vsub.s32 0, %v2543
    %v2545 = vrot.slane %v2512, %v2544
    %v2547 = vmul.f32 %v2539, %v2545
    %v2548 = vmul.f32 %v2540, %v2545
    %v2550 = vlaneseq
    %v2551 = vshrl.u32 %v2550, 7
    %v2552 = vsub.s32 0, %v2551
    %v2553 = vrot.slane %v2514, %v2552
    %v2555 = vadd.f32 %v2547, %v2553
    %v2556 = vadd.f32 %v2548, %v2553
    %v2557 = vpack.c.bf16 %v2556, %v2555
    %s2558 = scalar_lea.vmem %s8, 16
    %v2559 = vld [vmem:[%s2558] sm:$0xf]
    %v2560 = vld [vmem:[%s2558 + $0x4] sm:$0xf]
    %v2561 = vld [vmem:[%s2558 + $0x8] sm:$0xf]
    %v2562 = vld [vmem:[%s2558 + $0xc] sm:$0xf]
    %s2563 = scalar_lea.vmem %s9, 1
    %v2564 = vld [vmem:[%s2563] sm:$0x1]
    %v2566 = vlaneseq
    %v2567 = vshrl.u32 %v2566, 7
    %v2568 = vsub.s32 0, %v2567
    %v2569 = vrot.slane %v2564, %v2568
    %v2575 = vunpack.c.l.b16 %v2559
    %v2576 = vunpack.c.l.b16 %v2560
    %v2577 = vunpack.c.l.b16 %v2561
    %v2578 = vunpack.c.l.b16 %v2562
    %v2579 = vpack.c.b16 %v2576, %v2575
    %v2580 = vpack.c.b16 %v2578, %v2577
    %v2584 = vsel %vm93, %v2557, 0
    %2586 = vmatprep.subr.bf16.mxu0 0
    %2587 = vmatpush1.bf16.msra.mxu0 %v2579
    %2588 = vmatprep.subr.bf16.mxu0 0
    %2589 = vmatpush1.bf16.msra.mxu0 %v2580
    %2590 = vmatprep.subr.bf16.mxu0 0
    %2591 = vmatpush1.bf16.msra.mxu0 0
    %2592 = vmatprep.subr.bf16.mxu0 0
    %2593 = vmatpush1.bf16.msra.mxu0 0
    %2594 = vmatprep.subr.bf16.mxu0 0
    %2595 = vmatpush1.bf16.msra.mxu0 0
    %2596 = vmatprep.subr.bf16.mxu0 0
    %2597 = vmatpush1.bf16.msra.mxu0 0
    %2598 = vmatprep.subr.bf16.mxu0 0
    %2599 = vmatpush1.bf16.msra.mxu0 0
    %2600 = vmatprep.subr.bf16.mxu0 0
    %2601 = vmatpush1.bf16.msra.mxu0 0
    %2602 = vmatprep.subr.bf16.mxu0 0
    %2603 = vmatpush1.bf16.msra.mxu0 0
    %2604 = vmatprep.subr.bf16.mxu0 0
    %2605 = vmatpush1.bf16.msra.mxu0 0
    %2606 = vmatprep.subr.bf16.mxu0 0
    %2607 = vmatpush1.bf16.msra.mxu0 0
    %2608 = vmatprep.subr.bf16.mxu0 0
    %2609 = vmatpush1.bf16.msra.mxu0 0
    %2610 = vmatprep.subr.bf16.mxu0 0
    %2611 = vmatpush1.bf16.msra.mxu0 0
    %2612 = vmatprep.subr.bf16.mxu0 0
    %2613 = vmatpush1.bf16.msra.mxu0 0
    %2614 = vmatprep.subr.bf16.mxu0 0
    %2615 = vmatpush1.bf16.msra.mxu0 0
    %2616 = vmatprep.subr.bf16.mxu0 0
    %2617 = vmatpush1.bf16.msra.mxu0 0
    %2618 = vmatprep.mubr.bf16.mxu0 0
    %2619 = vmatmul.mubr.bf16.gmra.mrb[0].mxu0 %v2584
    %v2620 = vpop.f32.mrb[0].mxu0
    %v2621 = vadd.f32 %v2569, %v2620
    %v2622 = vpop.f32.mrb[0].mxu0
    %v2623 = vpop.f32.mrb[0].mxu0
    %v2624 = vadd.f32 %v2569, %v2623
    %v2625 = vpop.f32.mrb[0].mxu0
    %2626 = vdwg.mxu0
    %v2627 = vmul.f32 %v2621, 0.5
    %v2628 = vmul.f32 %v2624, 0.5
    %v2629 = vmul.f32 %v2621, 0.044715
    %v2630 = vmul.f32 %v2624, 0.044715
    %v2631 = vmul.f32 %v2629, %v2621
    %v2632 = vmul.f32 %v2630, %v2624
    %v2633 = vmul.f32 %v2631, %v2621
    %v2634 = vmul.f32 %v2632, %v2624
    %v2635 = vadd.f32 %v2621, %v2633
    %v2636 = vadd.f32 %v2624, %v2634
    %v2637 = vmul.f32 %v2635, 0.7978846
    %v2638 = vmul.f32 %v2636, 0.7978846
    %v2639 = vtanh.pop %v2637
    %v2640 = vtanh.pop %v2638
    %v2641 = vadd.f32 %v2639, 1.0
    %v2642 = vadd.f32 %v2640, 1.0
    %v2643 = vmul.f32 %v2627, %v2641
    %v2644 = vmul.f32 %v2628, %v2642
    %v2645 = vpack.c.bf16 %v2644, %v2643
    %s2646 = scalar_lea.vmem %s10, 64
    %v2647 = vld [vmem:[%s2646] sm:$0xf]
    %v2648 = vld [vmem:[%s2646 + $0x4] sm:$0xf]
    %v2649 = vld [vmem:[%s2646 + $0x8] sm:$0xf]
    %v2650 = vld [vmem:[%s2646 + $0xc] sm:$0xf]
    %v2651 = vld [vmem:[%s2646 + $0x10] sm:$0xf]
    %v2652 = vld [vmem:[%s2646 + $0x14] sm:$0xf]
    %v2653 = vld [vmem:[%s2646 + $0x18] sm:$0xf]
    %v2654 = vld [vmem:[%s2646 + $0x1c] sm:$0xf]
    %v2655 = vld [vmem:[%s2646 + $0x20] sm:$0xf]
    %v2656 = vld [vmem:[%s2646 + $0x24] sm:$0xf]
    %v2657 = vld [vmem:[%s2646 + $0x28] sm:$0xf]
    %v2658 = vld [vmem:[%s2646 + $0x2c] sm:$0xf]
    %v2659 = vld [vmem:[%s2646 + $0x30] sm:$0xf]
    %v2660 = vld [vmem:[%s2646 + $0x34] sm:$0xf]
    %v2661 = vld [vmem:[%s2646 + $0x38] sm:$0xf]
    %v2662 = vld [vmem:[%s2646 + $0x3c] sm:$0xf]
    %s2663 = scalar_lea.vmem %s11, 1
    %v2664 = vld [vmem:[%s2663] sm:$0x1]
    %v2666 = vlaneseq
    %v2667 = vshrl.u32 %v2666, 7
    %v2668 = vsub.s32 0, %v2667
    %v2669 = vrot.slane %v2664, %v2668
    %v2687 = vunpack.c.l.b16 %v2647
    %v2688 = vunpack.c.l.b16 %v2648
    %v2689 = vunpack.c.l.b16 %v2649
    %v2690 = vunpack.c.l.b16 %v2650
    %v2691 = vunpack.c.l.b16 %v2651
    %v2692 = vunpack.c.l.b16 %v2652
    %v2693 = vunpack.c.l.b16 %v2653
    %v2694 = vunpack.c.l.b16 %v2654
    %v2695 = vunpack.c.l.b16 %v2655
    %v2696 = vunpack.c.l.b16 %v2656
    %v2697 = vunpack.c.l.b16 %v2657
    %v2698 = vunpack.c.l.b16 %v2658
    %v2699 = vunpack.c.l.b16 %v2659
    %v2700 = vunpack.c.l.b16 %v2660
    %v2701 = vunpack.c.l.b16 %v2661
    %v2702 = vunpack.c.l.b16 %v2662
    %v2703 = vpack.c.b16 %v2688, %v2687
    %v2704 = vpack.c.b16 %v2690, %v2689
    %v2705 = vpack.c.b16 %v2692, %v2691
    %v2706 = vpack.c.b16 %v2694, %v2693
    %v2707 = vpack.c.b16 %v2696, %v2695
    %v2708 = vpack.c.b16 %v2698, %v2697
    %v2709 = vpack.c.b16 %v2700, %v2699
    %v2710 = vpack.c.b16 %v2702, %v2701
    %2719 = vmatprep.subr.bf16.mxu0 0
    %2720 = vmatpush1.bf16.msra.mxu0 %v2703
    %2721 = vmatprep.subr.bf16.mxu0 0
    %2722 = vmatpush1.bf16.msra.mxu0 %v2704
    %2723 = vmatprep.subr.bf16.mxu0 0
    %2724 = vmatpush1.bf16.msra.mxu0 %v2705
    %2725 = vmatprep.subr.bf16.mxu0 0
    %2726 = vmatpush1.bf16.msra.mxu0 %v2706
    %2727 = vmatprep.subr.bf16.mxu0 0
    %2728 = vmatpush1.bf16.msra.mxu0 %v2707
    %2729 = vmatprep.subr.bf16.mxu0 0
    %2730 = vmatpush1.bf16.msra.mxu0 %v2708
    %2731 = vmatprep.subr.bf16.mxu0 0
    %2732 = vmatpush1.bf16.msra.mxu0 %v2709
    %2733 = vmatprep.subr.bf16.mxu0 0
    %2734 = vmatpush1.bf16.msra.mxu0 %v2710
    %2735 = vmatprep.subr.bf16.mxu0 0
    %2736 = vmatpush1.bf16.msra.mxu0 0
    %2737 = vmatprep.subr.bf16.mxu0 0
    %2738 = vmatpush1.bf16.msra.mxu0 0
    %2739 = vmatprep.subr.bf16.mxu0 0
    %2740 = vmatpush1.bf16.msra.mxu0 0
    %2741 = vmatprep.subr.bf16.mxu0 0
    %2742 = vmatpush1.bf16.msra.mxu0 0
    %2743 = vmatprep.subr.bf16.mxu0 0
    %2744 = vmatpush1.bf16.msra.mxu0 0
    %2745 = vmatprep.subr.bf16.mxu0 0
    %2746 = vmatpush1.bf16.msra.mxu0 0
    %2747 = vmatprep.subr.bf16.mxu0 0
    %2748 = vmatpush1.bf16.msra.mxu0 0
    %2749 = vmatprep.subr.bf16.mxu0 0
    %2750 = vmatpush1.bf16.msra.mxu0 0
    %2751 = vmatprep.mubr.bf16.mxu0 0
    %2752 = vmatmul.mubr.bf16.gmra.mrb[0].mxu0 %v2645
    %v2753 = vpop.f32.mrb[0].mxu0
    %v2754 = vadd.f32 %v2669, %v2753
    %v2755 = vpop.f32.mrb[0].mxu0
    %v2756 = vpop.f32.mrb[0].mxu0
    %v2757 = vadd.f32 %v2669, %v2756
    %v2758 = vpop.f32.mrb[0].mxu0
    %2759 = vdwg.mxu0
    %v2760 = vadd.f32 %v2555, %v2754
    %v2761 = vadd.f32 %v2556, %v2757
    %s2762 = scalar_lea.vmem %s12, 1
    %v2763 = vld [vmem:[%s2762] sm:$0x1]
    %s2764 = scalar_lea.vmem %s13, 1
    %v2765 = vld [vmem:[%s2764] sm:$0x1]
    %v2766 = vsel %vm93, %v2760, 0.0
    %2767 = vadd.xlane.f32.xlu0 %v2766
    %v2768 = vpop.xlane.xlu0 %2767
    %v2769 = vsel %vm93, %v2761, 0.0
    %2770 = vadd.xlane.f32.xlu0 %v2769
    %v2771 = vpop.xlane.xlu0 %2770
    %v2772 = vmul.f32 %v2768, %v1158
    %v2773 = vmul.f32 %v2771, %v1158
    %v2774 = vsub.f32 %v2760, %v2772
    %v2775 = vsub.f32 %v2761, %v2773
    %v2776 = vmul.f32 %v2774, %v2774
    %v2777 = vmul.f32 %v2775, %v2775
    %v2778 = vsel %vm93, %v2776, 0.0
    %2779 = vadd.xlane.f32.xlu0 %v2778
    %v2780 = vpop.xlane.xlu0 %2779
    %v2781 = vsel %vm93, %v2777, 0.0
    %2782 = vadd.xlane.f32.xlu0 %v2781
    %v2783 = vpop.xlane.xlu0 %2782
    %v2784 = vmul.f32 %v2780, %v1158
    %v2785 = vmul.f32 %v2783, %v1158
    %v2786 = vadd.f32 %v2784, 1e-05
    %v2787 = vadd.f32 %v2785, 1e-05
    %v2788 = vrsqrt.pop %v2786
    %v2789 = vrsqrt.pop %v2787
    %v2790 = vmul.f32 %v2774, %v2788
    %v2791 = vmul.f32 %v2775, %v2789
    %v2793 = vlaneseq
    %v2794 = vshrl.u32 %v2793, 7
    %v2795 = vsub.s32 0, %v2794
    %v2796 = vrot.slane %v2763, %v2795
    %v2798 = vmul.f32 %v2790, %v2796
    %v2799 = vmul.f32 %v2791, %v2796
    %v2801 = vlaneseq
    %v2802 = vshrl.u32 %v2801, 7
    %v2803 = vsub.s32 0, %v2802
    %v2804 = vrot.slane %v2765, %v2803
    %v2806 = vadd.f32 %v2798, %v2804
    %v2807 = vadd.f32 %v2799, %v2804
    %v2808 = vpack.c.bf16 %v2807, %v2806
    %v2809 = vld [vmem:[%s14] sm:$0xf]
    %v2810 = vld [vmem:[%s14 + $0x4] sm:$0xf]
    %v2811 = vld [vmem:[%s14 + $0x8] sm:$0xf]
    %v2812 = vld [vmem:[%s14 + $0xc] sm:$0xf]
    %v2813 = vld [vmem:[%s15] sm:$0x1]
    %v2815 = vlaneseq
    %v2816 = vshrl.u32 %v2815, 7
    %v2817 = vsub.s32 0, %v2816
    %v2818 = vrot.slane %v2813, %v2817
    %v2824 = vunpack.c.l.b16 %v2809
    %v2825 = vunpack.c.l.b16 %v2810
    %v2826 = vunpack.c.l.b16 %v2811
    %v2827 = vunpack.c.l.b16 %v2812
    %v2828 = vpack.c.b16 %v2825, %v2824
    %v2829 = vpack.c.b16 %v2827, %v2826
    %v2833 = vsel %vm93, %v2808, 0
    %2835 = vmatprep.subr.bf16.mxu0 0
    %2836 = vmatpush1.bf16.msra.mxu0 %v2828
    %2837 = vmatprep.subr.bf16.mxu0 0
    %2838 = vmatpush1.bf16.msra.mxu0 %v2829
    %2839 = vmatprep.subr.bf16.mxu0 0
    %2840 = vmatpush1.bf16.msra.mxu0 0
    %2841 = vmatprep.subr.bf16.mxu0 0
    %2842 = vmatpush1.bf16.msra.mxu0 0
    %2843 = vmatprep.subr.bf16.mxu0 0
    %2844 = vmatpush1.bf16.msra.mxu0 0
    %2845 = vmatprep.subr.bf16.mxu0 0
    %2846 = vmatpush1.bf16.msra.mxu0 0
    %2847 = vmatprep.subr.bf16.mxu0 0
    %2848 = vmatpush1.bf16.msra.mxu0 0
    %2849 = vmatprep.subr.bf16.mxu0 0
    %2850 = vmatpush1.bf16.msra.mxu0 0
    %2851 = vmatprep.subr.bf16.mxu0 0
    %2852 = vmatpush1.bf16.msra.mxu0 0
    %2853 = vmatprep.subr.bf16.mxu0 0
    %2854 = vmatpush1.bf16.msra.mxu0 0
    %2855 = vmatprep.subr.bf16.mxu0 0
    %2856 = vmatpush1.bf16.msra.mxu0 0
    %2857 = vmatprep.subr.bf16.mxu0 0
    %2858 = vmatpush1.bf16.msra.mxu0 0
    %2859 = vmatprep.subr.bf16.mxu0 0
    %2860 = vmatpush1.bf16.msra.mxu0 0
    %2861 = vmatprep.subr.bf16.mxu0 0
    %2862 = vmatpush1.bf16.msra.mxu0 0
    %2863 = vmatprep.subr.bf16.mxu0 0
    %2864 = vmatpush1.bf16.msra.mxu0 0
    %2865 = vmatprep.subr.bf16.mxu0 0
    %2866 = vmatpush1.bf16.msra.mxu0 0
    %2867 = vmatprep.mubr.bf16.mxu0 0
    %2868 = vmatmul.mubr.bf16.gmra.mrb[0].mxu0 %v2833
    %v2869 = vpop.f32.mrb[0].mxu0
    %v2870 = vadd.f32 %v2818, %v2869
    %v2871 = vpop.f32.mrb[0].mxu0
    %v2872 = vpop.f32.mrb[0].mxu0
    %v2873 = vadd.f32 %v2818, %v2872
    %v2874 = vpop.f32.mrb[0].mxu0
    %2875 = vdwg.mxu0
    %v2876 = vpack.c.bf16 %v2873, %v2870
    %v2877 = vld [vmem:[%s16] sm:$0xf]
    %v2878 = vld [vmem:[%s16 + $0x4] sm:$0xf]
    %v2879 = vld [vmem:[%s16 + $0x8] sm:$0xf]
    %v2880 = vld [vmem:[%s16 + $0xc] sm:$0xf]
    %v2881 = vld [vmem:[%s17] sm:$0x1]
    %v2883 = vlaneseq
    %v2884 = vshrl.u32 %v2883, 7
    %v2885 = vsub.s32 0, %v2884
    %v2886 = vrot.slane %v2881, %v2885
    %v2892 = vunpack.c.l.b16 %v2877
    %v2893 = vunpack.c.l.b16 %v2878
    %v2894 = vunpack.c.l.b16 %v2879
    %v2895 = vunpack.c.l.b16 %v2880
    %v2896 = vpack.c.b16 %v2893, %v2892
    %v2897 = vpack.c.b16 %v2895, %v2894
    %v2901 = vsel %vm93, %v2876, 0
    %2903 = vmatprep.subr.bf16.mxu0 0
    %2904 = vmatpush1.bf16.msra.mxu0 %v2896
    %2905 = vmatprep.subr.bf16.mxu0 0
    %2906 = vmatpush1.bf16.msra.mxu0 %v2897
    %2907 = vmatprep.subr.bf16.mxu0 0
    %2908 = vmatpush1.bf16.msra.mxu0 0
    %2909 = vmatprep.subr.bf16.mxu0 0
    %2910 = vmatpush1.bf16.msra.mxu0 0
    %2911 = vmatprep.subr.bf16.mxu0 0
    %2912 = vmatpush1.bf16.msra.mxu0 0
    %2913 = vmatprep.subr.bf16.mxu0 0
    %2914 = vmatpush1.bf16.msra.mxu0 0
    %2915 = vmatprep.subr.bf16.mxu0 0
    %2916 = vmatpush1.bf16.msra.mxu0 0
    %2917 = vmatprep.subr.bf16.mxu0 0
    %2918 = vmatpush1.bf16.msra.mxu0 0
    %2919 = vmatprep.subr.bf16.mxu0 0
    %2920 = vmatpush1.bf16.msra.mxu0 0
    %2921 = vmatprep.subr.bf16.mxu0 0
    %2922 = vmatpush1.bf16.msra.mxu0 0
    %2923 = vmatprep.subr.bf16.mxu0 0
    %2924 = vmatpush1.bf16.msra.mxu0 0
    %2925 = vmatprep.subr.bf16.mxu0 0
    %2926 = vmatpush1.bf16.msra.mxu0 0
    %2927 = vmatprep.subr.bf16.mxu0 0
    %2928 = vmatpush1.bf16.msra.mxu0 0
    %2929 = vmatprep.subr.bf16.mxu0 0
    %2930 = vmatpush1.bf16.msra.mxu0 0
    %2931 = vmatprep.subr.bf16.mxu0 0
    %2932 = vmatpush1.bf16.msra.mxu0 0
    %2933 = vmatprep.subr.bf16.mxu0 0
    %2934 = vmatpush1.bf16.msra.mxu0 0
    %2935 = vmatprep.mubr.bf16.mxu0 0
    %2936 = vmatmul.mubr.bf16.gmra.mrb[0].mxu0 %v2901
    %v2937 = vpop.f32.mrb[0].mxu0
    %v2938 = vadd.f32 %v2886, %v2937
    %v2939 = vpop.f32.mrb[0].mxu0
    %v2940 = vpop.f32.mrb[0].mxu0
    %v2941 = vadd.f32 %v2886, %v2940
    %v2942 = vpop.f32.mrb[0].mxu0
    %2943 = vdwg.mxu0
    %v2944 = vtanh.pop %v2870
    %v2945 = vtanh.pop %v2873
    %vm2946 = vcmask 253952
    %2947 = vst.msk [vmem:[#allocation3] sm:$0x1] %vm2946, %v2944
    %vm2948 = vcmask 139264
    %2949 = vst.msk [vmem:[#allocation5] sm:$0x1] %vm2948, %v2938
    %2950 = vst.msk [vmem:[#allocation3 + $0x1] sm:$0x1] %vm2946, %v2945
    %2951 = vst.msk [vmem:[#allocation5 + $0x1] sm:$0x1] %vm2948, %v2941
    // Predicated region
    $region74: #{tpu_custom_call.1} parent=1 // pred_check
      _
    $region75: #{tpu_custom_call.1} parent=1 // pred_check_branch
      %2953 = sbr.rel (0) target = $region77
    $region76: #{tpu_custom_call.1} parent=1 // pred_region
      %s2955 = ssub.s32 32, 32
      %2956 = vsyncadd [#allocation4], %s2955
      %s2958 = sshll.u32 [#allocation3], 4
      %s2959 = int_to_ptr.vmem [resolvable:$true] %s2958
      %2961 = dma.vmem_to_hbm [thread:$0]  %s2959, 32, %s18, [#allocation4]
    $region77: #{tpu_custom_call.1} parent=1 // pred_fallthru
      _
    // Predicated region
    $region78: #{tpu_custom_call.1} parent=1 // pred_check
      _
    $region79: #{tpu_custom_call.1} parent=1 // pred_check_branch
      %2963 = sbr.rel (0) target = $region81
    $region80: #{tpu_custom_call.1} parent=1 // pred_region
      %s2965 = ssub.s32 32, 32
      %2966 = vsyncadd [#allocation6], %s2965
      %s2968 = sshll.u32 [#allocation5], 4
      %s2969 = int_to_ptr.vmem [resolvable:$true] %s2968
      %2971 = dma.vmem_to_hbm [thread:$0]  %s2969, 32, %s19, [#allocation6]
    $region81: #{tpu_custom_call.1} parent=1 // pred_fallthru
      _
    // Predicated region
    $region82: #{tpu_custom_call.1} parent=1 // pred_check
      _
    $region83: #{tpu_custom_call.1} parent=1 // pred_check_branch
      %2973 = sbr.rel (0) target = $region85
    $region84: #{tpu_custom_call.1} parent=1 // pred_region
      %2974 = dma.done [#allocation4], 32
    $region85: #{tpu_custom_call.1} parent=1 // pred_fallthru
      _
    // Predicated region
    $region86: #{tpu_custom_call.1} parent=1 // pred_check
      _
    $region87: #{tpu_custom_call.1} parent=1 // pred_check_branch
      %2976 = sbr.rel (0) target = $region89
    $region88: #{tpu_custom_call.1} parent=1 // pred_region
      %2977 = dma.done [#allocation6], 32
    $region89: #{tpu_custom_call.1} parent=1 // pred_fallthru
      _
    %2978 = vsyncpa [#allocation4], 1
    %2979 = vsyncpa [#allocation6], 1

</llo_original>
